<compile_context>
chip_gen: v6e
topology: v6e:2x2x1
jax: 0.10.0
libtpu: 0.0.40
codegen_flags: <defaults>
</compile_context>

<pallas_src>
import jax
import jax.numpy as jnp
from jax.experimental import pallas as pl
from jax.experimental.pallas import tpu as pltpu

NUM_HEADS = 8
LN_EPS = 1e-5  # PyTorch LayerNorm default


def self_attention_kernel(x_ref, wqkv_ref, bqkv_ref, wo_ref, pbg_ref, o_ref):
    # x_ref:    (S, B, E)
    # wqkv_ref: (E, 3E)   fused [Q | K | V] columns, q-scale folded in
    # bqkv_ref: (1, 3E)   fused bias, q-scale folded in
    # wo_ref:   (E, E)    out_proj.weight^T  (attn = ctx @ wo + bo)
    # pbg_ref:  (3, E)    rows = [out_proj bias, LN gamma, LN beta]
    S, B, E = x_ref.shape
    H = NUM_HEADS
    D = E // H

    x = x_ref[...]                       # single contiguous load
    x2 = x.reshape(S * B, E)             # rows in (s, b) order

    # ---- Fused QKV projection: one lane-dense MXU matmul (M=S*B, K=E, N=3E) ----
    qkv = jnp.dot(x2, wqkv_ref[...],
                  preferred_element_type=jnp.float32) + bqkv_ref[...]   # (S*B, 3E)
    q2 = qkv[:, :E]
    k2 = qkv[:, E:2 * E]
    v2 = qkv[:, 2 * E:]

    def to_heads(t):  # (S*B, E) -> (B*H, S, D)
        return jnp.transpose(t.reshape(S, B, H, D), (1, 2, 0, 3)).reshape(B * H, S, D)

    qh, kh, vh = to_heads(q2), to_heads(k2), to_heads(v2)

    # ---- Scaled dot-product attention, batched over all (batch, head) pairs ----
    # (scale already folded into the Q projection)
    s = jnp.einsum("bqd,bkd->bqk", qh, kh,
                   preferred_element_type=jnp.float32)                  # (BH, S, S)
    s = s - jnp.max(s, axis=-1, keepdims=True)
    p = jnp.exp(s)
    p = p * pl.reciprocal(jnp.sum(p, axis=-1, keepdims=True), approx=False)
    ctx = jnp.einsum("bqk,bkd->bqd", p, vh,
                     preferred_element_type=jnp.float32)                # (BH, S, D)

    # ---- Out-projection: single matmul over the concatenated heads ----
    ctx2 = jnp.transpose(ctx.reshape(B, H, S, D), (2, 0, 1, 3)).reshape(S * B, E)
    bo = pbg_ref[0:1, :]
    gamma = pbg_ref[1:2, :]
    beta = pbg_ref[2:3, :]
    attn = jnp.dot(ctx2, wo_ref[...],
                   preferred_element_type=jnp.float32) + bo             # (S*B, E)

    # ---- Residual (+ dropout identity in eval) + LayerNorm over last dim ----
    y = x2 + attn
    mu = jnp.mean(y, axis=-1, keepdims=True)
    var = jnp.mean((y - mu) ** 2, axis=-1, keepdims=True)
    yn = (y - mu) * jax.lax.rsqrt(var + LN_EPS)
    out = yn * gamma + beta

    # Single contiguous full-block store.
    o_ref[...] = out.reshape(S, B, E).astype(o_ref.dtype)


def self_attention(x, wqkv, bqkv, wo, bo, gamma, beta):
    """x: (S, B, E); params in PyTorch nn.MultiheadAttention / nn.LayerNorm layout."""
    S, B, E = x.shape
    H = NUM_HEADS
    D = E // H
    scale = 1.0 / float(D) ** 0.5

    # One-time parameter re-layout (in a real model, do this at parameter-load time).
    # in_proj_weight (3E, E) -> fused (E, 3E) so qkv = x @ Wqkv + b, with the
    # 1/sqrt(D) query scale folded into the Q columns and Q bias.
    w_fused = jnp.transpose(wqkv, (1, 0))                 # (E, 3E)
    w_fused = w_fused.at[:, :E].multiply(scale)
    b_fused = bqkv.at[:E].multiply(scale).reshape(1, 3 * E)
    wo_t = jnp.transpose(wo, (1, 0))                      # (E, E): ctx @ wo_t + bo
    pbg = jnp.stack([bo, gamma, beta], axis=0)            # (3, E) packed small params

    return pl.pallas_call(
        self_attention_kernel,
        out_shape=jax.ShapeDtypeStruct((S, B, E), x.dtype),
        grid_spec=pltpu.PrefetchScalarGridSpec(
            num_scalar_prefetch=0,
            grid=(1,),                                    # single step (1 TC on v5e/v6e)
            in_specs=[
                pl.BlockSpec((S, B, E), lambda i: (0, 0, 0)),     # x (full block)
                pl.BlockSpec((E, 3 * E), lambda i: (0, 0)),       # fused QKV weight
                pl.BlockSpec((1, 3 * E), lambda i: (0, 0)),       # fused QKV bias
                pl.BlockSpec((E, E), lambda i: (0, 0)),           # out_proj weight^T
                pl.BlockSpec((3, E), lambda i: (0, 0)),           # [bo, gamma, beta]
            ],
            out_specs=pl.BlockSpec((S, B, E), lambda i: (0, 0, 0)),
        ),
        compiler_params=pltpu.CompilerParams(
            dimension_semantics=("arbitrary",)),
    )(x, w_fused, b_fused, wo_t, pbg)


def ref_forward(x, wqkv, bqkv, wo, bo, gamma, beta):
    """Pure-JAX reference matching torch.nn.MultiheadAttention (eval mode)."""
    S, B, E = x.shape
    H, D = NUM_HEADS, E // NUM_HEADS
    qkv = jnp.einsum("sbe,fe->sbf", x, wqkv) + bqkv
    q, k, v = jnp.split(qkv, 3, axis=-1)
    q = q * (1.0 / (D ** 0.5))

    def split_heads(t):
        return t.reshape(S, B, H, D).transpose(1, 2, 0, 3)   # (B, H, S, D)

    qh, kh, vh = split_heads(q), split_heads(k), split_heads(v)
    s = jnp.einsum("bhqd,bhkd->bhqk", qh, kh)
    p = jax.nn.softmax(s, axis=-1)
    ctx = jnp.einsum("bhqk,bhkd->bhqd", p, vh)
    ctx = ctx.transpose(2, 0, 1, 3).reshape(S, B, E)
    attn = jnp.einsum("sbe,fe->sbf", ctx, wo) + bo
    y = x + attn
    mu = y.mean(-1, keepdims=True)
    var = ((y - mu) ** 2).mean(-1, keepdims=True)
    return (y - mu) / jnp.sqrt(var + LN_EPS) * gamma + beta


if __name__ == "__main__":
    S, B, E = 8, 2, 32          # seq, batch, hidden (hidden divisible by 8 heads)

    key = jax.random.PRNGKey(0)
    kx, kw1, kb1, kw2, kb2 = jax.random.split(key, 5)

    x = jax.random.normal(kx, (S, B, E), dtype=jnp.float32)
    wqkv = 0.02 * jax.random.normal(kw1, (3 * E, E), dtype=jnp.float32)  # in_proj_weight
    bqkv = 0.02 * jax.random.normal(kb1, (3 * E,), dtype=jnp.float32)    # in_proj_bias
    wo = 0.02 * jax.random.normal(kw2, (E, E), dtype=jnp.float32)        # out_proj.weight
    bo = 0.02 * jax.random.normal(kb2, (E,), dtype=jnp.float32)          # out_proj.bias
    gamma = jnp.ones((E,), dtype=jnp.float32)                            # LayerNorm weight
    beta = jnp.zeros((E,), dtype=jnp.float32)                            # LayerNorm bias

    out = jax.block_until_ready(self_attention(x, wqkv, bqkv, wo, bo, gamma, beta))
    ref = ref_forward(x, wqkv, bqkv, wo, bo, gamma, beta)

    assert out.shape == (S, B, E) and out.dtype == x.dtype
    assert jnp.allclose(out, ref, atol=1e-4, rtol=1e-4), "mismatch vs JAX reference"

    print("KERNEL_OK")
</pallas_src>

<mosaic_0001>
module attributes {stable_mosaic.version = 11 : i64} {
  func.func @self_attention_kernel(%arg0: i32, %arg1: memref<8x2x32xf32, #tpu.memory_space<vmem>>, %arg2: memref<32x96xf32, #tpu.memory_space<vmem>>, %arg3: memref<1x96xf32, #tpu.memory_space<vmem>>, %arg4: memref<32x32xf32, #tpu.memory_space<vmem>>, %arg5: memref<3x32xf32, #tpu.memory_space<vmem>>, %arg6: memref<8x2x32xf32, #tpu.memory_space<vmem>>) attributes {dimension_semantics = [#tpu.dimension_semantics<arbitrary>], iteration_bounds = array<i64: 1>, scalar_prefetch = 0 : i64, scratch_operands = 0 : i64, tpu.core_type = #tpu.core_type<tc>, window_params = [{pipeline_mode = #tpu.pipeline_mode<synchronous>, transform_indices = @transform_0, window_bounds = array<i64: 8, 2, 32>}, {pipeline_mode = #tpu.pipeline_mode<synchronous>, transform_indices = @transform_1, window_bounds = array<i64: 32, 96>}, {pipeline_mode = #tpu.pipeline_mode<synchronous>, transform_indices = @transform_2, window_bounds = array<i64: 1, 96>}, {pipeline_mode = #tpu.pipeline_mode<synchronous>, transform_indices = @transform_3, window_bounds = array<i64: 32, 32>}, {pipeline_mode = #tpu.pipeline_mode<synchronous>, transform_indices = @transform_4, window_bounds = array<i64: 3, 32>}, {pipeline_mode = #tpu.pipeline_mode<synchronous>, transform_indices = @transform_5, window_bounds = array<i64: 8, 2, 32>}]} {
    %c0 = arith.constant 0 : index
    %c0_0 = arith.constant 0 : index
    %c0_1 = arith.constant 0 : index
    %0 = vector.load %arg1[%c0, %c0_0, %c0_1] : memref<8x2x32xf32, #tpu.memory_space<vmem>>, vector<8x2x32xf32>
    %1 = vector.shape_cast %0 : vector<8x2x32xf32> to vector<16x32xf32>
    %c0_2 = arith.constant 0 : index
    %c0_3 = arith.constant 0 : index
    %2 = vector.load %arg2[%c0_2, %c0_3] : memref<32x96xf32, #tpu.memory_space<vmem>>, vector<32x96xf32>
    %cst = arith.constant dense<0.000000e+00> : vector<16x96xf32>
    %3 = tpu.matmul %1, %2, %cst {dimension_numbers = #tpu.dot_dimension_numbers<[1], [0], [0], [1], [0, 0, 1, 1], [], []>} : vector<16x32xf32>, vector<32x96xf32>, vector<16x96xf32> -> vector<16x96xf32>
    %c0_4 = arith.constant 0 : index
    %c0_5 = arith.constant 0 : index
    %4 = vector.load %arg3[%c0_4, %c0_5] : memref<1x96xf32, #tpu.memory_space<vmem>>, vector<1x96xf32>
    %5 = vector.broadcast %4 : vector<1x96xf32> to vector<16x96xf32>
    %6 = arith.addf %3, %5 : vector<16x96xf32>
    %7 = vector.extract_strided_slice %6 {offsets = [0, 0], sizes = [16, 32], strides = [1, 1]} : vector<16x96xf32> to vector<16x32xf32>
    %8 = vector.extract_strided_slice %6 {offsets = [0, 32], sizes = [16, 32], strides = [1, 1]} : vector<16x96xf32> to vector<16x32xf32>
    %9 = vector.extract_strided_slice %6 {offsets = [0, 64], sizes = [16, 32], strides = [1, 1]} : vector<16x96xf32> to vector<16x32xf32>
    %10 = vector.shape_cast %7 : vector<16x32xf32> to vector<8x2x8x4xf32>
    %11 = tpu.transpose %10, [1, 2, 0, 3] : vector<8x2x8x4xf32> -> vector<2x8x8x4xf32>
    %12 = vector.shape_cast %11 : vector<2x8x8x4xf32> to vector<16x8x4xf32>
    %13 = vector.shape_cast %8 : vector<16x32xf32> to vector<8x2x8x4xf32>
    %14 = tpu.transpose %13, [1, 2, 0, 3] : vector<8x2x8x4xf32> -> vector<2x8x8x4xf32>
    %15 = vector.shape_cast %14 : vector<2x8x8x4xf32> to vector<16x8x4xf32>
    %16 = vector.shape_cast %9 : vector<16x32xf32> to vector<8x2x8x4xf32>
    %17 = tpu.transpose %16, [1, 2, 0, 3] : vector<8x2x8x4xf32> -> vector<2x8x8x4xf32>
    %18 = vector.shape_cast %17 : vector<2x8x8x4xf32> to vector<16x8x4xf32>
    "tpu.trace_start"() <{level = 10 : i32, message = "bqd,bkd->bqk"}> : () -> ()
    %cst_6 = arith.constant dense<0.000000e+00> : vector<16x8x8xf32>
    %19 = tpu.matmul %12, %15, %cst_6 {dimension_numbers = #tpu.dot_dimension_numbers<[2], [2], [1], [1], [0, 0, 0, 1, 1, 1], [0], [0]>} : vector<16x8x4xf32>, vector<16x8x4xf32>, vector<16x8x8xf32> -> vector<16x8x8xf32>
    "tpu.trace_stop"() : () -> ()
    %cst_7 = arith.constant dense<0xFF800000> : vector<16x8xf32>
    %20 = vector.multi_reduction <maximumf>, %19, %cst_7 [2] : vector<16x8x8xf32> to vector<16x8xf32>
    %21 = vector.shape_cast %20 : vector<16x8xf32> to vector<16x8x1xf32>
    %22 = vector.broadcast %21 : vector<16x8x1xf32> to vector<16x8x8xf32>
    %23 = arith.subf %19, %22 : vector<16x8x8xf32>
    %24 = math.exp %23 : vector<16x8x8xf32>
    %cst_8 = arith.constant dense<0.000000e+00> : vector<16x8xf32>
    %25 = vector.multi_reduction <add>, %24, %cst_8 [2] : vector<16x8x8xf32> to vector<16x8xf32>
    %26 = vector.shape_cast %25 : vector<16x8xf32> to vector<16x8x1xf32>
    %27 = tpu.reciprocal %26 : vector<16x8x1xf32> -> vector<16x8x1xf32>
    %28 = vector.broadcast %27 : vector<16x8x1xf32> to vector<16x8x8xf32>
    %29 = arith.mulf %24, %28 : vector<16x8x8xf32>
    "tpu.trace_start"() <{level = 10 : i32, message = "bqk,bkd->bqd"}> : () -> ()
    %cst_9 = arith.constant dense<0.000000e+00> : vector<16x8x4xf32>
    %30 = tpu.matmul %29, %18, %cst_9 {dimension_numbers = #tpu.dot_dimension_numbers<[2], [1], [1], [2], [0, 0, 0, 1, 1, 2], [0], [0]>} : vector<16x8x8xf32>, vector<16x8x4xf32>, vector<16x8x4xf32> -> vector<16x8x4xf32>
    "tpu.trace_stop"() : () -> ()
    %31 = vector.shape_cast %30 : vector<16x8x4xf32> to vector<2x8x8x4xf32>
    %32 = tpu.transpose %31, [2, 0, 1, 3] : vector<2x8x8x4xf32> -> vector<8x2x8x4xf32>
    %33 = vector.shape_cast %32 : vector<8x2x8x4xf32> to vector<16x32xf32>
    %c0_10 = arith.constant 0 : index
    %c0_11 = arith.constant 0 : index
    %34 = vector.load %arg5[%c0_10, %c0_11] : memref<3x32xf32, #tpu.memory_space<vmem>>, vector<1x32xf32>
    %c1 = arith.constant 1 : index
    %c0_12 = arith.constant 0 : index
    %35 = vector.load %arg5[%c1, %c0_12] : memref<3x32xf32, #tpu.memory_space<vmem>>, vector<1x32xf32>
    %c2 = arith.constant 2 : index
    %c0_13 = arith.constant 0 : index
    %36 = vector.load %arg5[%c2, %c0_13] : memref<3x32xf32, #tpu.memory_space<vmem>>, vector<1x32xf32>
    %c0_14 = arith.constant 0 : index
    %c0_15 = arith.constant 0 : index
    %37 = vector.load %arg4[%c0_14, %c0_15] : memref<32x32xf32, #tpu.memory_space<vmem>>, vector<32x32xf32>
    %cst_16 = arith.constant dense<0.000000e+00> : vector<16x32xf32>
    %38 = tpu.matmul %33, %37, %cst_16 {dimension_numbers = #tpu.dot_dimension_numbers<[1], [0], [0], [1], [0, 0, 1, 1], [], []>} : vector<16x32xf32>, vector<32x32xf32>, vector<16x32xf32> -> vector<16x32xf32>
    %39 = vector.broadcast %34 : vector<1x32xf32> to vector<16x32xf32>
    %40 = arith.addf %38, %39 : vector<16x32xf32>
    %41 = arith.addf %1, %40 : vector<16x32xf32>
    %cst_17 = arith.constant dense<0.000000e+00> : vector<16xf32>
    %42 = vector.multi_reduction <add>, %41, %cst_17 [1] : vector<16x32xf32> to vector<16xf32>
    %43 = vector.shape_cast %42 : vector<16xf32> to vector<16x1xf32>
    %cst_18 = arith.constant 3.200000e+01 : f32
    %44 = vector.broadcast %cst_18 : f32 to vector<16x1xf32>
    %45 = arith.divf %43, %44 : vector<16x1xf32>
    %46 = vector.broadcast %45 : vector<16x1xf32> to vector<16x32xf32>
    %47 = arith.subf %41, %46 : vector<16x32xf32>
    %48 = arith.mulf %47, %47 : vector<16x32xf32>
    %cst_19 = arith.constant dense<0.000000e+00> : vector<16xf32>
    %49 = vector.multi_reduction <add>, %48, %cst_19 [1] : vector<16x32xf32> to vector<16xf32>
    %50 = vector.shape_cast %49 : vector<16xf32> to vector<16x1xf32>
    %cst_20 = arith.constant 3.200000e+01 : f32
    %51 = vector.broadcast %cst_20 : f32 to vector<16x1xf32>
    %52 = arith.divf %50, %51 : vector<16x1xf32>
    %53 = vector.broadcast %45 : vector<16x1xf32> to vector<16x32xf32>
    %54 = arith.subf %41, %53 : vector<16x32xf32>
    %cst_21 = arith.constant 9.99999974E-6 : f32
    %55 = vector.broadcast %cst_21 : f32 to vector<16x1xf32>
    %56 = arith.addf %52, %55 : vector<16x1xf32>
    %57 = math.rsqrt %56 : vector<16x1xf32>
    %58 = vector.broadcast %57 : vector<16x1xf32> to vector<16x32xf32>
    %59 = arith.mulf %54, %58 : vector<16x32xf32>
    %60 = vector.broadcast %35 : vector<1x32xf32> to vector<16x32xf32>
    %61 = arith.mulf %59, %60 : vector<16x32xf32>
    %62 = vector.broadcast %36 : vector<1x32xf32> to vector<16x32xf32>
    %63 = arith.addf %61, %62 : vector<16x32xf32>
    %64 = vector.shape_cast %63 : vector<16x32xf32> to vector<8x2x32xf32>
    %c0_22 = arith.constant 0 : index
    %c0_23 = arith.constant 0 : index
    %c0_24 = arith.constant 0 : index
    %65 = vector.load %arg6[%c0_22, %c0_23, %c0_24] : memref<8x2x32xf32, #tpu.memory_space<vmem>>, vector<8x2x32xf32>
    tpu.vector_store %arg6[%c0_22, %c0_23, %c0_24], %64 {strides = array<i32>} : memref<8x2x32xf32, #tpu.memory_space<vmem>>, vector<8x2x32xf32>,
    return
  }
  func.func @transform_0(%arg0: i32) -> (i32, i32, i32) {
    %c0_i32 = arith.constant 0 : i32
    %c0_i32_0 = arith.constant 0 : i32
    %c0_i32_1 = arith.constant 0 : i32
    %c0_i32_2 = arith.constant 0 : i32
    return %c0_i32, %c0_i32_0, %c0_i32_1 : i32, i32, i32
  }
  func.func @transform_1(%arg0: i32) -> (i32, i32) {
    %c0_i32 = arith.constant 0 : i32
    %c0_i32_0 = arith.constant 0 : i32
    %c0_i32_1 = arith.constant 0 : i32
    return %c0_i32, %c0_i32_0 : i32, i32
  }
  func.func @transform_2(%arg0: i32) -> (i32, i32) {
    %c0_i32 = arith.constant 0 : i32
    %c0_i32_0 = arith.constant 0 : i32
    %c0_i32_1 = arith.constant 0 : i32
    return %c0_i32, %c0_i32_0 : i32, i32
  }
  func.func @transform_3(%arg0: i32) -> (i32, i32) {
    %c0_i32 = arith.constant 0 : i32
    %c0_i32_0 = arith.constant 0 : i32
    %c0_i32_1 = arith.constant 0 : i32
    return %c0_i32, %c0_i32_0 : i32, i32
  }
  func.func @transform_4(%arg0: i32) -> (i32, i32) {
    %c0_i32 = arith.constant 0 : i32
    %c0_i32_0 = arith.constant 0 : i32
    %c0_i32_1 = arith.constant 0 : i32
    return %c0_i32, %c0_i32_0 : i32, i32
  }
  func.func @transform_5(%arg0: i32) -> (i32, i32, i32) {
    %c0_i32 = arith.constant 0 : i32
    %c0_i32_0 = arith.constant 0 : i32
    %c0_i32_1 = arith.constant 0 : i32
    %c0_i32_2 = arith.constant 0 : i32
    return %c0_i32, %c0_i32_0, %c0_i32_1 : i32, i32, i32
  }
}

</mosaic_0001>

<llo_original>
// kernel: tpu_custom_call.1
$region0: #{tpu_custom_call.1}
  #allocation0 [shape = 'u32[]', space=smem, size = 0x4, offset = 0x4, fixed_abs, tag = 'smem constant byte address 0x4 - core index']
  #allocation1 [shape = 'u32[144,128]{1,0:T(1,128)}', space=vmem, size = 0x12000, scoped, tag = 'internal scratch']
  %s0 = inlined_call_operand.hbm [shape: f32[8,2,32], index: 0, kind: input, shape index: {}]
  %s1 = inlined_call_operand.hbm [shape: f32[32,96], index: 1, kind: input, shape index: {}]
  %s2 = inlined_call_operand.vmem [shape: f32[1,96], index: 2, kind: input, shape index: {}]
  %s3 = inlined_call_operand.hbm [shape: f32[32,32], index: 3, kind: input, shape index: {}]
  %s4 = inlined_call_operand.vmem [shape: f32[3,32], index: 4, kind: input, shape index: {}]
  %s5 = inlined_call_operand.hbm [shape: f32[8,2,32], index: 5, kind: output, shape index: {}]
  %s6 = sld [smem:[#allocation0]]
  $region42: #{tpu_custom_call.1} parent=0
    _
  %s8 = ssub.s32 1, %s6
  %s9 = scalar_select 0, %s8, %s6
  $region1: #{tpu_custom_call.1} parent=0
    #allocation2 [shape = 'u8[8192]{0}', space=vmem, size = 0x2000, scoped, tag = 'input window, operand 0, single buffered']
    #allocation3 [shape = 's32[1]{0}', space=sflag, size = 0x4, scoped, tag = 'scoped memory for tpu_custom_call.1']
    #allocation4 [shape = 's32[1]{0}', space=sflag, size = 0x4, scoped, tag = 'scoped memory for tpu_custom_call.1']
    #allocation5 [shape = 'u8[16384]{0}', space=vmem, size = 0x4000, scoped, tag = 'input window, operand 1, single buffered']
    #allocation6 [shape = 's32[1]{0}', space=sflag, size = 0x4, scoped, tag = 'scoped memory for tpu_custom_call.1']
    #allocation7 [shape = 'u8[16384]{0}', space=vmem, size = 0x4000, scoped, tag = 'input window, operand 3, single buffered']
    #allocation8 [shape = 'u8[8192]{0}', space=vmem, size = 0x2000, scoped, tag = 'output window, operand 0, single buffered']
    %10 = vsyncpa [#allocation3], 0
    %11 = vsyncpa [#allocation6], 0
    %12 = vsyncpa [#allocation4], 0
    // Predicated region
    $region2: #{tpu_custom_call.1} parent=1 // pred_check
      _
    $region3: #{tpu_custom_call.1} parent=1 // pred_check_branch
      %14 = sbr.rel (0) target = $region5
    $region4: #{tpu_custom_call.1} parent=1 // pred_region
      %s16 = ssub.s32 256, 256
      %17 = vsyncadd [#allocation3], %s16
      %s18 = sshll.u32 [#allocation2], 4
      %s19 = int_to_ptr.vmem [resolvable:$true] %s18
      %24 = dma.hbm_to_vmem [thread:$0]  %s0, 256, %s19, [#allocation3], 32, 32, 2
    $region5: #{tpu_custom_call.1} parent=1 // pred_fallthru
      _
    // Predicated region
    $region6: #{tpu_custom_call.1} parent=1 // pred_check
      _
    $region7: #{tpu_custom_call.1} parent=1 // pred_check_branch
      %26 = sbr.rel (0) target = $region9
    $region8: #{tpu_custom_call.1} parent=1 // pred_region
      %s28 = ssub.s32 512, 512
      %29 = vsyncadd [#allocation6], %s28
      %s30 = sshll.u32 [#allocation5], 4
      %s31 = int_to_ptr.vmem [resolvable:$true] %s30
      %36 = dma.hbm_to_vmem [thread:$0]  %s1, 512, %s31, [#allocation6], 128, 128, 8
    $region9: #{tpu_custom_call.1} parent=1 // pred_fallthru
      _
    // Predicated region
    $region10: #{tpu_custom_call.1} parent=1 // pred_check
      _
    $region11: #{tpu_custom_call.1} parent=1 // pred_check_branch
      %38 = sbr.rel (0) target = $region13
    $region12: #{tpu_custom_call.1} parent=1 // pred_region
      _
    $region13: #{tpu_custom_call.1} parent=1 // pred_fallthru
      _
    // Predicated region
    $region14: #{tpu_custom_call.1} parent=1 // pred_check
      _
    $region15: #{tpu_custom_call.1} parent=1 // pred_check_branch
      %40 = sbr.rel (0) target = $region17
    $region16: #{tpu_custom_call.1} parent=1 // pred_region
      %s42 = ssub.s32 512, 512
      %43 = vsyncadd [#allocation6], %s42
      %s44 = sshll.u32 [#allocation7], 4
      %s45 = int_to_ptr.vmem [resolvable:$true] %s44
      %50 = dma.hbm_to_vmem [thread:$0]  %s3, 512, %s45, [#allocation6], 128, 128, 8
    $region17: #{tpu_custom_call.1} parent=1 // pred_fallthru
      _
    // Predicated region
    $region18: #{tpu_custom_call.1} parent=1 // pred_check
      _
    $region19: #{tpu_custom_call.1} parent=1 // pred_check_branch
      %52 = sbr.rel (0) target = $region21
    $region20: #{tpu_custom_call.1} parent=1 // pred_region
      _
    $region21: #{tpu_custom_call.1} parent=1 // pred_fallthru
      _
    // Predicated region
    $region22: #{tpu_custom_call.1} parent=1 // pred_check
      _
    $region23: #{tpu_custom_call.1} parent=1 // pred_check_branch
      %54 = sbr.rel (0) target = $region25
    $region24: #{tpu_custom_call.1} parent=1 // pred_region
      %55 = dma.done [#allocation3], 256
    $region25: #{tpu_custom_call.1} parent=1 // pred_fallthru
      _
    // Predicated region
    $region26: #{tpu_custom_call.1} parent=1 // pred_check
      _
    $region27: #{tpu_custom_call.1} parent=1 // pred_check_branch
      %57 = sbr.rel (0) target = $region29
    $region28: #{tpu_custom_call.1} parent=1 // pred_region
      %58 = dma.done [#allocation6], 512
    $region29: #{tpu_custom_call.1} parent=1 // pred_fallthru
      _
    // Predicated region
    $region30: #{tpu_custom_call.1} parent=1 // pred_check
      _
    $region31: #{tpu_custom_call.1} parent=1 // pred_check_branch
      %60 = sbr.rel (0) target = $region33
    $region32: #{tpu_custom_call.1} parent=1 // pred_region
      %61 = dma.done [#allocation6], 512
    $region33: #{tpu_custom_call.1} parent=1 // pred_fallthru
      _
    %v62 = vld [vmem:[#allocation2] sm:$0x3]
    %v63 = vld [vmem:[#allocation2 + $0x2] sm:$0x3]
    %v64 = vld [vmem:[#allocation2 + $0x4] sm:$0x3]
    %v65 = vld [vmem:[#allocation2 + $0x6] sm:$0x3]
    %v66 = vld [vmem:[#allocation2 + $0x8] sm:$0x3]
    %v67 = vld [vmem:[#allocation2 + $0xa] sm:$0x3]
    %v68 = vld [vmem:[#allocation2 + $0xc] sm:$0x3]
    %v69 = vld [vmem:[#allocation2 + $0xe] sm:$0x3]
    %v70 = vld [vmem:[#allocation5] sm:$0xff]
    %v71 = vld [vmem:[#allocation5 + $0x8] sm:$0xff]
    %v72 = vld [vmem:[#allocation5 + $0x10] sm:$0xff]
    %v73 = vld [vmem:[#allocation5 + $0x18] sm:$0xff]
    %v74 = vld [vmem:[%s2] sm:$0x1]
    %v76 = vlaneseq
    %v77 = vshrl.u32 %v76, 7
    %v78 = vsub.s32 0, %v77
    %v79 = vrot.slane %v74, %v78
    %v89 = vcombine.low %v62, %v63
    %v90 = vcombine.low %v64, %v65
    %v92 = vunpack.c.l.s4 1983009808
    %v93 = vunpack.c.0.s8 %v92
    %v94 = vlaneseq
    %v95 = vshrl.u32 %v94, 7
    %v96 = vsub.s32 %v93, %v95
    %v97 = vrot.slane %v89, %v96
    %v99 = vunpack.c.l.s4 1983009808
    %v100 = vunpack.c.0.s8 %v99
    %v101 = vlaneseq
    %v102 = vshrl.u32 %v101, 7
    %v103 = vsub.s32 %v100, %v102
    %v104 = vrot.slane %v90, %v103
    %v105 = vcombine.low %v97, %v104
    %v106 = vcombine.low %v66, %v67
    %v107 = vcombine.low %v68, %v69
    %v109 = vunpack.c.l.s4 1983009808
    %v110 = vunpack.c.0.s8 %v109
    %v111 = vlaneseq
    %v112 = vshrl.u32 %v111, 7
    %v113 = vsub.s32 %v110, %v112
    %v114 = vrot.slane %v106, %v113
    %v116 = vunpack.c.l.s4 1983009808
    %v117 = vunpack.c.0.s8 %v116
    %v118 = vlaneseq
    %v119 = vshrl.u32 %v118, 7
    %v120 = vsub.s32 %v117, %v119
    %v121 = vrot.slane %v107, %v120
    %v122 = vcombine.low %v114, %v121
    %vm123 = vcmask 261120
    %v124 = vsel %vm123, %v105, 0
    %v126 = vsel %vm123, %v122, 0
    %128 = vmatprep.subr.mxu0 0.0
    %129 = vmatpush1.msra.mxu0 0.0
    %130 = vmatprep.subr.mxu0 0.0
    %131 = vmatpush1.msra.mxu0 0.0
    %132 = vmatprep.subr.mxu0 0.0
    %133 = vmatpush1.msra.mxu0 0.0
    %134 = vmatprep.subr.mxu0 0.0
    %135 = vmatpush1.msra.mxu0 0.0
    %136 = vmatprep.subr.mxu0 0.0
    %137 = vmatpush1.msra.mxu0 0.0
    %138 = vmatprep.subr.mxu0 0.0
    %139 = vmatpush1.msra.mxu0 0.0
    %140 = vmatprep.subr.mxu0 0.0
    %141 = vmatpush1.msra.mxu0 0.0
    %142 = vmatprep.subr.mxu0 0.0
    %143 = vmatpush1.msra.mxu0 0.0
    %144 = vmatprep.subr.mxu0 0.0
    %145 = vmatpush1.msra.mxu0 0.0
    %146 = vmatprep.subr.mxu0 0.0
    %147 = vmatpush1.msra.mxu0 0.0
    %148 = vmatprep.subr.mxu0 0.0
    %149 = vmatpush1.msra.mxu0 0.0
    %150 = vmatprep.subr.mxu0 0.0
    %151 = vmatpush1.msra.mxu0 0.0
    %152 = vmatprep.subr.mxu0 0.0
    %153 = vmatpush1.msra.mxu0 %v73
    %154 = vmatprep.subr.mxu0 0.0
    %155 = vmatpush1.msra.mxu0 %v72
    %156 = vmatprep.subr.mxu0 0.0
    %157 = vmatpush1.msra.mxu0 %v71
    %158 = vmatprep.subr.mxu0 0.0
    %159 = vmatpush1.msra.mxu0 %v70
    %160 = vmatprep.subr.mxu0 0.0
    %161 = vmatpush2.msra.mxu0 0.0
    %162 = vmatprep.subr.mxu0 0.0
    %163 = vmatpush2.msra.mxu0 0.0
    %164 = vmatprep.subr.mxu0 0.0
    %165 = vmatpush2.msra.mxu0 0.0
    %166 = vmatprep.subr.mxu0 0.0
    %167 = vmatpush2.msra.mxu0 0.0
    %168 = vmatprep.subr.mxu0 0.0
    %169 = vmatpush2.msra.mxu0 0.0
    %170 = vmatprep.subr.mxu0 0.0
    %171 = vmatpush2.msra.mxu0 0.0
    %172 = vmatprep.subr.mxu0 0.0
    %173 = vmatpush2.msra.mxu0 0.0
    %174 = vmatprep.subr.mxu0 0.0
    %175 = vmatpush2.msra.mxu0 0.0
    %176 = vmatprep.subr.mxu0 0.0
    %177 = vmatpush2.msra.mxu0 0.0
    %178 = vmatprep.subr.mxu0 0.0
    %179 = vmatpush2.msra.mxu0 0.0
    %180 = vmatprep.subr.mxu0 0.0
    %181 = vmatpush2.msra.mxu0 0.0
    %182 = vmatprep.subr.mxu0 0.0
    %183 = vmatpush2.msra.mxu0 0.0
    %184 = vmatprep.subr.mxu0 0.0
    %185 = vmatpush2.msra.mxu0 0.0
    %186 = vmatprep.subr.mxu0 0.0
    %187 = vmatpush2.msra.mxu0 0.0
    %188 = vmatprep.subr.mxu0 0.0
    %189 = vmatpush2.msra.mxu0 0.0
    %190 = vmatprep.subr.mxu0 0.0
    %191 = vmatpush2.msra.mxu0 0.0
    %192 = vmatprep.mubr.f32.mxu0 0.0
    %193 = vmatmul.mubr.f32.gmra.mxu0 %v124
    %v194 = vpop.f32.mrf.mxu0
    %v195 = vadd.f32 %v79, %v194
    %v196 = vpop.f32.mrf.mxu0
    %197 = vmatprep.mubr.f32.mxu0 0.0
    %198 = vmatmul.mubr.f32.gmra.mxu0 %v126
    %v199 = vpop.f32.mrf.mxu0
    %v200 = vadd.f32 %v79, %v199
    %v201 = vpop.f32.mrf.mxu0
    %202 = vdwg.mxu0
    %205 = vrot.lane.b32.xlu0 %v195, 124
    %v206 = vpop.permute.xlu0 %205
    %207 = vrot.lane.b32.xlu0 %v200, 124
    %v208 = vpop.permute.xlu0 %207
    %211 = vrot.lane.b32.xlu0 %v195, 120
    %v212 = vpop.permute.xlu0 %211
    %213 = vrot.lane.b32.xlu0 %v200, 120
    %v214 = vpop.permute.xlu0 %213
    %217 = vrot.lane.b32.xlu0 %v195, 116
    %v218 = vpop.permute.xlu0 %217
    %219 = vrot.lane.b32.xlu0 %v200, 116
    %v220 = vpop.permute.xlu0 %219
    %223 = vrot.lane.b32.xlu0 %v195, 112
    %v224 = vpop.permute.xlu0 %223
    %225 = vrot.lane.b32.xlu0 %v200, 112
    %v226 = vpop.permute.xlu0 %225
    %229 = vrot.lane.b32.xlu0 %v195, 108
    %v230 = vpop.permute.xlu0 %229
    %231 = vrot.lane.b32.xlu0 %v200, 108
    %v232 = vpop.permute.xlu0 %231
    %235 = vrot.lane.b32.xlu0 %v195, 104
    %v236 = vpop.permute.xlu0 %235
    %237 = vrot.lane.b32.xlu0 %v200, 104
    %v238 = vpop.permute.xlu0 %237
    %241 = vrot.lane.b32.xlu0 %v195, 100
    %v242 = vpop.permute.xlu0 %241
    %243 = vrot.lane.b32.xlu0 %v200, 100
    %v244 = vpop.permute.xlu0 %243
    %v247 = vcombine.low %v195, %v212
    %v248 = vcombine.high %v195, %v212
    %v250 = vunpack.c.l.s4 1983009808
    %v251 = vunpack.c.0.s8 %v250
    %v252 = vlaneseq
    %v253 = vshrl.u32 %v252, 7
    %v254 = vsub.s32 %v251, %v253
    %v255 = vrot.slane %v247, %v254
    %v257 = vunpack.c.l.s4 1983009808
    %v258 = vunpack.c.0.s8 %v257
    %v259 = vlaneseq
    %v260 = vshrl.u32 %v259, 7
    %v261 = vsub.s32 %v258, %v260
    %v262 = vrot.slane %v248, %v261
    %v263 = vcombine.low %v206, %v218
    %v264 = vcombine.high %v206, %v218
    %v266 = vunpack.c.l.s4 1983009808
    %v267 = vunpack.c.0.s8 %v266
    %v268 = vlaneseq
    %v269 = vshrl.u32 %v268, 7
    %v270 = vsub.s32 %v267, %v269
    %v271 = vrot.slane %v263, %v270
    %v273 = vunpack.c.l.s4 1983009808
    %v274 = vunpack.c.0.s8 %v273
    %v275 = vlaneseq
    %v276 = vshrl.u32 %v275, 7
    %v277 = vsub.s32 %v274, %v276
    %v278 = vrot.slane %v264, %v277
    %v279 = vcombine.low %v224, %v236
    %v280 = vcombine.high %v224, %v236
    %v282 = vunpack.c.l.s4 1983009808
    %v283 = vunpack.c.0.s8 %v282
    %v284 = vlaneseq
    %v285 = vshrl.u32 %v284, 7
    %v286 = vsub.s32 %v283, %v285
    %v287 = vrot.slane %v279, %v286
    %v289 = vunpack.c.l.s4 1983009808
    %v290 = vunpack.c.0.s8 %v289
    %v291 = vlaneseq
    %v292 = vshrl.u32 %v291, 7
    %v293 = vsub.s32 %v290, %v292
    %v294 = vrot.slane %v280, %v293
    %v295 = vcombine.low %v230, %v242
    %v296 = vcombine.high %v230, %v242
    %v298 = vunpack.c.l.s4 1983009808
    %v299 = vunpack.c.0.s8 %v298
    %v300 = vlaneseq
    %v301 = vshrl.u32 %v300, 7
    %v302 = vsub.s32 %v299, %v301
    %v303 = vrot.slane %v295, %v302
    %v305 = vunpack.c.l.s4 1983009808
    %v306 = vunpack.c.0.s8 %v305
    %v307 = vlaneseq
    %v308 = vshrl.u32 %v307, 7
    %v309 = vsub.s32 %v306, %v308
    %v310 = vrot.slane %v296, %v309
    %v311 = vcombine.low %v255, %v271
    %v312 = vcombine.high %v255, %v271
    %v314 = vunpack.c.l.s4 1934713408
    %v315 = vunpack.c.0.s8 %v314
    %v316 = vlaneseq
    %v317 = vshrl.u32 %v316, 7
    %v318 = vsub.s32 %v315, %v317
    %v319 = vrot.slane %v311, %v318
    %v321 = vunpack.c.l.s4 1934713408
    %v322 = vunpack.c.0.s8 %v321
    %v323 = vlaneseq
    %v324 = vshrl.u32 %v323, 7
    %v325 = vsub.s32 %v322, %v324
    %v326 = vrot.slane %v312, %v325
    %v327 = vcombine.low %v262, %v278
    %v328 = vcombine.high %v262, %v278
    %v330 = vunpack.c.l.s4 1934713408
    %v331 = vunpack.c.0.s8 %v330
    %v332 = vlaneseq
    %v333 = vshrl.u32 %v332, 7
    %v334 = vsub.s32 %v331, %v333
    %v335 = vrot.slane %v327, %v334
    %v337 = vunpack.c.l.s4 1934713408
    %v338 = vunpack.c.0.s8 %v337
    %v339 = vlaneseq
    %v340 = vshrl.u32 %v339, 7
    %v341 = vsub.s32 %v338, %v340
    %v342 = vrot.slane %v328, %v341
    %v343 = vcombine.low %v287, %v303
    %v344 = vcombine.high %v287, %v303
    %v346 = vunpack.c.l.s4 1934713408
    %v347 = vunpack.c.0.s8 %v346
    %v348 = vlaneseq
    %v349 = vshrl.u32 %v348, 7
    %v350 = vsub.s32 %v347, %v349
    %v351 = vrot.slane %v343, %v350
    %v353 = vunpack.c.l.s4 1934713408
    %v354 = vunpack.c.0.s8 %v353
    %v355 = vlaneseq
    %v356 = vshrl.u32 %v355, 7
    %v357 = vsub.s32 %v354, %v356
    %v358 = vrot.slane %v344, %v357
    %v359 = vcombine.low %v294, %v310
    %v360 = vcombine.high %v294, %v310
    %v362 = vunpack.c.l.s4 1934713408
    %v363 = vunpack.c.0.s8 %v362
    %v364 = vlaneseq
    %v365 = vshrl.u32 %v364, 7
    %v366 = vsub.s32 %v363, %v365
    %v367 = vrot.slane %v359, %v366
    %v369 = vunpack.c.l.s4 1934713408
    %v370 = vunpack.c.0.s8 %v369
    %v371 = vlaneseq
    %v372 = vshrl.u32 %v371, 7
    %v373 = vsub.s32 %v370, %v372
    %v374 = vrot.slane %v360, %v373
    %v375 = vcombine.low %v319, %v351
    %v376 = vcombine.high %v319, %v351
    %v377 = vcombine.low %v326, %v358
    %v378 = vcombine.high %v326, %v358
    %v379 = vcombine.low %v335, %v367
    %v380 = vcombine.high %v335, %v367
    %v381 = vcombine.low %v342, %v374
    %v382 = vcombine.high %v342, %v374
    %v383 = vcombine.low %v200, %v214
    %v384 = vcombine.high %v200, %v214
    %v386 = vunpack.c.l.s4 1983009808
    %v387 = vunpack.c.0.s8 %v386
    %v388 = vlaneseq
    %v389 = vshrl.u32 %v388, 7
    %v390 = vsub.s32 %v387, %v389
    %v391 = vrot.slane %v383, %v390
    %v393 = vunpack.c.l.s4 1983009808
    %v394 = vunpack.c.0.s8 %v393
    %v395 = vlaneseq
    %v396 = vshrl.u32 %v395, 7
    %v397 = vsub.s32 %v394, %v396
    %v398 = vrot.slane %v384, %v397
    %v399 = vcombine.low %v208, %v220
    %v400 = vcombine.high %v208, %v220
    %v402 = vunpack.c.l.s4 1983009808
    %v403 = vunpack.c.0.s8 %v402
    %v404 = vlaneseq
    %v405 = vshrl.u32 %v404, 7
    %v406 = vsub.s32 %v403, %v405
    %v407 = vrot.slane %v399, %v406
    %v409 = vunpack.c.l.s4 1983009808
    %v410 = vunpack.c.0.s8 %v409
    %v411 = vlaneseq
    %v412 = vshrl.u32 %v411, 7
    %v413 = vsub.s32 %v410, %v412
    %v414 = vrot.slane %v400, %v413
    %v415 = vcombine.low %v226, %v238
    %v416 = vcombine.high %v226, %v238
    %v418 = vunpack.c.l.s4 1983009808
    %v419 = vunpack.c.0.s8 %v418
    %v420 = vlaneseq
    %v421 = vshrl.u32 %v420, 7
    %v422 = vsub.s32 %v419, %v421
    %v423 = vrot.slane %v415, %v422
    %v425 = vunpack.c.l.s4 1983009808
    %v426 = vunpack.c.0.s8 %v425
    %v427 = vlaneseq
    %v428 = vshrl.u32 %v427, 7
    %v429 = vsub.s32 %v426, %v428
    %v430 = vrot.slane %v416, %v429
    %v431 = vcombine.low %v232, %v244
    %v432 = vcombine.high %v232, %v244
    %v434 = vunpack.c.l.s4 1983009808
    %v435 = vunpack.c.0.s8 %v434
    %v436 = vlaneseq
    %v437 = vshrl.u32 %v436, 7
    %v438 = vsub.s32 %v435, %v437
    %v439 = vrot.slane %v431, %v438
    %v441 = vunpack.c.l.s4 1983009808
    %v442 = vunpack.c.0.s8 %v441
    %v443 = vlaneseq
    %v444 = vshrl.u32 %v443, 7
    %v445 = vsub.s32 %v442, %v444
    %v446 = vrot.slane %v432, %v445
    %v447 = vcombine.low %v391, %v407
    %v448 = vcombine.high %v391, %v407
    %v450 = vunpack.c.l.s4 1934713408
    %v451 = vunpack.c.0.s8 %v450
    %v452 = vlaneseq
    %v453 = vshrl.u32 %v452, 7
    %v454 = vsub.s32 %v451, %v453
    %v455 = vrot.slane %v447, %v454
    %v457 = vunpack.c.l.s4 1934713408
    %v458 = vunpack.c.0.s8 %v457
    %v459 = vlaneseq
    %v460 = vshrl.u32 %v459, 7
    %v461 = vsub.s32 %v458, %v460
    %v462 = vrot.slane %v448, %v461
    %v463 = vcombine.low %v398, %v414
    %v464 = vcombine.high %v398, %v414
    %v466 = vunpack.c.l.s4 1934713408
    %v467 = vunpack.c.0.s8 %v466
    %v468 = vlaneseq
    %v469 = vshrl.u32 %v468, 7
    %v470 = vsub.s32 %v467, %v469
    %v471 = vrot.slane %v463, %v470
    %v473 = vunpack.c.l.s4 1934713408
    %v474 = vunpack.c.0.s8 %v473
    %v475 = vlaneseq
    %v476 = vshrl.u32 %v475, 7
    %v477 = vsub.s32 %v474, %v476
    %v478 = vrot.slane %v464, %v477
    %v479 = vcombine.low %v423, %v439
    %v480 = vcombine.high %v423, %v439
    %v482 = vunpack.c.l.s4 1934713408
    %v483 = vunpack.c.0.s8 %v482
    %v484 = vlaneseq
    %v485 = vshrl.u32 %v484, 7
    %v486 = vsub.s32 %v483, %v485
    %v487 = vrot.slane %v479, %v486
    %v489 = vunpack.c.l.s4 1934713408
    %v490 = vunpack.c.0.s8 %v489
    %v491 = vlaneseq
    %v492 = vshrl.u32 %v491, 7
    %v493 = vsub.s32 %v490, %v492
    %v494 = vrot.slane %v480, %v493
    %v495 = vcombine.low %v430, %v446
    %v496 = vcombine.high %v430, %v446
    %v498 = vunpack.c.l.s4 1934713408
    %v499 = vunpack.c.0.s8 %v498
    %v500 = vlaneseq
    %v501 = vshrl.u32 %v500, 7
    %v502 = vsub.s32 %v499, %v501
    %v503 = vrot.slane %v495, %v502
    %v505 = vunpack.c.l.s4 1934713408
    %v506 = vunpack.c.0.s8 %v505
    %v507 = vlaneseq
    %v508 = vshrl.u32 %v507, 7
    %v509 = vsub.s32 %v506, %v508
    %v510 = vrot.slane %v496, %v509
    %v511 = vcombine.low %v455, %v487
    %v512 = vcombine.high %v455, %v487
    %v513 = vcombine.low %v462, %v494
    %v514 = vcombine.high %v462, %v494
    %v515 = vcombine.low %v471, %v503
    %v516 = vcombine.high %v471, %v503
    %v517 = vcombine.low %v478, %v510
    %v518 = vcombine.high %v478, %v510
    %v519 = vcombine.low %v375, %v379
    %v520 = vcombine.high %v375, %v379
    %v522 = vunpack.c.l.s4 1983009808
    %v523 = vunpack.c.0.s8 %v522
    %v524 = vlaneseq
    %v525 = vshrl.u32 %v524, 7
    %v526 = vsub.s32 %v523, %v525
    %v527 = vrot.slane %v519, %v526
    %v529 = vunpack.c.l.s4 1983009808
    %v530 = vunpack.c.0.s8 %v529
    %v531 = vlaneseq
    %v532 = vshrl.u32 %v531, 7
    %v533 = vsub.s32 %v530, %v532
    %v534 = vrot.slane %v520, %v533
    %v535 = vcombine.low %v377, %v381
    %v536 = vcombine.high %v377, %v381
    %v538 = vunpack.c.l.s4 1983009808
    %v539 = vunpack.c.0.s8 %v538
    %v540 = vlaneseq
    %v541 = vshrl.u32 %v540, 7
    %v542 = vsub.s32 %v539, %v541
    %v543 = vrot.slane %v535, %v542
    %v545 = vunpack.c.l.s4 1983009808
    %v546 = vunpack.c.0.s8 %v545
    %v547 = vlaneseq
    %v548 = vshrl.u32 %v547, 7
    %v549 = vsub.s32 %v546, %v548
    %v550 = vrot.slane %v536, %v549
    %v551 = vcombine.low %v511, %v515
    %v552 = vcombine.high %v511, %v515
    %v554 = vunpack.c.l.s4 1983009808
    %v555 = vunpack.c.0.s8 %v554
    %v556 = vlaneseq
    %v557 = vshrl.u32 %v556, 7
    %v558 = vsub.s32 %v555, %v557
    %v559 = vrot.slane %v551, %v558
    %v561 = vunpack.c.l.s4 1983009808
    %v562 = vunpack.c.0.s8 %v561
    %v563 = vlaneseq
    %v564 = vshrl.u32 %v563, 7
    %v565 = vsub.s32 %v562, %v564
    %v566 = vrot.slane %v552, %v565
    %v567 = vcombine.low %v513, %v517
    %v568 = vcombine.high %v513, %v517
    %v570 = vunpack.c.l.s4 1983009808
    %v571 = vunpack.c.0.s8 %v570
    %v572 = vlaneseq
    %v573 = vshrl.u32 %v572, 7
    %v574 = vsub.s32 %v571, %v573
    %v575 = vrot.slane %v567, %v574
    %v577 = vunpack.c.l.s4 1983009808
    %v578 = vunpack.c.0.s8 %v577
    %v579 = vlaneseq
    %v580 = vshrl.u32 %v579, 7
    %v581 = vsub.s32 %v578, %v580
    %v582 = vrot.slane %v568, %v581
    %v583 = vcombine.low %v527, %v543
    %v584 = vcombine.high %v527, %v543
    %v586 = vunpack.c.l.s4 1934713408
    %v587 = vunpack.c.0.s8 %v586
    %v588 = vlaneseq
    %v589 = vshrl.u32 %v588, 7
    %v590 = vsub.s32 %v587, %v589
    %v591 = vrot.slane %v583, %v590
    %v593 = vunpack.c.l.s4 1934713408
    %v594 = vunpack.c.0.s8 %v593
    %v595 = vlaneseq
    %v596 = vshrl.u32 %v595, 7
    %v597 = vsub.s32 %v594, %v596
    %v598 = vrot.slane %v584, %v597
    %v599 = vcombine.low %v534, %v550
    %v600 = vcombine.high %v534, %v550
    %v602 = vunpack.c.l.s4 1934713408
    %v603 = vunpack.c.0.s8 %v602
    %v604 = vlaneseq
    %v605 = vshrl.u32 %v604, 7
    %v606 = vsub.s32 %v603, %v605
    %v607 = vrot.slane %v599, %v606
    %v609 = vunpack.c.l.s4 1934713408
    %v610 = vunpack.c.0.s8 %v609
    %v611 = vlaneseq
    %v612 = vshrl.u32 %v611, 7
    %v613 = vsub.s32 %v610, %v612
    %v614 = vrot.slane %v600, %v613
    %v615 = vcombine.low %v559, %v575
    %v616 = vcombine.high %v559, %v575
    %v618 = vunpack.c.l.s4 1934713408
    %v619 = vunpack.c.0.s8 %v618
    %v620 = vlaneseq
    %v621 = vshrl.u32 %v620, 7
    %v622 = vsub.s32 %v619, %v621
    %v623 = vrot.slane %v615, %v622
    %v625 = vunpack.c.l.s4 1934713408
    %v626 = vunpack.c.0.s8 %v625
    %v627 = vlaneseq
    %v628 = vshrl.u32 %v627, 7
    %v629 = vsub.s32 %v626, %v628
    %v630 = vrot.slane %v616, %v629
    %v631 = vcombine.low %v566, %v582
    %v632 = vcombine.high %v566, %v582
    %v634 = vunpack.c.l.s4 1934713408
    %v635 = vunpack.c.0.s8 %v634
    %v636 = vlaneseq
    %v637 = vshrl.u32 %v636, 7
    %v638 = vsub.s32 %v635, %v637
    %v639 = vrot.slane %v631, %v638
    %v641 = vunpack.c.l.s4 1934713408
    %v642 = vunpack.c.0.s8 %v641
    %v643 = vlaneseq
    %v644 = vshrl.u32 %v643, 7
    %v645 = vsub.s32 %v642, %v644
    %v646 = vrot.slane %v632, %v645
    %v647 = vcombine.low %v591, %v623
    %v648 = vcombine.high %v591, %v623
    %v649 = vcombine.low %v598, %v630
    %v650 = vcombine.high %v598, %v630
    %v651 = vcombine.low %v607, %v639
    %v652 = vcombine.high %v607, %v639
    %v653 = vcombine.low %v614, %v646
    %v654 = vcombine.high %v614, %v646
    %v655 = vcombine.low %v376, %v380
    %v656 = vcombine.high %v376, %v380
    %v658 = vunpack.c.l.s4 1983009808
    %v659 = vunpack.c.0.s8 %v658
    %v660 = vlaneseq
    %v661 = vshrl.u32 %v660, 7
    %v662 = vsub.s32 %v659, %v661
    %v663 = vrot.slane %v655, %v662
    %v665 = vunpack.c.l.s4 1983009808
    %v666 = vunpack.c.0.s8 %v665
    %v667 = vlaneseq
    %v668 = vshrl.u32 %v667, 7
    %v669 = vsub.s32 %v666, %v668
    %v670 = vrot.slane %v656, %v669
    %v671 = vcombine.low %v378, %v382
    %v672 = vcombine.high %v378, %v382
    %v674 = vunpack.c.l.s4 1983009808
    %v675 = vunpack.c.0.s8 %v674
    %v676 = vlaneseq
    %v677 = vshrl.u32 %v676, 7
    %v678 = vsub.s32 %v675, %v677
    %v679 = vrot.slane %v671, %v678
    %v681 = vunpack.c.l.s4 1983009808
    %v682 = vunpack.c.0.s8 %v681
    %v683 = vlaneseq
    %v684 = vshrl.u32 %v683, 7
    %v685 = vsub.s32 %v682, %v684
    %v686 = vrot.slane %v672, %v685
    %v687 = vcombine.low %v512, %v516
    %v688 = vcombine.high %v512, %v516
    %v690 = vunpack.c.l.s4 1983009808
    %v691 = vunpack.c.0.s8 %v690
    %v692 = vlaneseq
    %v693 = vshrl.u32 %v692, 7
    %v694 = vsub.s32 %v691, %v693
    %v695 = vrot.slane %v687, %v694
    %v697 = vunpack.c.l.s4 1983009808
    %v698 = vunpack.c.0.s8 %v697
    %v699 = vlaneseq
    %v700 = vshrl.u32 %v699, 7
    %v701 = vsub.s32 %v698, %v700
    %v702 = vrot.slane %v688, %v701
    %v703 = vcombine.low %v514, %v518
    %v704 = vcombine.high %v514, %v518
    %v706 = vunpack.c.l.s4 1983009808
    %v707 = vunpack.c.0.s8 %v706
    %v708 = vlaneseq
    %v709 = vshrl.u32 %v708, 7
    %v710 = vsub.s32 %v707, %v709
    %v711 = vrot.slane %v703, %v710
    %v713 = vunpack.c.l.s4 1983009808
    %v714 = vunpack.c.0.s8 %v713
    %v715 = vlaneseq
    %v716 = vshrl.u32 %v715, 7
    %v717 = vsub.s32 %v714, %v716
    %v718 = vrot.slane %v704, %v717
    %v719 = vcombine.low %v663, %v679
    %v720 = vcombine.high %v663, %v679
    %v722 = vunpack.c.l.s4 1934713408
    %v723 = vunpack.c.0.s8 %v722
    %v724 = vlaneseq
    %v725 = vshrl.u32 %v724, 7
    %v726 = vsub.s32 %v723, %v725
    %v727 = vrot.slane %v719, %v726
    %v729 = vunpack.c.l.s4 1934713408
    %v730 = vunpack.c.0.s8 %v729
    %v731 = vlaneseq
    %v732 = vshrl.u32 %v731, 7
    %v733 = vsub.s32 %v730, %v732
    %v734 = vrot.slane %v720, %v733
    %v735 = vcombine.low %v670, %v686
    %v736 = vcombine.high %v670, %v686
    %v738 = vunpack.c.l.s4 1934713408
    %v739 = vunpack.c.0.s8 %v738
    %v740 = vlaneseq
    %v741 = vshrl.u32 %v740, 7
    %v742 = vsub.s32 %v739, %v741
    %v743 = vrot.slane %v735, %v742
    %v745 = vunpack.c.l.s4 1934713408
    %v746 = vunpack.c.0.s8 %v745
    %v747 = vlaneseq
    %v748 = vshrl.u32 %v747, 7
    %v749 = vsub.s32 %v746, %v748
    %v750 = vrot.slane %v736, %v749
    %v751 = vcombine.low %v695, %v711
    %v752 = vcombine.high %v695, %v711
    %v754 = vunpack.c.l.s4 1934713408
    %v755 = vunpack.c.0.s8 %v754
    %v756 = vlaneseq
    %v757 = vshrl.u32 %v756, 7
    %v758 = vsub.s32 %v755, %v757
    %v759 = vrot.slane %v751, %v758
    %v761 = vunpack.c.l.s4 1934713408
    %v762 = vunpack.c.0.s8 %v761
    %v763 = vlaneseq
    %v764 = vshrl.u32 %v763, 7
    %v765 = vsub.s32 %v762, %v764
    %v766 = vrot.slane %v752, %v765
    %v767 = vcombine.low %v702, %v718
    %v768 = vcombine.high %v702, %v718
    %v770 = vunpack.c.l.s4 1934713408
    %v771 = vunpack.c.0.s8 %v770
    %v772 = vlaneseq
    %v773 = vshrl.u32 %v772, 7
    %v774 = vsub.s32 %v771, %v773
    %v775 = vrot.slane %v767, %v774
    %v777 = vunpack.c.l.s4 1934713408
    %v778 = vunpack.c.0.s8 %v777
    %v779 = vlaneseq
    %v780 = vshrl.u32 %v779, 7
    %v781 = vsub.s32 %v778, %v780
    %v782 = vrot.slane %v768, %v781
    %v783 = vcombine.low %v727, %v759
    %v784 = vcombine.high %v727, %v759
    %v785 = vcombine.low %v734, %v766
    %v786 = vcombine.high %v734, %v766
    %v787 = vcombine.low %v743, %v775
    %v788 = vcombine.high %v743, %v775
    %v789 = vcombine.low %v750, %v782
    %v790 = vcombine.high %v750, %v782
    %791 = vrot.lane.b32.xlu0 %v195, 96
    %v792 = vpop.permute.xlu0 %791
    %793 = vrot.lane.b32.xlu0 %v200, 96
    %v794 = vpop.permute.xlu0 %793
    %795 = vrot.lane.b32.xlu0 %v206, 96
    %v796 = vpop.permute.xlu0 %795
    %797 = vrot.lane.b32.xlu0 %v208, 96
    %v798 = vpop.permute.xlu0 %797
    %799 = vrot.lane.b32.xlu0 %v212, 96
    %v800 = vpop.permute.xlu0 %799
    %801 = vrot.lane.b32.xlu0 %v214, 96
    %v802 = vpop.permute.xlu0 %801
    %803 = vrot.lane.b32.xlu0 %v218, 96
    %v804 = vpop.permute.xlu0 %803
    %805 = vrot.lane.b32.xlu0 %v220, 96
    %v806 = vpop.permute.xlu0 %805
    %807 = vrot.lane.b32.xlu0 %v224, 96
    %v808 = vpop.permute.xlu0 %807
    %809 = vrot.lane.b32.xlu0 %v226, 96
    %v810 = vpop.permute.xlu0 %809
    %811 = vrot.lane.b32.xlu0 %v230, 96
    %v812 = vpop.permute.xlu0 %811
    %813 = vrot.lane.b32.xlu0 %v232, 96
    %v814 = vpop.permute.xlu0 %813
    %815 = vrot.lane.b32.xlu0 %v236, 96
    %v816 = vpop.permute.xlu0 %815
    %817 = vrot.lane.b32.xlu0 %v238, 96
    %v818 = vpop.permute.xlu0 %817
    %819 = vrot.lane.b32.xlu0 %v242, 96
    %v820 = vpop.permute.xlu0 %819
    %821 = vrot.lane.b32.xlu0 %v244, 96
    %v822 = vpop.permute.xlu0 %821
    %v839 = vcombine.low %v792, %v800
    %v840 = vcombine.high %v792, %v800
    %v842 = vunpack.c.l.s4 1983009808
    %v843 = vunpack.c.0.s8 %v842
    %v844 = vlaneseq
    %v845 = vshrl.u32 %v844, 7
    %v846 = vsub.s32 %v843, %v845
    %v847 = vrot.slane %v839, %v846
    %v849 = vunpack.c.l.s4 1983009808
    %v850 = vunpack.c.0.s8 %v849
    %v851 = vlaneseq
    %v852 = vshrl.u32 %v851, 7
    %v853 = vsub.s32 %v850, %v852
    %v854 = vrot.slane %v840, %v853
    %v855 = vcombine.low %v796, %v804
    %v856 = vcombine.high %v796, %v804
    %v858 = vunpack.c.l.s4 1983009808
    %v859 = vunpack.c.0.s8 %v858
    %v860 = vlaneseq
    %v861 = vshrl.u32 %v860, 7
    %v862 = vsub.s32 %v859, %v861
    %v863 = vrot.slane %v855, %v862
    %v865 = vunpack.c.l.s4 1983009808
    %v866 = vunpack.c.0.s8 %v865
    %v867 = vlaneseq
    %v868 = vshrl.u32 %v867, 7
    %v869 = vsub.s32 %v866, %v868
    %v870 = vrot.slane %v856, %v869
    %v871 = vcombine.low %v808, %v816
    %v872 = vcombine.high %v808, %v816
    %v874 = vunpack.c.l.s4 1983009808
    %v875 = vunpack.c.0.s8 %v874
    %v876 = vlaneseq
    %v877 = vshrl.u32 %v876, 7
    %v878 = vsub.s32 %v875, %v877
    %v879 = vrot.slane %v871, %v878
    %v881 = vunpack.c.l.s4 1983009808
    %v882 = vunpack.c.0.s8 %v881
    %v883 = vlaneseq
    %v884 = vshrl.u32 %v883, 7
    %v885 = vsub.s32 %v882, %v884
    %v886 = vrot.slane %v872, %v885
    %v887 = vcombine.low %v812, %v820
    %v888 = vcombine.high %v812, %v820
    %v890 = vunpack.c.l.s4 1983009808
    %v891 = vunpack.c.0.s8 %v890
    %v892 = vlaneseq
    %v893 = vshrl.u32 %v892, 7
    %v894 = vsub.s32 %v891, %v893
    %v895 = vrot.slane %v887, %v894
    %v897 = vunpack.c.l.s4 1983009808
    %v898 = vunpack.c.0.s8 %v897
    %v899 = vlaneseq
    %v900 = vshrl.u32 %v899, 7
    %v901 = vsub.s32 %v898, %v900
    %v902 = vrot.slane %v888, %v901
    %v903 = vcombine.low %v847, %v863
    %v904 = vcombine.high %v847, %v863
    %v906 = vunpack.c.l.s4 1934713408
    %v907 = vunpack.c.0.s8 %v906
    %v908 = vlaneseq
    %v909 = vshrl.u32 %v908, 7
    %v910 = vsub.s32 %v907, %v909
    %v911 = vrot.slane %v903, %v910
    %v913 = vunpack.c.l.s4 1934713408
    %v914 = vunpack.c.0.s8 %v913
    %v915 = vlaneseq
    %v916 = vshrl.u32 %v915, 7
    %v917 = vsub.s32 %v914, %v916
    %v918 = vrot.slane %v904, %v917
    %v919 = vcombine.low %v854, %v870
    %v920 = vcombine.high %v854, %v870
    %v922 = vunpack.c.l.s4 1934713408
    %v923 = vunpack.c.0.s8 %v922
    %v924 = vlaneseq
    %v925 = vshrl.u32 %v924, 7
    %v926 = vsub.s32 %v923, %v925
    %v927 = vrot.slane %v919, %v926
    %v929 = vunpack.c.l.s4 1934713408
    %v930 = vunpack.c.0.s8 %v929
    %v931 = vlaneseq
    %v932 = vshrl.u32 %v931, 7
    %v933 = vsub.s32 %v930, %v932
    %v934 = vrot.slane %v920, %v933
    %v935 = vcombine.low %v879, %v895
    %v936 = vcombine.high %v879, %v895
    %v938 = vunpack.c.l.s4 1934713408
    %v939 = vunpack.c.0.s8 %v938
    %v940 = vlaneseq
    %v941 = vshrl.u32 %v940, 7
    %v942 = vsub.s32 %v939, %v941
    %v943 = vrot.slane %v935, %v942
    %v945 = vunpack.c.l.s4 1934713408
    %v946 = vunpack.c.0.s8 %v945
    %v947 = vlaneseq
    %v948 = vshrl.u32 %v947, 7
    %v949 = vsub.s32 %v946, %v948
    %v950 = vrot.slane %v936, %v949
    %v951 = vcombine.low %v886, %v902
    %v952 = vcombine.high %v886, %v902
    %v954 = vunpack.c.l.s4 1934713408
    %v955 = vunpack.c.0.s8 %v954
    %v956 = vlaneseq
    %v957 = vshrl.u32 %v956, 7
    %v958 = vsub.s32 %v955, %v957
    %v959 = vrot.slane %v951, %v958
    %v961 = vunpack.c.l.s4 1934713408
    %v962 = vunpack.c.0.s8 %v961
    %v963 = vlaneseq
    %v964 = vshrl.u32 %v963, 7
    %v965 = vsub.s32 %v962, %v964
    %v966 = vrot.slane %v952, %v965
    %v967 = vcombine.low %v911, %v943
    %v968 = vcombine.high %v911, %v943
    %v969 = vcombine.low %v918, %v950
    %v970 = vcombine.high %v918, %v950
    %v971 = vcombine.low %v927, %v959
    %v972 = vcombine.high %v927, %v959
    %v973 = vcombine.low %v934, %v966
    %v974 = vcombine.high %v934, %v966
    %v975 = vcombine.low %v794, %v802
    %v976 = vcombine.high %v794, %v802
    %v978 = vunpack.c.l.s4 1983009808
    %v979 = vunpack.c.0.s8 %v978
    %v980 = vlaneseq
    %v981 = vshrl.u32 %v980, 7
    %v982 = vsub.s32 %v979, %v981
    %v983 = vrot.slane %v975, %v982
    %v985 = vunpack.c.l.s4 1983009808
    %v986 = vunpack.c.0.s8 %v985
    %v987 = vlaneseq
    %v988 = vshrl.u32 %v987, 7
    %v989 = vsub.s32 %v986, %v988
    %v990 = vrot.slane %v976, %v989
    %v991 = vcombine.low %v798, %v806
    %v992 = vcombine.high %v798, %v806
    %v994 = vunpack.c.l.s4 1983009808
    %v995 = vunpack.c.0.s8 %v994
    %v996 = vlaneseq
    %v997 = vshrl.u32 %v996, 7
    %v998 = vsub.s32 %v995, %v997
    %v999 = vrot.slane %v991, %v998
    %v1001 = vunpack.c.l.s4 1983009808
    %v1002 = vunpack.c.0.s8 %v1001
    %v1003 = vlaneseq
    %v1004 = vshrl.u32 %v1003, 7
    %v1005 = vsub.s32 %v1002, %v1004
    %v1006 = vrot.slane %v992, %v1005
    %v1007 = vcombine.low %v810, %v818
    %v1008 = vcombine.high %v810, %v818
    %v1010 = vunpack.c.l.s4 1983009808
    %v1011 = vunpack.c.0.s8 %v1010
    %v1012 = vlaneseq
    %v1013 = vshrl.u32 %v1012, 7
    %v1014 = vsub.s32 %v1011, %v1013
    %v1015 = vrot.slane %v1007, %v1014
    %v1017 = vunpack.c.l.s4 1983009808
    %v1018 = vunpack.c.0.s8 %v1017
    %v1019 = vlaneseq
    %v1020 = vshrl.u32 %v1019, 7
    %v1021 = vsub.s32 %v1018, %v1020
    %v1022 = vrot.slane %v1008, %v1021
    %v1023 = vcombine.low %v814, %v822
    %v1024 = vcombine.high %v814, %v822
    %v1026 = vunpack.c.l.s4 1983009808
    %v1027 = vunpack.c.0.s8 %v1026
    %v1028 = vlaneseq
    %v1029 = vshrl.u32 %v1028, 7
    %v1030 = vsub.s32 %v1027, %v1029
    %v1031 = vrot.slane %v1023, %v1030
    %v1033 = vunpack.c.l.s4 1983009808
    %v1034 = vunpack.c.0.s8 %v1033
    %v1035 = vlaneseq
    %v1036 = vshrl.u32 %v1035, 7
    %v1037 = vsub.s32 %v1034, %v1036
    %v1038 = vrot.slane %v1024, %v1037
    %v1039 = vcombine.low %v983, %v999
    %v1040 = vcombine.high %v983, %v999
    %v1042 = vunpack.c.l.s4 1934713408
    %v1043 = vunpack.c.0.s8 %v1042
    %v1044 = vlaneseq
    %v1045 = vshrl.u32 %v1044, 7
    %v1046 = vsub.s32 %v1043, %v1045
    %v1047 = vrot.slane %v1039, %v1046
    %v1049 = vunpack.c.l.s4 1934713408
    %v1050 = vunpack.c.0.s8 %v1049
    %v1051 = vlaneseq
    %v1052 = vshrl.u32 %v1051, 7
    %v1053 = vsub.s32 %v1050, %v1052
    %v1054 = vrot.slane %v1040, %v1053
    %v1055 = vcombine.low %v990, %v1006
    %v1056 = vcombine.high %v990, %v1006
    %v1058 = vunpack.c.l.s4 1934713408
    %v1059 = vunpack.c.0.s8 %v1058
    %v1060 = vlaneseq
    %v1061 = vshrl.u32 %v1060, 7
    %v1062 = vsub.s32 %v1059, %v1061
    %v1063 = vrot.slane %v1055, %v1062
    %v1065 = vunpack.c.l.s4 1934713408
    %v1066 = vunpack.c.0.s8 %v1065
    %v1067 = vlaneseq
    %v1068 = vshrl.u32 %v1067, 7
    %v1069 = vsub.s32 %v1066, %v1068
    %v1070 = vrot.slane %v1056, %v1069
    %v1071 = vcombine.low %v1015, %v1031
    %v1072 = vcombine.high %v1015, %v1031
    %v1074 = vunpack.c.l.s4 1934713408
    %v1075 = vunpack.c.0.s8 %v1074
    %v1076 = vlaneseq
    %v1077 = vshrl.u32 %v1076, 7
    %v1078 = vsub.s32 %v1075, %v1077
    %v1079 = vrot.slane %v1071, %v1078
    %v1081 = vunpack.c.l.s4 1934713408
    %v1082 = vunpack.c.0.s8 %v1081
    %v1083 = vlaneseq
    %v1084 = vshrl.u32 %v1083, 7
    %v1085 = vsub.s32 %v1082, %v1084
    %v1086 = vrot.slane %v1072, %v1085
    %v1087 = vcombine.low %v1022, %v1038
    %v1088 = vcombine.high %v1022, %v1038
    %v1090 = vunpack.c.l.s4 1934713408
    %v1091 = vunpack.c.0.s8 %v1090
    %v1092 = vlaneseq
    %v1093 = vshrl.u32 %v1092, 7
    %v1094 = vsub.s32 %v1091, %v1093
    %v1095 = vrot.slane %v1087, %v1094
    %v1097 = vunpack.c.l.s4 1934713408
    %v1098 = vunpack.c.0.s8 %v1097
    %v1099 = vlaneseq
    %v1100 = vshrl.u32 %v1099, 7
    %v1101 = vsub.s32 %v1098, %v1100
    %v1102 = vrot.slane %v1088, %v1101
    %v1103 = vcombine.low %v1047, %v1079
    %v1104 = vcombine.high %v1047, %v1079
    %v1105 = vcombine.low %v1054, %v1086
    %v1106 = vcombine.high %v1054, %v1086
    %v1107 = vcombine.low %v1063, %v1095
    %v1108 = vcombine.high %v1063, %v1095
    %v1109 = vcombine.low %v1070, %v1102
    %v1110 = vcombine.high %v1070, %v1102
    %v1111 = vcombine.low %v967, %v971
    %v1112 = vcombine.high %v967, %v971
    %v1114 = vunpack.c.l.s4 1983009808
    %v1115 = vunpack.c.0.s8 %v1114
    %v1116 = vlaneseq
    %v1117 = vshrl.u32 %v1116, 7
    %v1118 = vsub.s32 %v1115, %v1117
    %v1119 = vrot.slane %v1111, %v1118
    %v1121 = vunpack.c.l.s4 1983009808
    %v1122 = vunpack.c.0.s8 %v1121
    %v1123 = vlaneseq
    %v1124 = vshrl.u32 %v1123, 7
    %v1125 = vsub.s32 %v1122, %v1124
    %v1126 = vrot.slane %v1112, %v1125
    %v1127 = vcombine.low %v969, %v973
    %v1128 = vcombine.high %v969, %v973
    %v1130 = vunpack.c.l.s4 1983009808
    %v1131 = vunpack.c.0.s8 %v1130
    %v1132 = vlaneseq
    %v1133 = vshrl.u32 %v1132, 7
    %v1134 = vsub.s32 %v1131, %v1133
    %v1135 = vrot.slane %v1127, %v1134
    %v1137 = vunpack.c.l.s4 1983009808
    %v1138 = vunpack.c.0.s8 %v1137
    %v1139 = vlaneseq
    %v1140 = vshrl.u32 %v1139, 7
    %v1141 = vsub.s32 %v1138, %v1140
    %v1142 = vrot.slane %v1128, %v1141
    %v1143 = vcombine.low %v1103, %v1107
    %v1144 = vcombine.high %v1103, %v1107
    %v1146 = vunpack.c.l.s4 1983009808
    %v1147 = vunpack.c.0.s8 %v1146
    %v1148 = vlaneseq
    %v1149 = vshrl.u32 %v1148, 7
    %v1150 = vsub.s32 %v1147, %v1149
    %v1151 = vrot.slane %v1143, %v1150
    %v1153 = vunpack.c.l.s4 1983009808
    %v1154 = vunpack.c.0.s8 %v1153
    %v1155 = vlaneseq
    %v1156 = vshrl.u32 %v1155, 7
    %v1157 = vsub.s32 %v1154, %v1156
    %v1158 = vrot.slane %v1144, %v1157
    %v1159 = vcombine.low %v1105, %v1109
    %v1160 = vcombine.high %v1105, %v1109
    %v1162 = vunpack.c.l.s4 1983009808
    %v1163 = vunpack.c.0.s8 %v1162
    %v1164 = vlaneseq
    %v1165 = vshrl.u32 %v1164, 7
    %v1166 = vsub.s32 %v1163, %v1165
    %v1167 = vrot.slane %v1159, %v1166
    %v1169 = vunpack.c.l.s4 1983009808
    %v1170 = vunpack.c.0.s8 %v1169
    %v1171 = vlaneseq
    %v1172 = vshrl.u32 %v1171, 7
    %v1173 = vsub.s32 %v1170, %v1172
    %v1174 = vrot.slane %v1160, %v1173
    %v1175 = vcombine.low %v1119, %v1135
    %v1176 = vcombine.high %v1119, %v1135
    %v1178 = vunpack.c.l.s4 1934713408
    %v1179 = vunpack.c.0.s8 %v1178
    %v1180 = vlaneseq
    %v1181 = vshrl.u32 %v1180, 7
    %v1182 = vsub.s32 %v1179, %v1181
    %v1183 = vrot.slane %v1175, %v1182
    %v1185 = vunpack.c.l.s4 1934713408
    %v1186 = vunpack.c.0.s8 %v1185
    %v1187 = vlaneseq
    %v1188 = vshrl.u32 %v1187, 7
    %v1189 = vsub.s32 %v1186, %v1188
    %v1190 = vrot.slane %v1176, %v1189
    %v1191 = vcombine.low %v1126, %v1142
    %v1192 = vcombine.high %v1126, %v1142
    %v1194 = vunpack.c.l.s4 1934713408
    %v1195 = vunpack.c.0.s8 %v1194
    %v1196 = vlaneseq
    %v1197 = vshrl.u32 %v1196, 7
    %v1198 = vsub.s32 %v1195, %v1197
    %v1199 = vrot.slane %v1191, %v1198
    %v1201 = vunpack.c.l.s4 1934713408
    %v1202 = vunpack.c.0.s8 %v1201
    %v1203 = vlaneseq
    %v1204 = vshrl.u32 %v1203, 7
    %v1205 = vsub.s32 %v1202, %v1204
    %v1206 = vrot.slane %v1192, %v1205
    %v1207 = vcombine.low %v1151, %v1167
    %v1208 = vcombine.high %v1151, %v1167
    %v1210 = vunpack.c.l.s4 1934713408
    %v1211 = vunpack.c.0.s8 %v1210
    %v1212 = vlaneseq
    %v1213 = vshrl.u32 %v1212, 7
    %v1214 = vsub.s32 %v1211, %v1213
    %v1215 = vrot.slane %v1207, %v1214
    %v1217 = vunpack.c.l.s4 1934713408
    %v1218 = vunpack.c.0.s8 %v1217
    %v1219 = vlaneseq
    %v1220 = vshrl.u32 %v1219, 7
    %v1221 = vsub.s32 %v1218, %v1220
    %v1222 = vrot.slane %v1208, %v1221
    %v1223 = vcombine.low %v1158, %v1174
    %v1224 = vcombine.high %v1158, %v1174
    %v1226 = vunpack.c.l.s4 1934713408
    %v1227 = vunpack.c.0.s8 %v1226
    %v1228 = vlaneseq
    %v1229 = vshrl.u32 %v1228, 7
    %v1230 = vsub.s32 %v1227, %v1229
    %v1231 = vrot.slane %v1223, %v1230
    %v1233 = vunpack.c.l.s4 1934713408
    %v1234 = vunpack.c.0.s8 %v1233
    %v1235 = vlaneseq
    %v1236 = vshrl.u32 %v1235, 7
    %v1237 = vsub.s32 %v1234, %v1236
    %v1238 = vrot.slane %v1224, %v1237
    %v1239 = vcombine.low %v1183, %v1215
    %v1240 = vcombine.high %v1183, %v1215
    %v1241 = vcombine.low %v1190, %v1222
    %v1242 = vcombine.high %v1190, %v1222
    %v1243 = vcombine.low %v1199, %v1231
    %v1244 = vcombine.high %v1199, %v1231
    %v1245 = vcombine.low %v1206, %v1238
    %v1246 = vcombine.high %v1206, %v1238
    %v1247 = vcombine.low %v968, %v972
    %v1248 = vcombine.high %v968, %v972
    %v1250 = vunpack.c.l.s4 1983009808
    %v1251 = vunpack.c.0.s8 %v1250
    %v1252 = vlaneseq
    %v1253 = vshrl.u32 %v1252, 7
    %v1254 = vsub.s32 %v1251, %v1253
    %v1255 = vrot.slane %v1247, %v1254
    %v1257 = vunpack.c.l.s4 1983009808
    %v1258 = vunpack.c.0.s8 %v1257
    %v1259 = vlaneseq
    %v1260 = vshrl.u32 %v1259, 7
    %v1261 = vsub.s32 %v1258, %v1260
    %v1262 = vrot.slane %v1248, %v1261
    %v1263 = vcombine.low %v970, %v974
    %v1264 = vcombine.high %v970, %v974
    %v1266 = vunpack.c.l.s4 1983009808
    %v1267 = vunpack.c.0.s8 %v1266
    %v1268 = vlaneseq
    %v1269 = vshrl.u32 %v1268, 7
    %v1270 = vsub.s32 %v1267, %v1269
    %v1271 = vrot.slane %v1263, %v1270
    %v1273 = vunpack.c.l.s4 1983009808
    %v1274 = vunpack.c.0.s8 %v1273
    %v1275 = vlaneseq
    %v1276 = vshrl.u32 %v1275, 7
    %v1277 = vsub.s32 %v1274, %v1276
    %v1278 = vrot.slane %v1264, %v1277
    %v1279 = vcombine.low %v1104, %v1108
    %v1280 = vcombine.high %v1104, %v1108
    %v1282 = vunpack.c.l.s4 1983009808
    %v1283 = vunpack.c.0.s8 %v1282
    %v1284 = vlaneseq
    %v1285 = vshrl.u32 %v1284, 7
    %v1286 = vsub.s32 %v1283, %v1285
    %v1287 = vrot.slane %v1279, %v1286
    %v1289 = vunpack.c.l.s4 1983009808
    %v1290 = vunpack.c.0.s8 %v1289
    %v1291 = vlaneseq
    %v1292 = vshrl.u32 %v1291, 7
    %v1293 = vsub.s32 %v1290, %v1292
    %v1294 = vrot.slane %v1280, %v1293
    %v1295 = vcombine.low %v1106, %v1110
    %v1296 = vcombine.high %v1106, %v1110
    %v1298 = vunpack.c.l.s4 1983009808
    %v1299 = vunpack.c.0.s8 %v1298
    %v1300 = vlaneseq
    %v1301 = vshrl.u32 %v1300, 7
    %v1302 = vsub.s32 %v1299, %v1301
    %v1303 = vrot.slane %v1295, %v1302
    %v1305 = vunpack.c.l.s4 1983009808
    %v1306 = vunpack.c.0.s8 %v1305
    %v1307 = vlaneseq
    %v1308 = vshrl.u32 %v1307, 7
    %v1309 = vsub.s32 %v1306, %v1308
    %v1310 = vrot.slane %v1296, %v1309
    %v1311 = vcombine.low %v1255, %v1271
    %v1312 = vcombine.high %v1255, %v1271
    %v1314 = vunpack.c.l.s4 1934713408
    %v1315 = vunpack.c.0.s8 %v1314
    %v1316 = vlaneseq
    %v1317 = vshrl.u32 %v1316, 7
    %v1318 = vsub.s32 %v1315, %v1317
    %v1319 = vrot.slane %v1311, %v1318
    %v1321 = vunpack.c.l.s4 1934713408
    %v1322 = vunpack.c.0.s8 %v1321
    %v1323 = vlaneseq
    %v1324 = vshrl.u32 %v1323, 7
    %v1325 = vsub.s32 %v1322, %v1324
    %v1326 = vrot.slane %v1312, %v1325
    %v1327 = vcombine.low %v1262, %v1278
    %v1328 = vcombine.high %v1262, %v1278
    %v1330 = vunpack.c.l.s4 1934713408
    %v1331 = vunpack.c.0.s8 %v1330
    %v1332 = vlaneseq
    %v1333 = vshrl.u32 %v1332, 7
    %v1334 = vsub.s32 %v1331, %v1333
    %v1335 = vrot.slane %v1327, %v1334
    %v1337 = vunpack.c.l.s4 1934713408
    %v1338 = vunpack.c.0.s8 %v1337
    %v1339 = vlaneseq
    %v1340 = vshrl.u32 %v1339, 7
    %v1341 = vsub.s32 %v1338, %v1340
    %v1342 = vrot.slane %v1328, %v1341
    %v1343 = vcombine.low %v1287, %v1303
    %v1344 = vcombine.high %v1287, %v1303
    %v1346 = vunpack.c.l.s4 1934713408
    %v1347 = vunpack.c.0.s8 %v1346
    %v1348 = vlaneseq
    %v1349 = vshrl.u32 %v1348, 7
    %v1350 = vsub.s32 %v1347, %v1349
    %v1351 = vrot.slane %v1343, %v1350
    %v1353 = vunpack.c.l.s4 1934713408
    %v1354 = vunpack.c.0.s8 %v1353
    %v1355 = vlaneseq
    %v1356 = vshrl.u32 %v1355, 7
    %v1357 = vsub.s32 %v1354, %v1356
    %v1358 = vrot.slane %v1344, %v1357
    %v1359 = vcombine.low %v1294, %v1310
    %v1360 = vcombine.high %v1294, %v1310
    %v1362 = vunpack.c.l.s4 1934713408
    %v1363 = vunpack.c.0.s8 %v1362
    %v1364 = vlaneseq
    %v1365 = vshrl.u32 %v1364, 7
    %v1366 = vsub.s32 %v1363, %v1365
    %v1367 = vrot.slane %v1359, %v1366
    %v1369 = vunpack.c.l.s4 1934713408
    %v1370 = vunpack.c.0.s8 %v1369
    %v1371 = vlaneseq
    %v1372 = vshrl.u32 %v1371, 7
    %v1373 = vsub.s32 %v1370, %v1372
    %v1374 = vrot.slane %v1360, %v1373
    %v1375 = vcombine.low %v1319, %v1351
    %v1376 = vcombine.high %v1319, %v1351
    %v1377 = vcombine.low %v1326, %v1358
    %v1378 = vcombine.high %v1326, %v1358
    %v1379 = vcombine.low %v1335, %v1367
    %v1380 = vcombine.high %v1335, %v1367
    %v1381 = vcombine.low %v1342, %v1374
    %v1382 = vcombine.high %v1342, %v1374
    %1383 = vrot.lane.b32.xlu0 %v195, 64
    %v1384 = vpop.permute.xlu0 %1383
    %1385 = vrot.lane.b32.xlu0 %v200, 64
    %v1386 = vpop.permute.xlu0 %1385
    %1387 = vrot.lane.b32.xlu0 %v206, 64
    %v1388 = vpop.permute.xlu0 %1387
    %1389 = vrot.lane.b32.xlu0 %v208, 64
    %v1390 = vpop.permute.xlu0 %1389
    %1391 = vrot.lane.b32.xlu0 %v212, 64
    %v1392 = vpop.permute.xlu0 %1391
    %1393 = vrot.lane.b32.xlu0 %v214, 64
    %v1394 = vpop.permute.xlu0 %1393
    %1395 = vrot.lane.b32.xlu0 %v218, 64
    %v1396 = vpop.permute.xlu0 %1395
    %1397 = vrot.lane.b32.xlu0 %v220, 64
    %v1398 = vpop.permute.xlu0 %1397
    %1399 = vrot.lane.b32.xlu0 %v224, 64
    %v1400 = vpop.permute.xlu0 %1399
    %1401 = vrot.lane.b32.xlu0 %v226, 64
    %v1402 = vpop.permute.xlu0 %1401
    %1403 = vrot.lane.b32.xlu0 %v230, 64
    %v1404 = vpop.permute.xlu0 %1403
    %1405 = vrot.lane.b32.xlu0 %v232, 64
    %v1406 = vpop.permute.xlu0 %1405
    %1407 = vrot.lane.b32.xlu0 %v236, 64
    %v1408 = vpop.permute.xlu0 %1407
    %1409 = vrot.lane.b32.xlu0 %v238, 64
    %v1410 = vpop.permute.xlu0 %1409
    %1411 = vrot.lane.b32.xlu0 %v242, 64
    %v1412 = vpop.permute.xlu0 %1411
    %1413 = vrot.lane.b32.xlu0 %v244, 64
    %v1414 = vpop.permute.xlu0 %1413
    %v1431 = vcombine.low %v1384, %v1392
    %v1432 = vcombine.high %v1384, %v1392
    %v1434 = vunpack.c.l.s4 1983009808
    %v1435 = vunpack.c.0.s8 %v1434
    %v1436 = vlaneseq
    %v1437 = vshrl.u32 %v1436, 7
    %v1438 = vsub.s32 %v1435, %v1437
    %v1439 = vrot.slane %v1431, %v1438
    %v1441 = vunpack.c.l.s4 1983009808
    %v1442 = vunpack.c.0.s8 %v1441
    %v1443 = vlaneseq
    %v1444 = vshrl.u32 %v1443, 7
    %v1445 = vsub.s32 %v1442, %v1444
    %v1446 = vrot.slane %v1432, %v1445
    %v1447 = vcombine.low %v1388, %v1396
    %v1448 = vcombine.high %v1388, %v1396
    %v1450 = vunpack.c.l.s4 1983009808
    %v1451 = vunpack.c.0.s8 %v1450
    %v1452 = vlaneseq
    %v1453 = vshrl.u32 %v1452, 7
    %v1454 = vsub.s32 %v1451, %v1453
    %v1455 = vrot.slane %v1447, %v1454
    %v1457 = vunpack.c.l.s4 1983009808
    %v1458 = vunpack.c.0.s8 %v1457
    %v1459 = vlaneseq
    %v1460 = vshrl.u32 %v1459, 7
    %v1461 = vsub.s32 %v1458, %v1460
    %v1462 = vrot.slane %v1448, %v1461
    %v1463 = vcombine.low %v1400, %v1408
    %v1464 = vcombine.high %v1400, %v1408
    %v1466 = vunpack.c.l.s4 1983009808
    %v1467 = vunpack.c.0.s8 %v1466
    %v1468 = vlaneseq
    %v1469 = vshrl.u32 %v1468, 7
    %v1470 = vsub.s32 %v1467, %v1469
    %v1471 = vrot.slane %v1463, %v1470
    %v1473 = vunpack.c.l.s4 1983009808
    %v1474 = vunpack.c.0.s8 %v1473
    %v1475 = vlaneseq
    %v1476 = vshrl.u32 %v1475, 7
    %v1477 = vsub.s32 %v1474, %v1476
    %v1478 = vrot.slane %v1464, %v1477
    %v1479 = vcombine.low %v1404, %v1412
    %v1480 = vcombine.high %v1404, %v1412
    %v1482 = vunpack.c.l.s4 1983009808
    %v1483 = vunpack.c.0.s8 %v1482
    %v1484 = vlaneseq
    %v1485 = vshrl.u32 %v1484, 7
    %v1486 = vsub.s32 %v1483, %v1485
    %v1487 = vrot.slane %v1479, %v1486
    %v1489 = vunpack.c.l.s4 1983009808
    %v1490 = vunpack.c.0.s8 %v1489
    %v1491 = vlaneseq
    %v1492 = vshrl.u32 %v1491, 7
    %v1493 = vsub.s32 %v1490, %v1492
    %v1494 = vrot.slane %v1480, %v1493
    %v1495 = vcombine.low %v1439, %v1455
    %v1496 = vcombine.high %v1439, %v1455
    %v1498 = vunpack.c.l.s4 1934713408
    %v1499 = vunpack.c.0.s8 %v1498
    %v1500 = vlaneseq
    %v1501 = vshrl.u32 %v1500, 7
    %v1502 = vsub.s32 %v1499, %v1501
    %v1503 = vrot.slane %v1495, %v1502
    %v1505 = vunpack.c.l.s4 1934713408
    %v1506 = vunpack.c.0.s8 %v1505
    %v1507 = vlaneseq
    %v1508 = vshrl.u32 %v1507, 7
    %v1509 = vsub.s32 %v1506, %v1508
    %v1510 = vrot.slane %v1496, %v1509
    %v1511 = vcombine.low %v1446, %v1462
    %v1512 = vcombine.high %v1446, %v1462
    %v1514 = vunpack.c.l.s4 1934713408
    %v1515 = vunpack.c.0.s8 %v1514
    %v1516 = vlaneseq
    %v1517 = vshrl.u32 %v1516, 7
    %v1518 = vsub.s32 %v1515, %v1517
    %v1519 = vrot.slane %v1511, %v1518
    %v1521 = vunpack.c.l.s4 1934713408
    %v1522 = vunpack.c.0.s8 %v1521
    %v1523 = vlaneseq
    %v1524 = vshrl.u32 %v1523, 7
    %v1525 = vsub.s32 %v1522, %v1524
    %v1526 = vrot.slane %v1512, %v1525
    %v1527 = vcombine.low %v1471, %v1487
    %v1528 = vcombine.high %v1471, %v1487
    %v1530 = vunpack.c.l.s4 1934713408
    %v1531 = vunpack.c.0.s8 %v1530
    %v1532 = vlaneseq
    %v1533 = vshrl.u32 %v1532, 7
    %v1534 = vsub.s32 %v1531, %v1533
    %v1535 = vrot.slane %v1527, %v1534
    %v1537 = vunpack.c.l.s4 1934713408
    %v1538 = vunpack.c.0.s8 %v1537
    %v1539 = vlaneseq
    %v1540 = vshrl.u32 %v1539, 7
    %v1541 = vsub.s32 %v1538, %v1540
    %v1542 = vrot.slane %v1528, %v1541
    %v1543 = vcombine.low %v1478, %v1494
    %v1544 = vcombine.high %v1478, %v1494
    %v1546 = vunpack.c.l.s4 1934713408
    %v1547 = vunpack.c.0.s8 %v1546
    %v1548 = vlaneseq
    %v1549 = vshrl.u32 %v1548, 7
    %v1550 = vsub.s32 %v1547, %v1549
    %v1551 = vrot.slane %v1543, %v1550
    %v1553 = vunpack.c.l.s4 1934713408
    %v1554 = vunpack.c.0.s8 %v1553
    %v1555 = vlaneseq
    %v1556 = vshrl.u32 %v1555, 7
    %v1557 = vsub.s32 %v1554, %v1556
    %v1558 = vrot.slane %v1544, %v1557
    %v1559 = vcombine.low %v1503, %v1535
    %v1560 = vcombine.high %v1503, %v1535
    %v1561 = vcombine.low %v1510, %v1542
    %v1562 = vcombine.high %v1510, %v1542
    %v1563 = vcombine.low %v1519, %v1551
    %v1564 = vcombine.high %v1519, %v1551
    %v1565 = vcombine.low %v1526, %v1558
    %v1566 = vcombine.high %v1526, %v1558
    %v1567 = vcombine.low %v1386, %v1394
    %v1568 = vcombine.high %v1386, %v1394
    %v1570 = vunpack.c.l.s4 1983009808
    %v1571 = vunpack.c.0.s8 %v1570
    %v1572 = vlaneseq
    %v1573 = vshrl.u32 %v1572, 7
    %v1574 = vsub.s32 %v1571, %v1573
    %v1575 = vrot.slane %v1567, %v1574
    %v1577 = vunpack.c.l.s4 1983009808
    %v1578 = vunpack.c.0.s8 %v1577
    %v1579 = vlaneseq
    %v1580 = vshrl.u32 %v1579, 7
    %v1581 = vsub.s32 %v1578, %v1580
    %v1582 = vrot.slane %v1568, %v1581
    %v1583 = vcombine.low %v1390, %v1398
    %v1584 = vcombine.high %v1390, %v1398
    %v1586 = vunpack.c.l.s4 1983009808
    %v1587 = vunpack.c.0.s8 %v1586
    %v1588 = vlaneseq
    %v1589 = vshrl.u32 %v1588, 7
    %v1590 = vsub.s32 %v1587, %v1589
    %v1591 = vrot.slane %v1583, %v1590
    %v1593 = vunpack.c.l.s4 1983009808
    %v1594 = vunpack.c.0.s8 %v1593
    %v1595 = vlaneseq
    %v1596 = vshrl.u32 %v1595, 7
    %v1597 = vsub.s32 %v1594, %v1596
    %v1598 = vrot.slane %v1584, %v1597
    %v1599 = vcombine.low %v1402, %v1410
    %v1600 = vcombine.high %v1402, %v1410
    %v1602 = vunpack.c.l.s4 1983009808
    %v1603 = vunpack.c.0.s8 %v1602
    %v1604 = vlaneseq
    %v1605 = vshrl.u32 %v1604, 7
    %v1606 = vsub.s32 %v1603, %v1605
    %v1607 = vrot.slane %v1599, %v1606
    %v1609 = vunpack.c.l.s4 1983009808
    %v1610 = vunpack.c.0.s8 %v1609
    %v1611 = vlaneseq
    %v1612 = vshrl.u32 %v1611, 7
    %v1613 = vsub.s32 %v1610, %v1612
    %v1614 = vrot.slane %v1600, %v1613
    %v1615 = vcombine.low %v1406, %v1414
    %v1616 = vcombine.high %v1406, %v1414
    %v1618 = vunpack.c.l.s4 1983009808
    %v1619 = vunpack.c.0.s8 %v1618
    %v1620 = vlaneseq
    %v1621 = vshrl.u32 %v1620, 7
    %v1622 = vsub.s32 %v1619, %v1621
    %v1623 = vrot.slane %v1615, %v1622
    %v1625 = vunpack.c.l.s4 1983009808
    %v1626 = vunpack.c.0.s8 %v1625
    %v1627 = vlaneseq
    %v1628 = vshrl.u32 %v1627, 7
    %v1629 = vsub.s32 %v1626, %v1628
    %v1630 = vrot.slane %v1616, %v1629
    %v1631 = vcombine.low %v1575, %v1591
    %v1632 = vcombine.high %v1575, %v1591
    %v1634 = vunpack.c.l.s4 1934713408
    %v1635 = vunpack.c.0.s8 %v1634
    %v1636 = vlaneseq
    %v1637 = vshrl.u32 %v1636, 7
    %v1638 = vsub.s32 %v1635, %v1637
    %v1639 = vrot.slane %v1631, %v1638
    %v1641 = vunpack.c.l.s4 1934713408
    %v1642 = vunpack.c.0.s8 %v1641
    %v1643 = vlaneseq
    %v1644 = vshrl.u32 %v1643, 7
    %v1645 = vsub.s32 %v1642, %v1644
    %v1646 = vrot.slane %v1632, %v1645
    %v1647 = vcombine.low %v1582, %v1598
    %v1648 = vcombine.high %v1582, %v1598
    %v1650 = vunpack.c.l.s4 1934713408
    %v1651 = vunpack.c.0.s8 %v1650
    %v1652 = vlaneseq
    %v1653 = vshrl.u32 %v1652, 7
    %v1654 = vsub.s32 %v1651, %v1653
    %v1655 = vrot.slane %v1647, %v1654
    %v1657 = vunpack.c.l.s4 1934713408
    %v1658 = vunpack.c.0.s8 %v1657
    %v1659 = vlaneseq
    %v1660 = vshrl.u32 %v1659, 7
    %v1661 = vsub.s32 %v1658, %v1660
    %v1662 = vrot.slane %v1648, %v1661
    %v1663 = vcombine.low %v1607, %v1623
    %v1664 = vcombine.high %v1607, %v1623
    %v1666 = vunpack.c.l.s4 1934713408
    %v1667 = vunpack.c.0.s8 %v1666
    %v1668 = vlaneseq
    %v1669 = vshrl.u32 %v1668, 7
    %v1670 = vsub.s32 %v1667, %v1669
    %v1671 = vrot.slane %v1663, %v1670
    %v1673 = vunpack.c.l.s4 1934713408
    %v1674 = vunpack.c.0.s8 %v1673
    %v1675 = vlaneseq
    %v1676 = vshrl.u32 %v1675, 7
    %v1677 = vsub.s32 %v1674, %v1676
    %v1678 = vrot.slane %v1664, %v1677
    %v1679 = vcombine.low %v1614, %v1630
    %v1680 = vcombine.high %v1614, %v1630
    %v1682 = vunpack.c.l.s4 1934713408
    %v1683 = vunpack.c.0.s8 %v1682
    %v1684 = vlaneseq
    %v1685 = vshrl.u32 %v1684, 7
    %v1686 = vsub.s32 %v1683, %v1685
    %v1687 = vrot.slane %v1679, %v1686
    %v1689 = vunpack.c.l.s4 1934713408
    %v1690 = vunpack.c.0.s8 %v1689
    %v1691 = vlaneseq
    %v1692 = vshrl.u32 %v1691, 7
    %v1693 = vsub.s32 %v1690, %v1692
    %v1694 = vrot.slane %v1680, %v1693
    %v1695 = vcombine.low %v1639, %v1671
    %v1696 = vcombine.high %v1639, %v1671
    %v1697 = vcombine.low %v1646, %v1678
    %v1698 = vcombine.high %v1646, %v1678
    %v1699 = vcombine.low %v1655, %v1687
    %v1700 = vcombine.high %v1655, %v1687
    %v1701 = vcombine.low %v1662, %v1694
    %v1702 = vcombine.high %v1662, %v1694
    %v1703 = vcombine.low %v1559, %v1563
    %v1704 = vcombine.high %v1559, %v1563
    %v1706 = vunpack.c.l.s4 1983009808
    %v1707 = vunpack.c.0.s8 %v1706
    %v1708 = vlaneseq
    %v1709 = vshrl.u32 %v1708, 7
    %v1710 = vsub.s32 %v1707, %v1709
    %v1711 = vrot.slane %v1703, %v1710
    %v1713 = vunpack.c.l.s4 1983009808
    %v1714 = vunpack.c.0.s8 %v1713
    %v1715 = vlaneseq
    %v1716 = vshrl.u32 %v1715, 7
    %v1717 = vsub.s32 %v1714, %v1716
    %v1718 = vrot.slane %v1704, %v1717
    %v1719 = vcombine.low %v1561, %v1565
    %v1720 = vcombine.high %v1561, %v1565
    %v1722 = vunpack.c.l.s4 1983009808
    %v1723 = vunpack.c.0.s8 %v1722
    %v1724 = vlaneseq
    %v1725 = vshrl.u32 %v1724, 7
    %v1726 = vsub.s32 %v1723, %v1725
    %v1727 = vrot.slane %v1719, %v1726
    %v1729 = vunpack.c.l.s4 1983009808
    %v1730 = vunpack.c.0.s8 %v1729
    %v1731 = vlaneseq
    %v1732 = vshrl.u32 %v1731, 7
    %v1733 = vsub.s32 %v1730, %v1732
    %v1734 = vrot.slane %v1720, %v1733
    %v1735 = vcombine.low %v1695, %v1699
    %v1736 = vcombine.high %v1695, %v1699
    %v1738 = vunpack.c.l.s4 1983009808
    %v1739 = vunpack.c.0.s8 %v1738
    %v1740 = vlaneseq
    %v1741 = vshrl.u32 %v1740, 7
    %v1742 = vsub.s32 %v1739, %v1741
    %v1743 = vrot.slane %v1735, %v1742
    %v1745 = vunpack.c.l.s4 1983009808
    %v1746 = vunpack.c.0.s8 %v1745
    %v1747 = vlaneseq
    %v1748 = vshrl.u32 %v1747, 7
    %v1749 = vsub.s32 %v1746, %v1748
    %v1750 = vrot.slane %v1736, %v1749
    %v1751 = vcombine.low %v1697, %v1701
    %v1752 = vcombine.high %v1697, %v1701
    %v1754 = vunpack.c.l.s4 1983009808
    %v1755 = vunpack.c.0.s8 %v1754
    %v1756 = vlaneseq
    %v1757 = vshrl.u32 %v1756, 7
    %v1758 = vsub.s32 %v1755, %v1757
    %v1759 = vrot.slane %v1751, %v1758
    %v1761 = vunpack.c.l.s4 1983009808
    %v1762 = vunpack.c.0.s8 %v1761
    %v1763 = vlaneseq
    %v1764 = vshrl.u32 %v1763, 7
    %v1765 = vsub.s32 %v1762, %v1764
    %v1766 = vrot.slane %v1752, %v1765
    %v1767 = vcombine.low %v1711, %v1727
    %v1768 = vcombine.high %v1711, %v1727
    %v1770 = vunpack.c.l.s4 1934713408
    %v1771 = vunpack.c.0.s8 %v1770
    %v1772 = vlaneseq
    %v1773 = vshrl.u32 %v1772, 7
    %v1774 = vsub.s32 %v1771, %v1773
    %v1775 = vrot.slane %v1767, %v1774
    %v1777 = vunpack.c.l.s4 1934713408
    %v1778 = vunpack.c.0.s8 %v1777
    %v1779 = vlaneseq
    %v1780 = vshrl.u32 %v1779, 7
    %v1781 = vsub.s32 %v1778, %v1780
    %v1782 = vrot.slane %v1768, %v1781
    %v1783 = vcombine.low %v1718, %v1734
    %v1784 = vcombine.high %v1718, %v1734
    %v1786 = vunpack.c.l.s4 1934713408
    %v1787 = vunpack.c.0.s8 %v1786
    %v1788 = vlaneseq
    %v1789 = vshrl.u32 %v1788, 7
    %v1790 = vsub.s32 %v1787, %v1789
    %v1791 = vrot.slane %v1783, %v1790
    %v1793 = vunpack.c.l.s4 1934713408
    %v1794 = vunpack.c.0.s8 %v1793
    %v1795 = vlaneseq
    %v1796 = vshrl.u32 %v1795, 7
    %v1797 = vsub.s32 %v1794, %v1796
    %v1798 = vrot.slane %v1784, %v1797
    %v1799 = vcombine.low %v1743, %v1759
    %v1800 = vcombine.high %v1743, %v1759
    %v1802 = vunpack.c.l.s4 1934713408
    %v1803 = vunpack.c.0.s8 %v1802
    %v1804 = vlaneseq
    %v1805 = vshrl.u32 %v1804, 7
    %v1806 = vsub.s32 %v1803, %v1805
    %v1807 = vrot.slane %v1799, %v1806
    %v1809 = vunpack.c.l.s4 1934713408
    %v1810 = vunpack.c.0.s8 %v1809
    %v1811 = vlaneseq
    %v1812 = vshrl.u32 %v1811, 7
    %v1813 = vsub.s32 %v1810, %v1812
    %v1814 = vrot.slane %v1800, %v1813
    %v1815 = vcombine.low %v1750, %v1766
    %v1816 = vcombine.high %v1750, %v1766
    %v1818 = vunpack.c.l.s4 1934713408
    %v1819 = vunpack.c.0.s8 %v1818
    %v1820 = vlaneseq
    %v1821 = vshrl.u32 %v1820, 7
    %v1822 = vsub.s32 %v1819, %v1821
    %v1823 = vrot.slane %v1815, %v1822
    %v1825 = vunpack.c.l.s4 1934713408
    %v1826 = vunpack.c.0.s8 %v1825
    %v1827 = vlaneseq
    %v1828 = vshrl.u32 %v1827, 7
    %v1829 = vsub.s32 %v1826, %v1828
    %v1830 = vrot.slane %v1816, %v1829
    %v1831 = vcombine.low %v1775, %v1807
    %v1832 = vcombine.high %v1775, %v1807
    %v1833 = vcombine.low %v1782, %v1814
    %v1834 = vcombine.high %v1782, %v1814
    %v1835 = vcombine.low %v1791, %v1823
    %v1836 = vcombine.high %v1791, %v1823
    %v1837 = vcombine.low %v1798, %v1830
    %v1838 = vcombine.high %v1798, %v1830
    %v1839 = vcombine.low %v1560, %v1564
    %v1840 = vcombine.high %v1560, %v1564
    %v1842 = vunpack.c.l.s4 1983009808
    %v1843 = vunpack.c.0.s8 %v1842
    %v1844 = vlaneseq
    %v1845 = vshrl.u32 %v1844, 7
    %v1846 = vsub.s32 %v1843, %v1845
    %v1847 = vrot.slane %v1839, %v1846
    %v1849 = vunpack.c.l.s4 1983009808
    %v1850 = vunpack.c.0.s8 %v1849
    %v1851 = vlaneseq
    %v1852 = vshrl.u32 %v1851, 7
    %v1853 = vsub.s32 %v1850, %v1852
    %v1854 = vrot.slane %v1840, %v1853
    %v1855 = vcombine.low %v1562, %v1566
    %v1856 = vcombine.high %v1562, %v1566
    %v1858 = vunpack.c.l.s4 1983009808
    %v1859 = vunpack.c.0.s8 %v1858
    %v1860 = vlaneseq
    %v1861 = vshrl.u32 %v1860, 7
    %v1862 = vsub.s32 %v1859, %v1861
    %v1863 = vrot.slane %v1855, %v1862
    %v1865 = vunpack.c.l.s4 1983009808
    %v1866 = vunpack.c.0.s8 %v1865
    %v1867 = vlaneseq
    %v1868 = vshrl.u32 %v1867, 7
    %v1869 = vsub.s32 %v1866, %v1868
    %v1870 = vrot.slane %v1856, %v1869
    %v1871 = vcombine.low %v1696, %v1700
    %v1872 = vcombine.high %v1696, %v1700
    %v1874 = vunpack.c.l.s4 1983009808
    %v1875 = vunpack.c.0.s8 %v1874
    %v1876 = vlaneseq
    %v1877 = vshrl.u32 %v1876, 7
    %v1878 = vsub.s32 %v1875, %v1877
    %v1879 = vrot.slane %v1871, %v1878
    %v1881 = vunpack.c.l.s4 1983009808
    %v1882 = vunpack.c.0.s8 %v1881
    %v1883 = vlaneseq
    %v1884 = vshrl.u32 %v1883, 7
    %v1885 = vsub.s32 %v1882, %v1884
    %v1886 = vrot.slane %v1872, %v1885
    %v1887 = vcombine.low %v1698, %v1702
    %v1888 = vcombine.high %v1698, %v1702
    %v1890 = vunpack.c.l.s4 1983009808
    %v1891 = vunpack.c.0.s8 %v1890
    %v1892 = vlaneseq
    %v1893 = vshrl.u32 %v1892, 7
    %v1894 = vsub.s32 %v1891, %v1893
    %v1895 = vrot.slane %v1887, %v1894
    %v1897 = vunpack.c.l.s4 1983009808
    %v1898 = vunpack.c.0.s8 %v1897
    %v1899 = vlaneseq
    %v1900 = vshrl.u32 %v1899, 7
    %v1901 = vsub.s32 %v1898, %v1900
    %v1902 = vrot.slane %v1888, %v1901
    %v1903 = vcombine.low %v1847, %v1863
    %v1904 = vcombine.high %v1847, %v1863
    %v1906 = vunpack.c.l.s4 1934713408
    %v1907 = vunpack.c.0.s8 %v1906
    %v1908 = vlaneseq
    %v1909 = vshrl.u32 %v1908, 7
    %v1910 = vsub.s32 %v1907, %v1909
    %v1911 = vrot.slane %v1903, %v1910
    %v1913 = vunpack.c.l.s4 1934713408
    %v1914 = vunpack.c.0.s8 %v1913
    %v1915 = vlaneseq
    %v1916 = vshrl.u32 %v1915, 7
    %v1917 = vsub.s32 %v1914, %v1916
    %v1918 = vrot.slane %v1904, %v1917
    %v1919 = vcombine.low %v1854, %v1870
    %v1920 = vcombine.high %v1854, %v1870
    %v1922 = vunpack.c.l.s4 1934713408
    %v1923 = vunpack.c.0.s8 %v1922
    %v1924 = vlaneseq
    %v1925 = vshrl.u32 %v1924, 7
    %v1926 = vsub.s32 %v1923, %v1925
    %v1927 = vrot.slane %v1919, %v1926
    %v1929 = vunpack.c.l.s4 1934713408
    %v1930 = vunpack.c.0.s8 %v1929
    %v1931 = vlaneseq
    %v1932 = vshrl.u32 %v1931, 7
    %v1933 = vsub.s32 %v1930, %v1932
    %v1934 = vrot.slane %v1920, %v1933
    %v1935 = vcombine.low %v1879, %v1895
    %v1936 = vcombine.high %v1879, %v1895
    %v1938 = vunpack.c.l.s4 1934713408
    %v1939 = vunpack.c.0.s8 %v1938
    %v1940 = vlaneseq
    %v1941 = vshrl.u32 %v1940, 7
    %v1942 = vsub.s32 %v1939, %v1941
    %v1943 = vrot.slane %v1935, %v1942
    %v1945 = vunpack.c.l.s4 1934713408
    %v1946 = vunpack.c.0.s8 %v1945
    %v1947 = vlaneseq
    %v1948 = vshrl.u32 %v1947, 7
    %v1949 = vsub.s32 %v1946, %v1948
    %v1950 = vrot.slane %v1936, %v1949
    %v1951 = vcombine.low %v1886, %v1902
    %v1952 = vcombine.high %v1886, %v1902
    %v1954 = vunpack.c.l.s4 1934713408
    %v1955 = vunpack.c.0.s8 %v1954
    %v1956 = vlaneseq
    %v1957 = vshrl.u32 %v1956, 7
    %v1958 = vsub.s32 %v1955, %v1957
    %v1959 = vrot.slane %v1951, %v1958
    %v1961 = vunpack.c.l.s4 1934713408
    %v1962 = vunpack.c.0.s8 %v1961
    %v1963 = vlaneseq
    %v1964 = vshrl.u32 %v1963, 7
    %v1965 = vsub.s32 %v1962, %v1964
    %v1966 = vrot.slane %v1952, %v1965
    %v1967 = vcombine.low %v1911, %v1943
    %v1968 = vcombine.high %v1911, %v1943
    %v1969 = vcombine.low %v1918, %v1950
    %v1970 = vcombine.high %v1918, %v1950
    %v1971 = vcombine.low %v1927, %v1959
    %v1972 = vcombine.high %v1927, %v1959
    %v1973 = vcombine.low %v1934, %v1966
    %v1974 = vcombine.high %v1934, %v1966
    %vm1975 = vcmask 31744
    %v1977 = vsel %vm1975, %v647, 0
    %v1980 = vsel %vm1975, %v1239, 0
    %1982 = vmatprep.subr.mxu0 0.0
    %1983 = vmatpush1.xpose.msra.mxu0 0.0
    %1984 = vmatprep.subr.mxu0 0.0
    %1985 = vmatpush1.xpose.msra.mxu0 0.0
    %1986 = vmatprep.subr.mxu0 0.0
    %1987 = vmatpush1.xpose.msra.mxu0 0.0
    %1988 = vmatprep.subr.mxu0 0.0
    %1989 = vmatpush1.xpose.msra.mxu0 0.0
    %1990 = vmatprep.subr.mxu0 0.0
    %1991 = vmatpush1.xpose.msra.mxu0 0.0
    %1992 = vmatprep.subr.mxu0 0.0
    %1993 = vmatpush1.xpose.msra.mxu0 0.0
    %1994 = vmatprep.subr.mxu0 0.0
    %1995 = vmatpush1.xpose.msra.mxu0 0.0
    %1996 = vmatprep.subr.mxu0 0.0
    %1997 = vmatpush1.xpose.msra.mxu0 0.0
    %1998 = vmatprep.subr.mxu0 0.0
    %1999 = vmatpush1.xpose.msra.mxu0 0.0
    %2000 = vmatprep.subr.mxu0 0.0
    %2001 = vmatpush1.xpose.msra.mxu0 0.0
    %2002 = vmatprep.subr.mxu0 0.0
    %2003 = vmatpush1.xpose.msra.mxu0 0.0
    %2004 = vmatprep.subr.mxu0 0.0
    %2005 = vmatpush1.xpose.msra.mxu0 0.0
    %2006 = vmatprep.subr.mxu0 0.0
    %2007 = vmatpush1.xpose.msra.mxu0 0.0
    %2008 = vmatprep.subr.mxu0 0.0
    %2009 = vmatpush1.xpose.msra.mxu0 0.0
    %2010 = vmatprep.subr.mxu0 0.0
    %2011 = vmatpush1.xpose.msra.mxu0 0.0
    %2012 = vmatprep.subr.mxu0 0.0
    %2013 = vmatpush1.xpose.msra.mxu0 %v1980
    %2014 = vmatprep.subr.mxu0 0.0
    %2015 = vmatpush2.xpose.msra.mxu0 0.0
    %2016 = vmatprep.subr.mxu0 0.0
    %2017 = vmatpush2.xpose.msra.mxu0 0.0
    %2018 = vmatprep.subr.mxu0 0.0
    %2019 = vmatpush2.xpose.msra.mxu0 0.0
    %2020 = vmatprep.subr.mxu0 0.0
    %2021 = vmatpush2.xpose.msra.mxu0 0.0
    %2022 = vmatprep.subr.mxu0 0.0
    %2023 = vmatpush2.xpose.msra.mxu0 0.0
    %2024 = vmatprep.subr.mxu0 0.0
    %2025 = vmatpush2.xpose.msra.mxu0 0.0
    %2026 = vmatprep.subr.mxu0 0.0
    %2027 = vmatpush2.xpose.msra.mxu0 0.0
    %2028 = vmatprep.subr.mxu0 0.0
    %2029 = vmatpush2.xpose.msra.mxu0 0.0
    %2030 = vmatprep.subr.mxu0 0.0
    %2031 = vmatpush2.xpose.msra.mxu0 0.0
    %2032 = vmatprep.subr.mxu0 0.0
    %2033 = vmatpush2.xpose.msra.mxu0 0.0
    %2034 = vmatprep.subr.mxu0 0.0
    %2035 = vmatpush2.xpose.msra.mxu0 0.0
    %2036 = vmatprep.subr.mxu0 0.0
    %2037 = vmatpush2.xpose.msra.mxu0 0.0
    %2038 = vmatprep.subr.mxu0 0.0
    %2039 = vmatpush2.xpose.msra.mxu0 0.0
    %2040 = vmatprep.subr.mxu0 0.0
    %2041 = vmatpush2.xpose.msra.mxu0 0.0
    %2042 = vmatprep.subr.mxu0 0.0
    %2043 = vmatpush2.xpose.msra.mxu0 0.0
    %2044 = vmatprep.subr.mxu0 0.0
    %2045 = vmatpush2.xpose.msra.mxu0 0.0
    %2046 = vmatprep.mubr.f32.mxu0 0.0
    %2047 = vmatmul.mubr.f32.gmra.mxu0 %v1977
    %v2048 = vpop.f32.mrf.mxu0
    %v2049 = vadd.f32 0.0, %v2048
    %v2050 = vpop.f32.mrf.mxu0
    %2051 = vdwg.mxu0
    %v2053 = vsel %vm1975, %v648, 0
    %v2056 = vsel %vm1975, %v1240, 0
    %2058 = vmatprep.subr.mxu0 0.0
    %2059 = vmatpush1.xpose.msra.mxu0 0.0
    %2060 = vmatprep.subr.mxu0 0.0
    %2061 = vmatpush1.xpose.msra.mxu0 0.0
    %2062 = vmatprep.subr.mxu0 0.0
    %2063 = vmatpush1.xpose.msra.mxu0 0.0
    %2064 = vmatprep.subr.mxu0 0.0
    %2065 = vmatpush1.xpose.msra.mxu0 0.0
    %2066 = vmatprep.subr.mxu0 0.0
    %2067 = vmatpush1.xpose.msra.mxu0 0.0
    %2068 = vmatprep.subr.mxu0 0.0
    %2069 = vmatpush1.xpose.msra.mxu0 0.0
    %2070 = vmatprep.subr.mxu0 0.0
    %2071 = vmatpush1.xpose.msra.mxu0 0.0
    %2072 = vmatprep.subr.mxu0 0.0
    %2073 = vmatpush1.xpose.msra.mxu0 0.0
    %2074 = vmatprep.subr.mxu0 0.0
    %2075 = vmatpush1.xpose.msra.mxu0 0.0
    %2076 = vmatprep.subr.mxu0 0.0
    %2077 = vmatpush1.xpose.msra.mxu0 0.0
    %2078 = vmatprep.subr.mxu0 0.0
    %2079 = vmatpush1.xpose.msra.mxu0 0.0
    %2080 = vmatprep.subr.mxu0 0.0
    %2081 = vmatpush1.xpose.msra.mxu0 0.0
    %2082 = vmatprep.subr.mxu0 0.0
    %2083 = vmatpush1.xpose.msra.mxu0 0.0
    %2084 = vmatprep.subr.mxu0 0.0
    %2085 = vmatpush1.xpose.msra.mxu0 0.0
    %2086 = vmatprep.subr.mxu0 0.0
    %2087 = vmatpush1.xpose.msra.mxu0 0.0
    %2088 = vmatprep.subr.mxu0 0.0
    %2089 = vmatpush1.xpose.msra.mxu0 %v2056
    %2090 = vmatprep.subr.mxu0 0.0
    %2091 = vmatpush2.xpose.msra.mxu0 0.0
    %2092 = vmatprep.subr.mxu0 0.0
    %2093 = vmatpush2.xpose.msra.mxu0 0.0
    %2094 = vmatprep.subr.mxu0 0.0
    %2095 = vmatpush2.xpose.msra.mxu0 0.0
    %2096 = vmatprep.subr.mxu0 0.0
    %2097 = vmatpush2.xpose.msra.mxu0 0.0
    %2098 = vmatprep.subr.mxu0 0.0
    %2099 = vmatpush2.xpose.msra.mxu0 0.0
    %2100 = vmatprep.subr.mxu0 0.0
    %2101 = vmatpush2.xpose.msra.mxu0 0.0
    %2102 = vmatprep.subr.mxu0 0.0
    %2103 = vmatpush2.xpose.msra.mxu0 0.0
    %2104 = vmatprep.subr.mxu0 0.0
    %2105 = vmatpush2.xpose.msra.mxu0 0.0
    %2106 = vmatprep.subr.mxu0 0.0
    %2107 = vmatpush2.xpose.msra.mxu0 0.0
    %2108 = vmatprep.subr.mxu0 0.0
    %2109 = vmatpush2.xpose.msra.mxu0 0.0
    %2110 = vmatprep.subr.mxu0 0.0
    %2111 = vmatpush2.xpose.msra.mxu0 0.0
    %2112 = vmatprep.subr.mxu0 0.0
    %2113 = vmatpush2.xpose.msra.mxu0 0.0
    %2114 = vmatprep.subr.mxu0 0.0
    %2115 = vmatpush2.xpose.msra.mxu0 0.0
    %2116 = vmatprep.subr.mxu0 0.0
    %2117 = vmatpush2.xpose.msra.mxu0 0.0
    %2118 = vmatprep.subr.mxu0 0.0
    %2119 = vmatpush2.xpose.msra.mxu0 0.0
    %2120 = vmatprep.subr.mxu0 0.0
    %2121 = vmatpush2.xpose.msra.mxu0 0.0
    %2122 = vmatprep.mubr.f32.mxu0 0.0
    %2123 = vmatmul.mubr.f32.gmra.mxu0 %v2053
    %v2124 = vpop.f32.mrf.mxu0
    %v2125 = vadd.f32 0.0, %v2124
    %v2126 = vpop.f32.mrf.mxu0
    %2127 = vdwg.mxu0
    %v2129 = vsel %vm1975, %v649, 0
    %v2132 = vsel %vm1975, %v1241, 0
    %2134 = vmatprep.subr.mxu0 0.0
    %2135 = vmatpush1.xpose.msra.mxu0 0.0
    %2136 = vmatprep.subr.mxu0 0.0
    %2137 = vmatpush1.xpose.msra.mxu0 0.0
    %2138 = vmatprep.subr.mxu0 0.0
    %2139 = vmatpush1.xpose.msra.mxu0 0.0
    %2140 = vmatprep.subr.mxu0 0.0
    %2141 = vmatpush1.xpose.msra.mxu0 0.0
    %2142 = vmatprep.subr.mxu0 0.0
    %2143 = vmatpush1.xpose.msra.mxu0 0.0
    %2144 = vmatprep.subr.mxu0 0.0
    %2145 = vmatpush1.xpose.msra.mxu0 0.0
    %2146 = vmatprep.subr.mxu0 0.0
    %2147 = vmatpush1.xpose.msra.mxu0 0.0
    %2148 = vmatprep.subr.mxu0 0.0
    %2149 = vmatpush1.xpose.msra.mxu0 0.0
    %2150 = vmatprep.subr.mxu0 0.0
    %2151 = vmatpush1.xpose.msra.mxu0 0.0
    %2152 = vmatprep.subr.mxu0 0.0
    %2153 = vmatpush1.xpose.msra.mxu0 0.0
    %2154 = vmatprep.subr.mxu0 0.0
    %2155 = vmatpush1.xpose.msra.mxu0 0.0
    %2156 = vmatprep.subr.mxu0 0.0
    %2157 = vmatpush1.xpose.msra.mxu0 0.0
    %2158 = vmatprep.subr.mxu0 0.0
    %2159 = vmatpush1.xpose.msra.mxu0 0.0
    %2160 = vmatprep.subr.mxu0 0.0
    %2161 = vmatpush1.xpose.msra.mxu0 0.0
    %2162 = vmatprep.subr.mxu0 0.0
    %2163 = vmatpush1.xpose.msra.mxu0 0.0
    %2164 = vmatprep.subr.mxu0 0.0
    %2165 = vmatpush1.xpose.msra.mxu0 %v2132
    %2166 = vmatprep.subr.mxu0 0.0
    %2167 = vmatpush2.xpose.msra.mxu0 0.0
    %2168 = vmatprep.subr.mxu0 0.0
    %2169 = vmatpush2.xpose.msra.mxu0 0.0
    %2170 = vmatprep.subr.mxu0 0.0
    %2171 = vmatpush2.xpose.msra.mxu0 0.0
    %2172 = vmatprep.subr.mxu0 0.0
    %2173 = vmatpush2.xpose.msra.mxu0 0.0
    %2174 = vmatprep.subr.mxu0 0.0
    %2175 = vmatpush2.xpose.msra.mxu0 0.0
    %2176 = vmatprep.subr.mxu0 0.0
    %2177 = vmatpush2.xpose.msra.mxu0 0.0
    %2178 = vmatprep.subr.mxu0 0.0
    %2179 = vmatpush2.xpose.msra.mxu0 0.0
    %2180 = vmatprep.subr.mxu0 0.0
    %2181 = vmatpush2.xpose.msra.mxu0 0.0
    %2182 = vmatprep.subr.mxu0 0.0
    %2183 = vmatpush2.xpose.msra.mxu0 0.0
    %2184 = vmatprep.subr.mxu0 0.0
    %2185 = vmatpush2.xpose.msra.mxu0 0.0
    %2186 = vmatprep.subr.mxu0 0.0
    %2187 = vmatpush2.xpose.msra.mxu0 0.0
    %2188 = vmatprep.subr.mxu0 0.0
    %2189 = vmatpush2.xpose.msra.mxu0 0.0
    %2190 = vmatprep.subr.mxu0 0.0
    %2191 = vmatpush2.xpose.msra.mxu0 0.0
    %2192 = vmatprep.subr.mxu0 0.0
    %2193 = vmatpush2.xpose.msra.mxu0 0.0
    %2194 = vmatprep.subr.mxu0 0.0
    %2195 = vmatpush2.xpose.msra.mxu0 0.0
    %2196 = vmatprep.subr.mxu0 0.0
    %2197 = vmatpush2.xpose.msra.mxu0 0.0
    %2198 = vmatprep.mubr.f32.mxu0 0.0
    %2199 = vmatmul.mubr.f32.gmra.mxu0 %v2129
    %v2200 = vpop.f32.mrf.mxu0
    %v2201 = vadd.f32 0.0, %v2200
    %v2202 = vpop.f32.mrf.mxu0
    %2203 = vdwg.mxu0
    %v2205 = vsel %vm1975, %v650, 0
    %v2208 = vsel %vm1975, %v1242, 0
    %2210 = vmatprep.subr.mxu0 0.0
    %2211 = vmatpush1.xpose.msra.mxu0 0.0
    %2212 = vmatprep.subr.mxu0 0.0
    %2213 = vmatpush1.xpose.msra.mxu0 0.0
    %2214 = vmatprep.subr.mxu0 0.0
    %2215 = vmatpush1.xpose.msra.mxu0 0.0
    %2216 = vmatprep.subr.mxu0 0.0
    %2217 = vmatpush1.xpose.msra.mxu0 0.0
    %2218 = vmatprep.subr.mxu0 0.0
    %2219 = vmatpush1.xpose.msra.mxu0 0.0
    %2220 = vmatprep.subr.mxu0 0.0
    %2221 = vmatpush1.xpose.msra.mxu0 0.0
    %2222 = vmatprep.subr.mxu0 0.0
    %2223 = vmatpush1.xpose.msra.mxu0 0.0
    %2224 = vmatprep.subr.mxu0 0.0
    %2225 = vmatpush1.xpose.msra.mxu0 0.0
    %2226 = vmatprep.subr.mxu0 0.0
    %2227 = vmatpush1.xpose.msra.mxu0 0.0
    %2228 = vmatprep.subr.mxu0 0.0
    %2229 = vmatpush1.xpose.msra.mxu0 0.0
    %2230 = vmatprep.subr.mxu0 0.0
    %2231 = vmatpush1.xpose.msra.mxu0 0.0
    %2232 = vmatprep.subr.mxu0 0.0
    %2233 = vmatpush1.xpose.msra.mxu0 0.0
    %2234 = vmatprep.subr.mxu0 0.0
    %2235 = vmatpush1.xpose.msra.mxu0 0.0
    %2236 = vmatprep.subr.mxu0 0.0
    %2237 = vmatpush1.xpose.msra.mxu0 0.0
    %2238 = vmatprep.subr.mxu0 0.0
    %2239 = vmatpush1.xpose.msra.mxu0 0.0
    %2240 = vmatprep.subr.mxu0 0.0
    %2241 = vmatpush1.xpose.msra.mxu0 %v2208
    %2242 = vmatprep.subr.mxu0 0.0
    %2243 = vmatpush2.xpose.msra.mxu0 0.0
    %2244 = vmatprep.subr.mxu0 0.0
    %2245 = vmatpush2.xpose.msra.mxu0 0.0
    %2246 = vmatprep.subr.mxu0 0.0
    %2247 = vmatpush2.xpose.msra.mxu0 0.0
    %2248 = vmatprep.subr.mxu0 0.0
    %2249 = vmatpush2.xpose.msra.mxu0 0.0
    %2250 = vmatprep.subr.mxu0 0.0
    %2251 = vmatpush2.xpose.msra.mxu0 0.0
    %2252 = vmatprep.subr.mxu0 0.0
    %2253 = vmatpush2.xpose.msra.mxu0 0.0
    %2254 = vmatprep.subr.mxu0 0.0
    %2255 = vmatpush2.xpose.msra.mxu0 0.0
    %2256 = vmatprep.subr.mxu0 0.0
    %2257 = vmatpush2.xpose.msra.mxu0 0.0
    %2258 = vmatprep.subr.mxu0 0.0
    %2259 = vmatpush2.xpose.msra.mxu0 0.0
    %2260 = vmatprep.subr.mxu0 0.0
    %2261 = vmatpush2.xpose.msra.mxu0 0.0
    %2262 = vmatprep.subr.mxu0 0.0
    %2263 = vmatpush2.xpose.msra.mxu0 0.0
    %2264 = vmatprep.subr.mxu0 0.0
    %2265 = vmatpush2.xpose.msra.mxu0 0.0
    %2266 = vmatprep.subr.mxu0 0.0
    %2267 = vmatpush2.xpose.msra.mxu0 0.0
    %2268 = vmatprep.subr.mxu0 0.0
    %2269 = vmatpush2.xpose.msra.mxu0 0.0
    %2270 = vmatprep.subr.mxu0 0.0
    %2271 = vmatpush2.xpose.msra.mxu0 0.0
    %2272 = vmatprep.subr.mxu0 0.0
    %2273 = vmatpush2.xpose.msra.mxu0 0.0
    %2274 = vmatprep.mubr.f32.mxu0 0.0
    %2275 = vmatmul.mubr.f32.gmra.mxu0 %v2205
    %v2276 = vpop.f32.mrf.mxu0
    %v2277 = vadd.f32 0.0, %v2276
    %v2278 = vpop.f32.mrf.mxu0
    %2279 = vdwg.mxu0
    %v2281 = vsel %vm1975, %v651, 0
    %v2284 = vsel %vm1975, %v1243, 0
    %2286 = vmatprep.subr.mxu0 0.0
    %2287 = vmatpush1.xpose.msra.mxu0 0.0
    %2288 = vmatprep.subr.mxu0 0.0
    %2289 = vmatpush1.xpose.msra.mxu0 0.0
    %2290 = vmatprep.subr.mxu0 0.0
    %2291 = vmatpush1.xpose.msra.mxu0 0.0
    %2292 = vmatprep.subr.mxu0 0.0
    %2293 = vmatpush1.xpose.msra.mxu0 0.0
    %2294 = vmatprep.subr.mxu0 0.0
    %2295 = vmatpush1.xpose.msra.mxu0 0.0
    %2296 = vmatprep.subr.mxu0 0.0
    %2297 = vmatpush1.xpose.msra.mxu0 0.0
    %2298 = vmatprep.subr.mxu0 0.0
    %2299 = vmatpush1.xpose.msra.mxu0 0.0
    %2300 = vmatprep.subr.mxu0 0.0
    %2301 = vmatpush1.xpose.msra.mxu0 0.0
    %2302 = vmatprep.subr.mxu0 0.0
    %2303 = vmatpush1.xpose.msra.mxu0 0.0
    %2304 = vmatprep.subr.mxu0 0.0
    %2305 = vmatpush1.xpose.msra.mxu0 0.0
    %2306 = vmatprep.subr.mxu0 0.0
    %2307 = vmatpush1.xpose.msra.mxu0 0.0
    %2308 = vmatprep.subr.mxu0 0.0
    %2309 = vmatpush1.xpose.msra.mxu0 0.0
    %2310 = vmatprep.subr.mxu0 0.0
    %2311 = vmatpush1.xpose.msra.mxu0 0.0
    %2312 = vmatprep.subr.mxu0 0.0
    %2313 = vmatpush1.xpose.msra.mxu0 0.0
    %2314 = vmatprep.subr.mxu0 0.0
    %2315 = vmatpush1.xpose.msra.mxu0 0.0
    %2316 = vmatprep.subr.mxu0 0.0
    %2317 = vmatpush1.xpose.msra.mxu0 %v2284
    %2318 = vmatprep.subr.mxu0 0.0
    %2319 = vmatpush2.xpose.msra.mxu0 0.0
    %2320 = vmatprep.subr.mxu0 0.0
    %2321 = vmatpush2.xpose.msra.mxu0 0.0
    %2322 = vmatprep.subr.mxu0 0.0
    %2323 = vmatpush2.xpose.msra.mxu0 0.0
    %2324 = vmatprep.subr.mxu0 0.0
    %2325 = vmatpush2.xpose.msra.mxu0 0.0
    %2326 = vmatprep.subr.mxu0 0.0
    %2327 = vmatpush2.xpose.msra.mxu0 0.0
    %2328 = vmatprep.subr.mxu0 0.0
    %2329 = vmatpush2.xpose.msra.mxu0 0.0
    %2330 = vmatprep.subr.mxu0 0.0
    %2331 = vmatpush2.xpose.msra.mxu0 0.0
    %2332 = vmatprep.subr.mxu0 0.0
    %2333 = vmatpush2.xpose.msra.mxu0 0.0
    %2334 = vmatprep.subr.mxu0 0.0
    %2335 = vmatpush2.xpose.msra.mxu0 0.0
    %2336 = vmatprep.subr.mxu0 0.0
    %2337 = vmatpush2.xpose.msra.mxu0 0.0
    %2338 = vmatprep.subr.mxu0 0.0
    %2339 = vmatpush2.xpose.msra.mxu0 0.0
    %2340 = vmatprep.subr.mxu0 0.0
    %2341 = vmatpush2.xpose.msra.mxu0 0.0
    %2342 = vmatprep.subr.mxu0 0.0
    %2343 = vmatpush2.xpose.msra.mxu0 0.0
    %2344 = vmatprep.subr.mxu0 0.0
    %2345 = vmatpush2.xpose.msra.mxu0 0.0
    %2346 = vmatprep.subr.mxu0 0.0
    %2347 = vmatpush2.xpose.msra.mxu0 0.0
    %2348 = vmatprep.subr.mxu0 0.0
    %2349 = vmatpush2.xpose.msra.mxu0 0.0
    %2350 = vmatprep.mubr.f32.mxu0 0.0
    %2351 = vmatmul.mubr.f32.gmra.mxu0 %v2281
    %v2352 = vpop.f32.mrf.mxu0
    %v2353 = vadd.f32 0.0, %v2352
    %v2354 = vpop.f32.mrf.mxu0
    %2355 = vdwg.mxu0
    %v2357 = vsel %vm1975, %v652, 0
    %v2360 = vsel %vm1975, %v1244, 0
    %2362 = vmatprep.subr.mxu0 0.0
    %2363 = vmatpush1.xpose.msra.mxu0 0.0
    %2364 = vmatprep.subr.mxu0 0.0
    %2365 = vmatpush1.xpose.msra.mxu0 0.0
    %2366 = vmatprep.subr.mxu0 0.0
    %2367 = vmatpush1.xpose.msra.mxu0 0.0
    %2368 = vmatprep.subr.mxu0 0.0
    %2369 = vmatpush1.xpose.msra.mxu0 0.0
    %2370 = vmatprep.subr.mxu0 0.0
    %2371 = vmatpush1.xpose.msra.mxu0 0.0
    %2372 = vmatprep.subr.mxu0 0.0
    %2373 = vmatpush1.xpose.msra.mxu0 0.0
    %2374 = vmatprep.subr.mxu0 0.0
    %2375 = vmatpush1.xpose.msra.mxu0 0.0
    %2376 = vmatprep.subr.mxu0 0.0
    %2377 = vmatpush1.xpose.msra.mxu0 0.0
    %2378 = vmatprep.subr.mxu0 0.0
    %2379 = vmatpush1.xpose.msra.mxu0 0.0
    %2380 = vmatprep.subr.mxu0 0.0
    %2381 = vmatpush1.xpose.msra.mxu0 0.0
    %2382 = vmatprep.subr.mxu0 0.0
    %2383 = vmatpush1.xpose.msra.mxu0 0.0
    %2384 = vmatprep.subr.mxu0 0.0
    %2385 = vmatpush1.xpose.msra.mxu0 0.0
    %2386 = vmatprep.subr.mxu0 0.0
    %2387 = vmatpush1.xpose.msra.mxu0 0.0
    %2388 = vmatprep.subr.mxu0 0.0
    %2389 = vmatpush1.xpose.msra.mxu0 0.0
    %2390 = vmatprep.subr.mxu0 0.0
    %2391 = vmatpush1.xpose.msra.mxu0 0.0
    %2392 = vmatprep.subr.mxu0 0.0
    %2393 = vmatpush1.xpose.msra.mxu0 %v2360
    %2394 = vmatprep.subr.mxu0 0.0
    %2395 = vmatpush2.xpose.msra.mxu0 0.0
    %2396 = vmatprep.subr.mxu0 0.0
    %2397 = vmatpush2.xpose.msra.mxu0 0.0
    %2398 = vmatprep.subr.mxu0 0.0
    %2399 = vmatpush2.xpose.msra.mxu0 0.0
    %2400 = vmatprep.subr.mxu0 0.0
    %2401 = vmatpush2.xpose.msra.mxu0 0.0
    %2402 = vmatprep.subr.mxu0 0.0
    %2403 = vmatpush2.xpose.msra.mxu0 0.0
    %2404 = vmatprep.subr.mxu0 0.0
    %2405 = vmatpush2.xpose.msra.mxu0 0.0
    %2406 = vmatprep.subr.mxu0 0.0
    %2407 = vmatpush2.xpose.msra.mxu0 0.0
    %2408 = vmatprep.subr.mxu0 0.0
    %2409 = vmatpush2.xpose.msra.mxu0 0.0
    %2410 = vmatprep.subr.mxu0 0.0
    %2411 = vmatpush2.xpose.msra.mxu0 0.0
    %2412 = vmatprep.subr.mxu0 0.0
    %2413 = vmatpush2.xpose.msra.mxu0 0.0
    %2414 = vmatprep.subr.mxu0 0.0
    %2415 = vmatpush2.xpose.msra.mxu0 0.0
    %2416 = vmatprep.subr.mxu0 0.0
    %2417 = vmatpush2.xpose.msra.mxu0 0.0
    %2418 = vmatprep.subr.mxu0 0.0
    %2419 = vmatpush2.xpose.msra.mxu0 0.0
    %2420 = vmatprep.subr.mxu0 0.0
    %2421 = vmatpush2.xpose.msra.mxu0 0.0
    %2422 = vmatprep.subr.mxu0 0.0
    %2423 = vmatpush2.xpose.msra.mxu0 0.0
    %2424 = vmatprep.subr.mxu0 0.0
    %2425 = vmatpush2.xpose.msra.mxu0 0.0
    %2426 = vmatprep.mubr.f32.mxu0 0.0
    %2427 = vmatmul.mubr.f32.gmra.mxu0 %v2357
    %v2428 = vpop.f32.mrf.mxu0
    %v2429 = vadd.f32 0.0, %v2428
    %v2430 = vpop.f32.mrf.mxu0
    %2431 = vdwg.mxu0
    %v2433 = vsel %vm1975, %v653, 0
    %v2436 = vsel %vm1975, %v1245, 0
    %2438 = vmatprep.subr.mxu0 0.0
    %2439 = vmatpush1.xpose.msra.mxu0 0.0
    %2440 = vmatprep.subr.mxu0 0.0
    %2441 = vmatpush1.xpose.msra.mxu0 0.0
    %2442 = vmatprep.subr.mxu0 0.0
    %2443 = vmatpush1.xpose.msra.mxu0 0.0
    %2444 = vmatprep.subr.mxu0 0.0
    %2445 = vmatpush1.xpose.msra.mxu0 0.0
    %2446 = vmatprep.subr.mxu0 0.0
    %2447 = vmatpush1.xpose.msra.mxu0 0.0
    %2448 = vmatprep.subr.mxu0 0.0
    %2449 = vmatpush1.xpose.msra.mxu0 0.0
    %2450 = vmatprep.subr.mxu0 0.0
    %2451 = vmatpush1.xpose.msra.mxu0 0.0
    %2452 = vmatprep.subr.mxu0 0.0
    %2453 = vmatpush1.xpose.msra.mxu0 0.0
    %2454 = vmatprep.subr.mxu0 0.0
    %2455 = vmatpush1.xpose.msra.mxu0 0.0
    %2456 = vmatprep.subr.mxu0 0.0
    %2457 = vmatpush1.xpose.msra.mxu0 0.0
    %2458 = vmatprep.subr.mxu0 0.0
    %2459 = vmatpush1.xpose.msra.mxu0 0.0
    %2460 = vmatprep.subr.mxu0 0.0
    %2461 = vmatpush1.xpose.msra.mxu0 0.0
    %2462 = vmatprep.subr.mxu0 0.0
    %2463 = vmatpush1.xpose.msra.mxu0 0.0
    %2464 = vmatprep.subr.mxu0 0.0
    %2465 = vmatpush1.xpose.msra.mxu0 0.0
    %2466 = vmatprep.subr.mxu0 0.0
    %2467 = vmatpush1.xpose.msra.mxu0 0.0
    %2468 = vmatprep.subr.mxu0 0.0
    %2469 = vmatpush1.xpose.msra.mxu0 %v2436
    %2470 = vmatprep.subr.mxu0 0.0
    %2471 = vmatpush2.xpose.msra.mxu0 0.0
    %2472 = vmatprep.subr.mxu0 0.0
    %2473 = vmatpush2.xpose.msra.mxu0 0.0
    %2474 = vmatprep.subr.mxu0 0.0
    %2475 = vmatpush2.xpose.msra.mxu0 0.0
    %2476 = vmatprep.subr.mxu0 0.0
    %2477 = vmatpush2.xpose.msra.mxu0 0.0
    %2478 = vmatprep.subr.mxu0 0.0
    %2479 = vmatpush2.xpose.msra.mxu0 0.0
    %2480 = vmatprep.subr.mxu0 0.0
    %2481 = vmatpush2.xpose.msra.mxu0 0.0
    %2482 = vmatprep.subr.mxu0 0.0
    %2483 = vmatpush2.xpose.msra.mxu0 0.0
    %2484 = vmatprep.subr.mxu0 0.0
    %2485 = vmatpush2.xpose.msra.mxu0 0.0
    %2486 = vmatprep.subr.mxu0 0.0
    %2487 = vmatpush2.xpose.msra.mxu0 0.0
    %2488 = vmatprep.subr.mxu0 0.0
    %2489 = vmatpush2.xpose.msra.mxu0 0.0
    %2490 = vmatprep.subr.mxu0 0.0
    %2491 = vmatpush2.xpose.msra.mxu0 0.0
    %2492 = vmatprep.subr.mxu0 0.0
    %2493 = vmatpush2.xpose.msra.mxu0 0.0
    %2494 = vmatprep.subr.mxu0 0.0
    %2495 = vmatpush2.xpose.msra.mxu0 0.0
    %2496 = vmatprep.subr.mxu0 0.0
    %2497 = vmatpush2.xpose.msra.mxu0 0.0
    %2498 = vmatprep.subr.mxu0 0.0
    %2499 = vmatpush2.xpose.msra.mxu0 0.0
    %2500 = vmatprep.subr.mxu0 0.0
    %2501 = vmatpush2.xpose.msra.mxu0 0.0
    %2502 = vmatprep.mubr.f32.mxu0 0.0
    %2503 = vmatmul.mubr.f32.gmra.mxu0 %v2433
    %v2504 = vpop.f32.mrf.mxu0
    %v2505 = vadd.f32 0.0, %v2504
    %v2506 = vpop.f32.mrf.mxu0
    %2507 = vdwg.mxu0
    %v2509 = vsel %vm1975, %v654, 0
    %v2512 = vsel %vm1975, %v1246, 0
    %2514 = vmatprep.subr.mxu0 0.0
    %2515 = vmatpush1.xpose.msra.mxu0 0.0
    %2516 = vmatprep.subr.mxu0 0.0
    %2517 = vmatpush1.xpose.msra.mxu0 0.0
    %2518 = vmatprep.subr.mxu0 0.0
    %2519 = vmatpush1.xpose.msra.mxu0 0.0
    %2520 = vmatprep.subr.mxu0 0.0
    %2521 = vmatpush1.xpose.msra.mxu0 0.0
    %2522 = vmatprep.subr.mxu0 0.0
    %2523 = vmatpush1.xpose.msra.mxu0 0.0
    %2524 = vmatprep.subr.mxu0 0.0
    %2525 = vmatpush1.xpose.msra.mxu0 0.0
    %2526 = vmatprep.subr.mxu0 0.0
    %2527 = vmatpush1.xpose.msra.mxu0 0.0
    %2528 = vmatprep.subr.mxu0 0.0
    %2529 = vmatpush1.xpose.msra.mxu0 0.0
    %2530 = vmatprep.subr.mxu0 0.0
    %2531 = vmatpush1.xpose.msra.mxu0 0.0
    %2532 = vmatprep.subr.mxu0 0.0
    %2533 = vmatpush1.xpose.msra.mxu0 0.0
    %2534 = vmatprep.subr.mxu0 0.0
    %2535 = vmatpush1.xpose.msra.mxu0 0.0
    %2536 = vmatprep.subr.mxu0 0.0
    %2537 = vmatpush1.xpose.msra.mxu0 0.0
    %2538 = vmatprep.subr.mxu0 0.0
    %2539 = vmatpush1.xpose.msra.mxu0 0.0
    %2540 = vmatprep.subr.mxu0 0.0
    %2541 = vmatpush1.xpose.msra.mxu0 0.0
    %2542 = vmatprep.subr.mxu0 0.0
    %2543 = vmatpush1.xpose.msra.mxu0 0.0
    %2544 = vmatprep.subr.mxu0 0.0
    %2545 = vmatpush1.xpose.msra.mxu0 %v2512
    %2546 = vmatprep.subr.mxu0 0.0
    %2547 = vmatpush2.xpose.msra.mxu0 0.0
    %2548 = vmatprep.subr.mxu0 0.0
    %2549 = vmatpush2.xpose.msra.mxu0 0.0
    %2550 = vmatprep.subr.mxu0 0.0
    %2551 = vmatpush2.xpose.msra.mxu0 0.0
    %2552 = vmatprep.subr.mxu0 0.0
    %2553 = vmatpush2.xpose.msra.mxu0 0.0
    %2554 = vmatprep.subr.mxu0 0.0
    %2555 = vmatpush2.xpose.msra.mxu0 0.0
    %2556 = vmatprep.subr.mxu0 0.0
    %2557 = vmatpush2.xpose.msra.mxu0 0.0
    %2558 = vmatprep.subr.mxu0 0.0
    %2559 = vmatpush2.xpose.msra.mxu0 0.0
    %2560 = vmatprep.subr.mxu0 0.0
    %2561 = vmatpush2.xpose.msra.mxu0 0.0
    %2562 = vmatprep.subr.mxu0 0.0
    %2563 = vmatpush2.xpose.msra.mxu0 0.0
    %2564 = vmatprep.subr.mxu0 0.0
    %2565 = vmatpush2.xpose.msra.mxu0 0.0
    %2566 = vmatprep.subr.mxu0 0.0
    %2567 = vmatpush2.xpose.msra.mxu0 0.0
    %2568 = vmatprep.subr.mxu0 0.0
    %2569 = vmatpush2.xpose.msra.mxu0 0.0
    %2570 = vmatprep.subr.mxu0 0.0
    %2571 = vmatpush2.xpose.msra.mxu0 0.0
    %2572 = vmatprep.subr.mxu0 0.0
    %2573 = vmatpush2.xpose.msra.mxu0 0.0
    %2574 = vmatprep.subr.mxu0 0.0
    %2575 = vmatpush2.xpose.msra.mxu0 0.0
    %2576 = vmatprep.subr.mxu0 0.0
    %2577 = vmatpush2.xpose.msra.mxu0 0.0
    %2578 = vmatprep.mubr.f32.mxu0 0.0
    %2579 = vmatmul.mubr.f32.gmra.mxu0 %v2509
    %v2580 = vpop.f32.mrf.mxu0
    %v2581 = vadd.f32 0.0, %v2580
    %v2582 = vpop.f32.mrf.mxu0
    %2583 = vdwg.mxu0
    %v2585 = vsel %vm1975, %v783, 0
    %v2588 = vsel %vm1975, %v1375, 0
    %2590 = vmatprep.subr.mxu0 0.0
    %2591 = vmatpush1.xpose.msra.mxu0 0.0
    %2592 = vmatprep.subr.mxu0 0.0
    %2593 = vmatpush1.xpose.msra.mxu0 0.0
    %2594 = vmatprep.subr.mxu0 0.0
    %2595 = vmatpush1.xpose.msra.mxu0 0.0
    %2596 = vmatprep.subr.mxu0 0.0
    %2597 = vmatpush1.xpose.msra.mxu0 0.0
    %2598 = vmatprep.subr.mxu0 0.0
    %2599 = vmatpush1.xpose.msra.mxu0 0.0
    %2600 = vmatprep.subr.mxu0 0.0
    %2601 = vmatpush1.xpose.msra.mxu0 0.0
    %2602 = vmatprep.subr.mxu0 0.0
    %2603 = vmatpush1.xpose.msra.mxu0 0.0
    %2604 = vmatprep.subr.mxu0 0.0
    %2605 = vmatpush1.xpose.msra.mxu0 0.0
    %2606 = vmatprep.subr.mxu0 0.0
    %2607 = vmatpush1.xpose.msra.mxu0 0.0
    %2608 = vmatprep.subr.mxu0 0.0
    %2609 = vmatpush1.xpose.msra.mxu0 0.0
    %2610 = vmatprep.subr.mxu0 0.0
    %2611 = vmatpush1.xpose.msra.mxu0 0.0
    %2612 = vmatprep.subr.mxu0 0.0
    %2613 = vmatpush1.xpose.msra.mxu0 0.0
    %2614 = vmatprep.subr.mxu0 0.0
    %2615 = vmatpush1.xpose.msra.mxu0 0.0
    %2616 = vmatprep.subr.mxu0 0.0
    %2617 = vmatpush1.xpose.msra.mxu0 0.0
    %2618 = vmatprep.subr.mxu0 0.0
    %2619 = vmatpush1.xpose.msra.mxu0 0.0
    %2620 = vmatprep.subr.mxu0 0.0
    %2621 = vmatpush1.xpose.msra.mxu0 %v2588
    %2622 = vmatprep.subr.mxu0 0.0
    %2623 = vmatpush2.xpose.msra.mxu0 0.0
    %2624 = vmatprep.subr.mxu0 0.0
    %2625 = vmatpush2.xpose.msra.mxu0 0.0
    %2626 = vmatprep.subr.mxu0 0.0
    %2627 = vmatpush2.xpose.msra.mxu0 0.0
    %2628 = vmatprep.subr.mxu0 0.0
    %2629 = vmatpush2.xpose.msra.mxu0 0.0
    %2630 = vmatprep.subr.mxu0 0.0
    %2631 = vmatpush2.xpose.msra.mxu0 0.0
    %2632 = vmatprep.subr.mxu0 0.0
    %2633 = vmatpush2.xpose.msra.mxu0 0.0
    %2634 = vmatprep.subr.mxu0 0.0
    %2635 = vmatpush2.xpose.msra.mxu0 0.0
    %2636 = vmatprep.subr.mxu0 0.0
    %2637 = vmatpush2.xpose.msra.mxu0 0.0
    %2638 = vmatprep.subr.mxu0 0.0
    %2639 = vmatpush2.xpose.msra.mxu0 0.0
    %2640 = vmatprep.subr.mxu0 0.0
    %2641 = vmatpush2.xpose.msra.mxu0 0.0
    %2642 = vmatprep.subr.mxu0 0.0
    %2643 = vmatpush2.xpose.msra.mxu0 0.0
    %2644 = vmatprep.subr.mxu0 0.0
    %2645 = vmatpush2.xpose.msra.mxu0 0.0
    %2646 = vmatprep.subr.mxu0 0.0
    %2647 = vmatpush2.xpose.msra.mxu0 0.0
    %2648 = vmatprep.subr.mxu0 0.0
    %2649 = vmatpush2.xpose.msra.mxu0 0.0
    %2650 = vmatprep.subr.mxu0 0.0
    %2651 = vmatpush2.xpose.msra.mxu0 0.0
    %2652 = vmatprep.subr.mxu0 0.0
    %2653 = vmatpush2.xpose.msra.mxu0 0.0
    %2654 = vmatprep.mubr.f32.mxu0 0.0
    %2655 = vmatmul.mubr.f32.gmra.mxu0 %v2585
    %v2656 = vpop.f32.mrf.mxu0
    %v2657 = vadd.f32 0.0, %v2656
    %v2658 = vpop.f32.mrf.mxu0
    %2659 = vdwg.mxu0
    %v2661 = vsel %vm1975, %v784, 0
    %v2664 = vsel %vm1975, %v1376, 0
    %2666 = vmatprep.subr.mxu0 0.0
    %2667 = vmatpush1.xpose.msra.mxu0 0.0
    %2668 = vmatprep.subr.mxu0 0.0
    %2669 = vmatpush1.xpose.msra.mxu0 0.0
    %2670 = vmatprep.subr.mxu0 0.0
    %2671 = vmatpush1.xpose.msra.mxu0 0.0
    %2672 = vmatprep.subr.mxu0 0.0
    %2673 = vmatpush1.xpose.msra.mxu0 0.0
    %2674 = vmatprep.subr.mxu0 0.0
    %2675 = vmatpush1.xpose.msra.mxu0 0.0
    %2676 = vmatprep.subr.mxu0 0.0
    %2677 = vmatpush1.xpose.msra.mxu0 0.0
    %2678 = vmatprep.subr.mxu0 0.0
    %2679 = vmatpush1.xpose.msra.mxu0 0.0
    %2680 = vmatprep.subr.mxu0 0.0
    %2681 = vmatpush1.xpose.msra.mxu0 0.0
    %2682 = vmatprep.subr.mxu0 0.0
    %2683 = vmatpush1.xpose.msra.mxu0 0.0
    %2684 = vmatprep.subr.mxu0 0.0
    %2685 = vmatpush1.xpose.msra.mxu0 0.0
    %2686 = vmatprep.subr.mxu0 0.0
    %2687 = vmatpush1.xpose.msra.mxu0 0.0
    %2688 = vmatprep.subr.mxu0 0.0
    %2689 = vmatpush1.xpose.msra.mxu0 0.0
    %2690 = vmatprep.subr.mxu0 0.0
    %2691 = vmatpush1.xpose.msra.mxu0 0.0
    %2692 = vmatprep.subr.mxu0 0.0
    %2693 = vmatpush1.xpose.msra.mxu0 0.0
    %2694 = vmatprep.subr.mxu0 0.0
    %2695 = vmatpush1.xpose.msra.mxu0 0.0
    %2696 = vmatprep.subr.mxu0 0.0
    %2697 = vmatpush1.xpose.msra.mxu0 %v2664
    %2698 = vmatprep.subr.mxu0 0.0
    %2699 = vmatpush2.xpose.msra.mxu0 0.0
    %2700 = vmatprep.subr.mxu0 0.0
    %2701 = vmatpush2.xpose.msra.mxu0 0.0
    %2702 = vmatprep.subr.mxu0 0.0
    %2703 = vmatpush2.xpose.msra.mxu0 0.0
    %2704 = vmatprep.subr.mxu0 0.0
    %2705 = vmatpush2.xpose.msra.mxu0 0.0
    %2706 = vmatprep.subr.mxu0 0.0
    %2707 = vmatpush2.xpose.msra.mxu0 0.0
    %2708 = vmatprep.subr.mxu0 0.0
    %2709 = vmatpush2.xpose.msra.mxu0 0.0
    %2710 = vmatprep.subr.mxu0 0.0
    %2711 = vmatpush2.xpose.msra.mxu0 0.0
    %2712 = vmatprep.subr.mxu0 0.0
    %2713 = vmatpush2.xpose.msra.mxu0 0.0
    %2714 = vmatprep.subr.mxu0 0.0
    %2715 = vmatpush2.xpose.msra.mxu0 0.0
    %2716 = vmatprep.subr.mxu0 0.0
    %2717 = vmatpush2.xpose.msra.mxu0 0.0
    %2718 = vmatprep.subr.mxu0 0.0
    %2719 = vmatpush2.xpose.msra.mxu0 0.0
    %2720 = vmatprep.subr.mxu0 0.0
    %2721 = vmatpush2.xpose.msra.mxu0 0.0
    %2722 = vmatprep.subr.mxu0 0.0
    %2723 = vmatpush2.xpose.msra.mxu0 0.0
    %2724 = vmatprep.subr.mxu0 0.0
    %2725 = vmatpush2.xpose.msra.mxu0 0.0
    %2726 = vmatprep.subr.mxu0 0.0
    %2727 = vmatpush2.xpose.msra.mxu0 0.0
    %2728 = vmatprep.subr.mxu0 0.0
    %2729 = vmatpush2.xpose.msra.mxu0 0.0
    %2730 = vmatprep.mubr.f32.mxu0 0.0
    %2731 = vmatmul.mubr.f32.gmra.mxu0 %v2661
    %v2732 = vpop.f32.mrf.mxu0
    %v2733 = vadd.f32 0.0, %v2732
    %v2734 = vpop.f32.mrf.mxu0
    %2735 = vdwg.mxu0
    %v2737 = vsel %vm1975, %v785, 0
    %v2740 = vsel %vm1975, %v1377, 0
    %2742 = vmatprep.subr.mxu0 0.0
    %2743 = vmatpush1.xpose.msra.mxu0 0.0
    %2744 = vmatprep.subr.mxu0 0.0
    %2745 = vmatpush1.xpose.msra.mxu0 0.0
    %2746 = vmatprep.subr.mxu0 0.0
    %2747 = vmatpush1.xpose.msra.mxu0 0.0
    %2748 = vmatprep.subr.mxu0 0.0
    %2749 = vmatpush1.xpose.msra.mxu0 0.0
    %2750 = vmatprep.subr.mxu0 0.0
    %2751 = vmatpush1.xpose.msra.mxu0 0.0
    %2752 = vmatprep.subr.mxu0 0.0
    %2753 = vmatpush1.xpose.msra.mxu0 0.0
    %2754 = vmatprep.subr.mxu0 0.0
    %2755 = vmatpush1.xpose.msra.mxu0 0.0
    %2756 = vmatprep.subr.mxu0 0.0
    %2757 = vmatpush1.xpose.msra.mxu0 0.0
    %2758 = vmatprep.subr.mxu0 0.0
    %2759 = vmatpush1.xpose.msra.mxu0 0.0
    %2760 = vmatprep.subr.mxu0 0.0
    %2761 = vmatpush1.xpose.msra.mxu0 0.0
    %2762 = vmatprep.subr.mxu0 0.0
    %2763 = vmatpush1.xpose.msra.mxu0 0.0
    %2764 = vmatprep.subr.mxu0 0.0
    %2765 = vmatpush1.xpose.msra.mxu0 0.0
    %2766 = vmatprep.subr.mxu0 0.0
    %2767 = vmatpush1.xpose.msra.mxu0 0.0
    %2768 = vmatprep.subr.mxu0 0.0
    %2769 = vmatpush1.xpose.msra.mxu0 0.0
    %2770 = vmatprep.subr.mxu0 0.0
    %2771 = vmatpush1.xpose.msra.mxu0 0.0
    %2772 = vmatprep.subr.mxu0 0.0
    %2773 = vmatpush1.xpose.msra.mxu0 %v2740
    %2774 = vmatprep.subr.mxu0 0.0
    %2775 = vmatpush2.xpose.msra.mxu0 0.0
    %2776 = vmatprep.subr.mxu0 0.0
    %2777 = vmatpush2.xpose.msra.mxu0 0.0
    %2778 = vmatprep.subr.mxu0 0.0
    %2779 = vmatpush2.xpose.msra.mxu0 0.0
    %2780 = vmatprep.subr.mxu0 0.0
    %2781 = vmatpush2.xpose.msra.mxu0 0.0
    %2782 = vmatprep.subr.mxu0 0.0
    %2783 = vmatpush2.xpose.msra.mxu0 0.0
    %2784 = vmatprep.subr.mxu0 0.0
    %2785 = vmatpush2.xpose.msra.mxu0 0.0
    %2786 = vmatprep.subr.mxu0 0.0
    %2787 = vmatpush2.xpose.msra.mxu0 0.0
    %2788 = vmatprep.subr.mxu0 0.0
    %2789 = vmatpush2.xpose.msra.mxu0 0.0
    %2790 = vmatprep.subr.mxu0 0.0
    %2791 = vmatpush2.xpose.msra.mxu0 0.0
    %2792 = vmatprep.subr.mxu0 0.0
    %2793 = vmatpush2.xpose.msra.mxu0 0.0
    %2794 = vmatprep.subr.mxu0 0.0
    %2795 = vmatpush2.xpose.msra.mxu0 0.0
    %2796 = vmatprep.subr.mxu0 0.0
    %2797 = vmatpush2.xpose.msra.mxu0 0.0
    %2798 = vmatprep.subr.mxu0 0.0
    %2799 = vmatpush2.xpose.msra.mxu0 0.0
    %2800 = vmatprep.subr.mxu0 0.0
    %2801 = vmatpush2.xpose.msra.mxu0 0.0
    %2802 = vmatprep.subr.mxu0 0.0
    %2803 = vmatpush2.xpose.msra.mxu0 0.0
    %2804 = vmatprep.subr.mxu0 0.0
    %2805 = vmatpush2.xpose.msra.mxu0 0.0
    %2806 = vmatprep.mubr.f32.mxu0 0.0
    %2807 = vmatmul.mubr.f32.gmra.mxu0 %v2737
    %v2808 = vpop.f32.mrf.mxu0
    %v2809 = vadd.f32 0.0, %v2808
    %v2810 = vpop.f32.mrf.mxu0
    %2811 = vdwg.mxu0
    %v2813 = vsel %vm1975, %v786, 0
    %v2816 = vsel %vm1975, %v1378, 0
    %2818 = vmatprep.subr.mxu0 0.0
    %2819 = vmatpush1.xpose.msra.mxu0 0.0
    %2820 = vmatprep.subr.mxu0 0.0
    %2821 = vmatpush1.xpose.msra.mxu0 0.0
    %2822 = vmatprep.subr.mxu0 0.0
    %2823 = vmatpush1.xpose.msra.mxu0 0.0
    %2824 = vmatprep.subr.mxu0 0.0
    %2825 = vmatpush1.xpose.msra.mxu0 0.0
    %2826 = vmatprep.subr.mxu0 0.0
    %2827 = vmatpush1.xpose.msra.mxu0 0.0
    %2828 = vmatprep.subr.mxu0 0.0
    %2829 = vmatpush1.xpose.msra.mxu0 0.0
    %2830 = vmatprep.subr.mxu0 0.0
    %2831 = vmatpush1.xpose.msra.mxu0 0.0
    %2832 = vmatprep.subr.mxu0 0.0
    %2833 = vmatpush1.xpose.msra.mxu0 0.0
    %2834 = vmatprep.subr.mxu0 0.0
    %2835 = vmatpush1.xpose.msra.mxu0 0.0
    %2836 = vmatprep.subr.mxu0 0.0
    %2837 = vmatpush1.xpose.msra.mxu0 0.0
    %2838 = vmatprep.subr.mxu0 0.0
    %2839 = vmatpush1.xpose.msra.mxu0 0.0
    %2840 = vmatprep.subr.mxu0 0.0
    %2841 = vmatpush1.xpose.msra.mxu0 0.0
    %2842 = vmatprep.subr.mxu0 0.0
    %2843 = vmatpush1.xpose.msra.mxu0 0.0
    %2844 = vmatprep.subr.mxu0 0.0
    %2845 = vmatpush1.xpose.msra.mxu0 0.0
    %2846 = vmatprep.subr.mxu0 0.0
    %2847 = vmatpush1.xpose.msra.mxu0 0.0
    %2848 = vmatprep.subr.mxu0 0.0
    %2849 = vmatpush1.xpose.msra.mxu0 %v2816
    %2850 = vmatprep.subr.mxu0 0.0
    %2851 = vmatpush2.xpose.msra.mxu0 0.0
    %2852 = vmatprep.subr.mxu0 0.0
    %2853 = vmatpush2.xpose.msra.mxu0 0.0
    %2854 = vmatprep.subr.mxu0 0.0
    %2855 = vmatpush2.xpose.msra.mxu0 0.0
    %2856 = vmatprep.subr.mxu0 0.0
    %2857 = vmatpush2.xpose.msra.mxu0 0.0
    %2858 = vmatprep.subr.mxu0 0.0
    %2859 = vmatpush2.xpose.msra.mxu0 0.0
    %2860 = vmatprep.subr.mxu0 0.0
    %2861 = vmatpush2.xpose.msra.mxu0 0.0
    %2862 = vmatprep.subr.mxu0 0.0
    %2863 = vmatpush2.xpose.msra.mxu0 0.0
    %2864 = vmatprep.subr.mxu0 0.0
    %2865 = vmatpush2.xpose.msra.mxu0 0.0
    %2866 = vmatprep.subr.mxu0 0.0
    %2867 = vmatpush2.xpose.msra.mxu0 0.0
    %2868 = vmatprep.subr.mxu0 0.0
    %2869 = vmatpush2.xpose.msra.mxu0 0.0
    %2870 = vmatprep.subr.mxu0 0.0
    %2871 = vmatpush2.xpose.msra.mxu0 0.0
    %2872 = vmatprep.subr.mxu0 0.0
    %2873 = vmatpush2.xpose.msra.mxu0 0.0
    %2874 = vmatprep.subr.mxu0 0.0
    %2875 = vmatpush2.xpose.msra.mxu0 0.0
    %2876 = vmatprep.subr.mxu0 0.0
    %2877 = vmatpush2.xpose.msra.mxu0 0.0
    %2878 = vmatprep.subr.mxu0 0.0
    %2879 = vmatpush2.xpose.msra.mxu0 0.0
    %2880 = vmatprep.subr.mxu0 0.0
    %2881 = vmatpush2.xpose.msra.mxu0 0.0
    %2882 = vmatprep.mubr.f32.mxu0 0.0
    %2883 = vmatmul.mubr.f32.gmra.mxu0 %v2813
    %v2884 = vpop.f32.mrf.mxu0
    %v2885 = vadd.f32 0.0, %v2884
    %v2886 = vpop.f32.mrf.mxu0
    %2887 = vdwg.mxu0
    %v2889 = vsel %vm1975, %v787, 0
    %v2892 = vsel %vm1975, %v1379, 0
    %2894 = vmatprep.subr.mxu0 0.0
    %2895 = vmatpush1.xpose.msra.mxu0 0.0
    %2896 = vmatprep.subr.mxu0 0.0
    %2897 = vmatpush1.xpose.msra.mxu0 0.0
    %2898 = vmatprep.subr.mxu0 0.0
    %2899 = vmatpush1.xpose.msra.mxu0 0.0
    %2900 = vmatprep.subr.mxu0 0.0
    %2901 = vmatpush1.xpose.msra.mxu0 0.0
    %2902 = vmatprep.subr.mxu0 0.0
    %2903 = vmatpush1.xpose.msra.mxu0 0.0
    %2904 = vmatprep.subr.mxu0 0.0
    %2905 = vmatpush1.xpose.msra.mxu0 0.0
    %2906 = vmatprep.subr.mxu0 0.0
    %2907 = vmatpush1.xpose.msra.mxu0 0.0
    %2908 = vmatprep.subr.mxu0 0.0
    %2909 = vmatpush1.xpose.msra.mxu0 0.0
    %2910 = vmatprep.subr.mxu0 0.0
    %2911 = vmatpush1.xpose.msra.mxu0 0.0
    %2912 = vmatprep.subr.mxu0 0.0
    %2913 = vmatpush1.xpose.msra.mxu0 0.0
    %2914 = vmatprep.subr.mxu0 0.0
    %2915 = vmatpush1.xpose.msra.mxu0 0.0
    %2916 = vmatprep.subr.mxu0 0.0
    %2917 = vmatpush1.xpose.msra.mxu0 0.0
    %2918 = vmatprep.subr.mxu0 0.0
    %2919 = vmatpush1.xpose.msra.mxu0 0.0
    %2920 = vmatprep.subr.mxu0 0.0
    %2921 = vmatpush1.xpose.msra.mxu0 0.0
    %2922 = vmatprep.subr.mxu0 0.0
    %2923 = vmatpush1.xpose.msra.mxu0 0.0
    %2924 = vmatprep.subr.mxu0 0.0
    %2925 = vmatpush1.xpose.msra.mxu0 %v2892
    %2926 = vmatprep.subr.mxu0 0.0
    %2927 = vmatpush2.xpose.msra.mxu0 0.0
    %2928 = vmatprep.subr.mxu0 0.0
    %2929 = vmatpush2.xpose.msra.mxu0 0.0
    %2930 = vmatprep.subr.mxu0 0.0
    %2931 = vmatpush2.xpose.msra.mxu0 0.0
    %2932 = vmatprep.subr.mxu0 0.0
    %2933 = vmatpush2.xpose.msra.mxu0 0.0
    %2934 = vmatprep.subr.mxu0 0.0
    %2935 = vmatpush2.xpose.msra.mxu0 0.0
    %2936 = vmatprep.subr.mxu0 0.0
    %2937 = vmatpush2.xpose.msra.mxu0 0.0
    %2938 = vmatprep.subr.mxu0 0.0
    %2939 = vmatpush2.xpose.msra.mxu0 0.0
    %2940 = vmatprep.subr.mxu0 0.0
    %2941 = vmatpush2.xpose.msra.mxu0 0.0
    %2942 = vmatprep.subr.mxu0 0.0
    %2943 = vmatpush2.xpose.msra.mxu0 0.0
    %2944 = vmatprep.subr.mxu0 0.0
    %2945 = vmatpush2.xpose.msra.mxu0 0.0
    %2946 = vmatprep.subr.mxu0 0.0
    %2947 = vmatpush2.xpose.msra.mxu0 0.0
    %2948 = vmatprep.subr.mxu0 0.0
    %2949 = vmatpush2.xpose.msra.mxu0 0.0
    %2950 = vmatprep.subr.mxu0 0.0
    %2951 = vmatpush2.xpose.msra.mxu0 0.0
    %2952 = vmatprep.subr.mxu0 0.0
    %2953 = vmatpush2.xpose.msra.mxu0 0.0
    %2954 = vmatprep.subr.mxu0 0.0
    %2955 = vmatpush2.xpose.msra.mxu0 0.0
    %2956 = vmatprep.subr.mxu0 0.0
    %2957 = vmatpush2.xpose.msra.mxu0 0.0
    %2958 = vmatprep.mubr.f32.mxu0 0.0
    %2959 = vmatmul.mubr.f32.gmra.mxu0 %v2889
    %v2960 = vpop.f32.mrf.mxu0
    %v2961 = vadd.f32 0.0, %v2960
    %v2962 = vpop.f32.mrf.mxu0
    %2963 = vdwg.mxu0
    %v2965 = vsel %vm1975, %v788, 0
    %v2968 = vsel %vm1975, %v1380, 0
    %2970 = vmatprep.subr.mxu0 0.0
    %2971 = vmatpush1.xpose.msra.mxu0 0.0
    %2972 = vmatprep.subr.mxu0 0.0
    %2973 = vmatpush1.xpose.msra.mxu0 0.0
    %2974 = vmatprep.subr.mxu0 0.0
    %2975 = vmatpush1.xpose.msra.mxu0 0.0
    %2976 = vmatprep.subr.mxu0 0.0
    %2977 = vmatpush1.xpose.msra.mxu0 0.0
    %2978 = vmatprep.subr.mxu0 0.0
    %2979 = vmatpush1.xpose.msra.mxu0 0.0
    %2980 = vmatprep.subr.mxu0 0.0
    %2981 = vmatpush1.xpose.msra.mxu0 0.0
    %2982 = vmatprep.subr.mxu0 0.0
    %2983 = vmatpush1.xpose.msra.mxu0 0.0
    %2984 = vmatprep.subr.mxu0 0.0
    %2985 = vmatpush1.xpose.msra.mxu0 0.0
    %2986 = vmatprep.subr.mxu0 0.0
    %2987 = vmatpush1.xpose.msra.mxu0 0.0
    %2988 = vmatprep.subr.mxu0 0.0
    %2989 = vmatpush1.xpose.msra.mxu0 0.0
    %2990 = vmatprep.subr.mxu0 0.0
    %2991 = vmatpush1.xpose.msra.mxu0 0.0
    %2992 = vmatprep.subr.mxu0 0.0
    %2993 = vmatpush1.xpose.msra.mxu0 0.0
    %2994 = vmatprep.subr.mxu0 0.0
    %2995 = vmatpush1.xpose.msra.mxu0 0.0
    %2996 = vmatprep.subr.mxu0 0.0
    %2997 = vmatpush1.xpose.msra.mxu0 0.0
    %2998 = vmatprep.subr.mxu0 0.0
    %2999 = vmatpush1.xpose.msra.mxu0 0.0
    %3000 = vmatprep.subr.mxu0 0.0
    %3001 = vmatpush1.xpose.msra.mxu0 %v2968
    %3002 = vmatprep.subr.mxu0 0.0
    %3003 = vmatpush2.xpose.msra.mxu0 0.0
    %3004 = vmatprep.subr.mxu0 0.0
    %3005 = vmatpush2.xpose.msra.mxu0 0.0
    %3006 = vmatprep.subr.mxu0 0.0
    %3007 = vmatpush2.xpose.msra.mxu0 0.0
    %3008 = vmatprep.subr.mxu0 0.0
    %3009 = vmatpush2.xpose.msra.mxu0 0.0
    %3010 = vmatprep.subr.mxu0 0.0
    %3011 = vmatpush2.xpose.msra.mxu0 0.0
    %3012 = vmatprep.subr.mxu0 0.0
    %3013 = vmatpush2.xpose.msra.mxu0 0.0
    %3014 = vmatprep.subr.mxu0 0.0
    %3015 = vmatpush2.xpose.msra.mxu0 0.0
    %3016 = vmatprep.subr.mxu0 0.0
    %3017 = vmatpush2.xpose.msra.mxu0 0.0
    %3018 = vmatprep.subr.mxu0 0.0
    %3019 = vmatpush2.xpose.msra.mxu0 0.0
    %3020 = vmatprep.subr.mxu0 0.0
    %3021 = vmatpush2.xpose.msra.mxu0 0.0
    %3022 = vmatprep.subr.mxu0 0.0
    %3023 = vmatpush2.xpose.msra.mxu0 0.0
    %3024 = vmatprep.subr.mxu0 0.0
    %3025 = vmatpush2.xpose.msra.mxu0 0.0
    %3026 = vmatprep.subr.mxu0 0.0
    %3027 = vmatpush2.xpose.msra.mxu0 0.0
    %3028 = vmatprep.subr.mxu0 0.0
    %3029 = vmatpush2.xpose.msra.mxu0 0.0
    %3030 = vmatprep.subr.mxu0 0.0
    %3031 = vmatpush2.xpose.msra.mxu0 0.0
    %3032 = vmatprep.subr.mxu0 0.0
    %3033 = vmatpush2.xpose.msra.mxu0 0.0
    %3034 = vmatprep.mubr.f32.mxu0 0.0
    %3035 = vmatmul.mubr.f32.gmra.mxu0 %v2965
    %v3036 = vpop.f32.mrf.mxu0
    %v3037 = vadd.f32 0.0, %v3036
    %v3038 = vpop.f32.mrf.mxu0
    %3039 = vdwg.mxu0
    %v3041 = vsel %vm1975, %v789, 0
    %v3044 = vsel %vm1975, %v1381, 0
    %3046 = vmatprep.subr.mxu0 0.0
    %3047 = vmatpush1.xpose.msra.mxu0 0.0
    %3048 = vmatprep.subr.mxu0 0.0
    %3049 = vmatpush1.xpose.msra.mxu0 0.0
    %3050 = vmatprep.subr.mxu0 0.0
    %3051 = vmatpush1.xpose.msra.mxu0 0.0
    %3052 = vmatprep.subr.mxu0 0.0
    %3053 = vmatpush1.xpose.msra.mxu0 0.0
    %3054 = vmatprep.subr.mxu0 0.0
    %3055 = vmatpush1.xpose.msra.mxu0 0.0
    %3056 = vmatprep.subr.mxu0 0.0
    %3057 = vmatpush1.xpose.msra.mxu0 0.0
    %3058 = vmatprep.subr.mxu0 0.0
    %3059 = vmatpush1.xpose.msra.mxu0 0.0
    %3060 = vmatprep.subr.mxu0 0.0
    %3061 = vmatpush1.xpose.msra.mxu0 0.0
    %3062 = vmatprep.subr.mxu0 0.0
    %3063 = vmatpush1.xpose.msra.mxu0 0.0
    %3064 = vmatprep.subr.mxu0 0.0
    %3065 = vmatpush1.xpose.msra.mxu0 0.0
    %3066 = vmatprep.subr.mxu0 0.0
    %3067 = vmatpush1.xpose.msra.mxu0 0.0
    %3068 = vmatprep.subr.mxu0 0.0
    %3069 = vmatpush1.xpose.msra.mxu0 0.0
    %3070 = vmatprep.subr.mxu0 0.0
    %3071 = vmatpush1.xpose.msra.mxu0 0.0
    %3072 = vmatprep.subr.mxu0 0.0
    %3073 = vmatpush1.xpose.msra.mxu0 0.0
    %3074 = vmatprep.subr.mxu0 0.0
    %3075 = vmatpush1.xpose.msra.mxu0 0.0
    %3076 = vmatprep.subr.mxu0 0.0
    %3077 = vmatpush1.xpose.msra.mxu0 %v3044
    %3078 = vmatprep.subr.mxu0 0.0
    %3079 = vmatpush2.xpose.msra.mxu0 0.0
    %3080 = vmatprep.subr.mxu0 0.0
    %3081 = vmatpush2.xpose.msra.mxu0 0.0
    %3082 = vmatprep.subr.mxu0 0.0
    %3083 = vmatpush2.xpose.msra.mxu0 0.0
    %3084 = vmatprep.subr.mxu0 0.0
    %3085 = vmatpush2.xpose.msra.mxu0 0.0
    %3086 = vmatprep.subr.mxu0 0.0
    %3087 = vmatpush2.xpose.msra.mxu0 0.0
    %3088 = vmatprep.subr.mxu0 0.0
    %3089 = vmatpush2.xpose.msra.mxu0 0.0
    %3090 = vmatprep.subr.mxu0 0.0
    %3091 = vmatpush2.xpose.msra.mxu0 0.0
    %3092 = vmatprep.subr.mxu0 0.0
    %3093 = vmatpush2.xpose.msra.mxu0 0.0
    %3094 = vmatprep.subr.mxu0 0.0
    %3095 = vmatpush2.xpose.msra.mxu0 0.0
    %3096 = vmatprep.subr.mxu0 0.0
    %3097 = vmatpush2.xpose.msra.mxu0 0.0
    %3098 = vmatprep.subr.mxu0 0.0
    %3099 = vmatpush2.xpose.msra.mxu0 0.0
    %3100 = vmatprep.subr.mxu0 0.0
    %3101 = vmatpush2.xpose.msra.mxu0 0.0
    %3102 = vmatprep.subr.mxu0 0.0
    %3103 = vmatpush2.xpose.msra.mxu0 0.0
    %3104 = vmatprep.subr.mxu0 0.0
    %3105 = vmatpush2.xpose.msra.mxu0 0.0
    %3106 = vmatprep.subr.mxu0 0.0
    %3107 = vmatpush2.xpose.msra.mxu0 0.0
    %3108 = vmatprep.subr.mxu0 0.0
    %3109 = vmatpush2.xpose.msra.mxu0 0.0
    %3110 = vmatprep.mubr.f32.mxu0 0.0
    %3111 = vmatmul.mubr.f32.gmra.mxu0 %v3041
    %v3112 = vpop.f32.mrf.mxu0
    %v3113 = vadd.f32 0.0, %v3112
    %v3114 = vpop.f32.mrf.mxu0
    %3115 = vdwg.mxu0
    %v3117 = vsel %vm1975, %v790, 0
    %v3120 = vsel %vm1975, %v1382, 0
    %3122 = vmatprep.subr.mxu0 0.0
    %3123 = vmatpush1.xpose.msra.mxu0 0.0
    %3124 = vmatprep.subr.mxu0 0.0
    %3125 = vmatpush1.xpose.msra.mxu0 0.0
    %3126 = vmatprep.subr.mxu0 0.0
    %3127 = vmatpush1.xpose.msra.mxu0 0.0
    %3128 = vmatprep.subr.mxu0 0.0
    %3129 = vmatpush1.xpose.msra.mxu0 0.0
    %3130 = vmatprep.subr.mxu0 0.0
    %3131 = vmatpush1.xpose.msra.mxu0 0.0
    %3132 = vmatprep.subr.mxu0 0.0
    %3133 = vmatpush1.xpose.msra.mxu0 0.0
    %3134 = vmatprep.subr.mxu0 0.0
    %3135 = vmatpush1.xpose.msra.mxu0 0.0
    %3136 = vmatprep.subr.mxu0 0.0
    %3137 = vmatpush1.xpose.msra.mxu0 0.0
    %3138 = vmatprep.subr.mxu0 0.0
    %3139 = vmatpush1.xpose.msra.mxu0 0.0
    %3140 = vmatprep.subr.mxu0 0.0
    %3141 = vmatpush1.xpose.msra.mxu0 0.0
    %3142 = vmatprep.subr.mxu0 0.0
    %3143 = vmatpush1.xpose.msra.mxu0 0.0
    %3144 = vmatprep.subr.mxu0 0.0
    %3145 = vmatpush1.xpose.msra.mxu0 0.0
    %3146 = vmatprep.subr.mxu0 0.0
    %3147 = vmatpush1.xpose.msra.mxu0 0.0
    %3148 = vmatprep.subr.mxu0 0.0
    %3149 = vmatpush1.xpose.msra.mxu0 0.0
    %3150 = vmatprep.subr.mxu0 0.0
    %3151 = vmatpush1.xpose.msra.mxu0 0.0
    %3152 = vmatprep.subr.mxu0 0.0
    %3153 = vmatpush1.xpose.msra.mxu0 %v3120
    %3154 = vmatprep.subr.mxu0 0.0
    %3155 = vmatpush2.xpose.msra.mxu0 0.0
    %3156 = vmatprep.subr.mxu0 0.0
    %3157 = vmatpush2.xpose.msra.mxu0 0.0
    %3158 = vmatprep.subr.mxu0 0.0
    %3159 = vmatpush2.xpose.msra.mxu0 0.0
    %3160 = vmatprep.subr.mxu0 0.0
    %3161 = vmatpush2.xpose.msra.mxu0 0.0
    %3162 = vmatprep.subr.mxu0 0.0
    %3163 = vmatpush2.xpose.msra.mxu0 0.0
    %3164 = vmatprep.subr.mxu0 0.0
    %3165 = vmatpush2.xpose.msra.mxu0 0.0
    %3166 = vmatprep.subr.mxu0 0.0
    %3167 = vmatpush2.xpose.msra.mxu0 0.0
    %3168 = vmatprep.subr.mxu0 0.0
    %3169 = vmatpush2.xpose.msra.mxu0 0.0
    %3170 = vmatprep.subr.mxu0 0.0
    %3171 = vmatpush2.xpose.msra.mxu0 0.0
    %3172 = vmatprep.subr.mxu0 0.0
    %3173 = vmatpush2.xpose.msra.mxu0 0.0
    %3174 = vmatprep.subr.mxu0 0.0
    %3175 = vmatpush2.xpose.msra.mxu0 0.0
    %3176 = vmatprep.subr.mxu0 0.0
    %3177 = vmatpush2.xpose.msra.mxu0 0.0
    %3178 = vmatprep.subr.mxu0 0.0
    %3179 = vmatpush2.xpose.msra.mxu0 0.0
    %3180 = vmatprep.subr.mxu0 0.0
    %3181 = vmatpush2.xpose.msra.mxu0 0.0
    %3182 = vmatprep.subr.mxu0 0.0
    %3183 = vmatpush2.xpose.msra.mxu0 0.0
    %3184 = vmatprep.subr.mxu0 0.0
    %3185 = vmatpush2.xpose.msra.mxu0 0.0
    %3186 = vmatprep.mubr.f32.mxu0 0.0
    %3187 = vmatmul.mubr.f32.gmra.mxu0 %v3117
    %v3188 = vpop.f32.mrf.mxu0
    %v3189 = vadd.f32 0.0, %v3188
    %v3190 = vpop.f32.mrf.mxu0
    %3191 = vdwg.mxu0
    %vm3192 = vcmask 64512
    %v3193 = vsel %vm3192, %v2049, -inf
    %3194 = vmax.xlane.f32.xlu0 %v3193
    %v3195 = vpop.xlane.xlu0 %3194
    %v3196 = vsel %vm3192, %v2125, -inf
    %3197 = vmax.xlane.f32.xlu0 %v3196
    %v3198 = vpop.xlane.xlu0 %3197
    %v3199 = vsel %vm3192, %v2201, -inf
    %3200 = vmax.xlane.f32.xlu0 %v3199
    %v3201 = vpop.xlane.xlu0 %3200
    %v3202 = vsel %vm3192, %v2277, -inf
    %3203 = vmax.xlane.f32.xlu0 %v3202
    %v3204 = vpop.xlane.xlu0 %3203
    %v3205 = vsel %vm3192, %v2353, -inf
    %3206 = vmax.xlane.f32.xlu0 %v3205
    %v3207 = vpop.xlane.xlu0 %3206
    %v3208 = vsel %vm3192, %v2429, -inf
    %3209 = vmax.xlane.f32.xlu0 %v3208
    %v3210 = vpop.xlane.xlu0 %3209
    %v3211 = vsel %vm3192, %v2505, -inf
    %3212 = vmax.xlane.f32.xlu0 %v3211
    %v3213 = vpop.xlane.xlu0 %3212
    %v3214 = vsel %vm3192, %v2581, -inf
    %3215 = vmax.xlane.f32.xlu0 %v3214
    %v3216 = vpop.xlane.xlu0 %3215
    %v3217 = vsel %vm3192, %v2657, -inf
    %3218 = vmax.xlane.f32.xlu0 %v3217
    %v3219 = vpop.xlane.xlu0 %3218
    %v3220 = vsel %vm3192, %v2733, -inf
    %3221 = vmax.xlane.f32.xlu0 %v3220
    %v3222 = vpop.xlane.xlu0 %3221
    %v3223 = vsel %vm3192, %v2809, -inf
    %3224 = vmax.xlane.f32.xlu0 %v3223
    %v3225 = vpop.xlane.xlu0 %3224
    %v3226 = vsel %vm3192, %v2885, -inf
    %3227 = vmax.xlane.f32.xlu0 %v3226
    %v3228 = vpop.xlane.xlu0 %3227
    %v3229 = vsel %vm3192, %v2961, -inf
    %3230 = vmax.xlane.f32.xlu0 %v3229
    %v3231 = vpop.xlane.xlu0 %3230
    %v3232 = vsel %vm3192, %v3037, -inf
    %3233 = vmax.xlane.f32.xlu0 %v3232
    %v3234 = vpop.xlane.xlu0 %3233
    %v3235 = vsel %vm3192, %v3113, -inf
    %3236 = vmax.xlane.f32.xlu0 %v3235
    %v3237 = vpop.xlane.xlu0 %3236
    %v3238 = vsel %vm3192, %v3189, -inf
    %3239 = vmax.xlane.f32.xlu0 %v3238
    %v3240 = vpop.xlane.xlu0 %3239
    %v3241 = vsub.f32 %v2049, %v3195
    %v3242 = vsub.f32 %v2125, %v3198
    %v3243 = vsub.f32 %v2201, %v3201
    %v3244 = vsub.f32 %v2277, %v3204
    %v3245 = vsub.f32 %v2353, %v3207
    %v3246 = vsub.f32 %v2429, %v3210
    %v3247 = vsub.f32 %v2505, %v3213
    %v3248 = vsub.f32 %v2581, %v3216
    %v3249 = vsub.f32 %v2657, %v3219
    %v3250 = vsub.f32 %v2733, %v3222
    %v3251 = vsub.f32 %v2809, %v3225
    %v3252 = vsub.f32 %v2885, %v3228
    %v3253 = vsub.f32 %v2961, %v3231
    %v3254 = vsub.f32 %v3037, %v3234
    %v3255 = vsub.f32 %v3113, %v3237
    %v3256 = vsub.f32 %v3189, %v3240
    %v3257 = vmul.f32 %v3241, 1.442695
    %v3258 = vpow.pop %v3257
    %v3259 = vmul.f32 %v3242, 1.442695
    %v3260 = vpow.pop %v3259
    %v3261 = vmul.f32 %v3243, 1.442695
    %v3262 = vpow.pop %v3261
    %v3263 = vmul.f32 %v3244, 1.442695
    %v3264 = vpow.pop %v3263
    %v3265 = vmul.f32 %v3245, 1.442695
    %v3266 = vpow.pop %v3265
    %v3267 = vmul.f32 %v3246, 1.442695
    %v3268 = vpow.pop %v3267
    %v3269 = vmul.f32 %v3247, 1.442695
    %v3270 = vpow.pop %v3269
    %v3271 = vmul.f32 %v3248, 1.442695
    %v3272 = vpow.pop %v3271
    %v3273 = vmul.f32 %v3249, 1.442695
    %v3274 = vpow.pop %v3273
    %v3275 = vmul.f32 %v3250, 1.442695
    %v3276 = vpow.pop %v3275
    %v3277 = vmul.f32 %v3251, 1.442695
    %v3278 = vpow.pop %v3277
    %v3279 = vmul.f32 %v3252, 1.442695
    %v3280 = vpow.pop %v3279
    %v3281 = vmul.f32 %v3253, 1.442695
    %v3282 = vpow.pop %v3281
    %v3283 = vmul.f32 %v3254, 1.442695
    %v3284 = vpow.pop %v3283
    %v3285 = vmul.f32 %v3255, 1.442695
    %v3286 = vpow.pop %v3285
    %v3287 = vmul.f32 %v3256, 1.442695
    %v3288 = vpow.pop %v3287
    %v3289 = vsel %vm3192, %v3258, 0.0
    %3290 = vadd.xlane.f32.xlu0 %v3289
    %v3291 = vpop.xlane.xlu0 %3290
    %v3292 = vsel %vm3192, %v3260, 0.0
    %3293 = vadd.xlane.f32.xlu0 %v3292
    %v3294 = vpop.xlane.xlu0 %3293
    %v3295 = vsel %vm3192, %v3262, 0.0
    %3296 = vadd.xlane.f32.xlu0 %v3295
    %v3297 = vpop.xlane.xlu0 %3296
    %v3298 = vsel %vm3192, %v3264, 0.0
    %3299 = vadd.xlane.f32.xlu0 %v3298
    %v3300 = vpop.xlane.xlu0 %3299
    %v3301 = vsel %vm3192, %v3266, 0.0
    %3302 = vadd.xlane.f32.xlu0 %v3301
    %v3303 = vpop.xlane.xlu0 %3302
    %v3304 = vsel %vm3192, %v3268, 0.0
    %3305 = vadd.xlane.f32.xlu0 %v3304
    %v3306 = vpop.xlane.xlu0 %3305
    %v3307 = vsel %vm3192, %v3270, 0.0
    %3308 = vadd.xlane.f32.xlu0 %v3307
    %v3309 = vpop.xlane.xlu0 %3308
    %v3310 = vsel %vm3192, %v3272, 0.0
    %3311 = vadd.xlane.f32.xlu0 %v3310
    %v3312 = vpop.xlane.xlu0 %3311
    %v3313 = vsel %vm3192, %v3274, 0.0
    %3314 = vadd.xlane.f32.xlu0 %v3313
    %v3315 = vpop.xlane.xlu0 %3314
    %v3316 = vsel %vm3192, %v3276, 0.0
    %3317 = vadd.xlane.f32.xlu0 %v3316
    %v3318 = vpop.xlane.xlu0 %3317
    %v3319 = vsel %vm3192, %v3278, 0.0
    %3320 = vadd.xlane.f32.xlu0 %v3319
    %v3321 = vpop.xlane.xlu0 %3320
    %v3322 = vsel %vm3192, %v3280, 0.0
    %3323 = vadd.xlane.f32.xlu0 %v3322
    %v3324 = vpop.xlane.xlu0 %3323
    %v3325 = vsel %vm3192, %v3282, 0.0
    %3326 = vadd.xlane.f32.xlu0 %v3325
    %v3327 = vpop.xlane.xlu0 %3326
    %v3328 = vsel %vm3192, %v3284, 0.0
    %3329 = vadd.xlane.f32.xlu0 %v3328
    %v3330 = vpop.xlane.xlu0 %3329
    %v3331 = vsel %vm3192, %v3286, 0.0
    %3332 = vadd.xlane.f32.xlu0 %v3331
    %v3333 = vpop.xlane.xlu0 %3332
    %v3334 = vsel %vm3192, %v3288, 0.0
    %3335 = vadd.xlane.f32.xlu0 %v3334
    %v3336 = vpop.xlane.xlu0 %3335
    %v3337 = vrcp.pop %v3291
    %v3338 = vrcp.pop %v3294
    %v3339 = vrcp.pop %v3297
    %v3340 = vrcp.pop %v3300
    %v3341 = vrcp.pop %v3303
    %v3342 = vrcp.pop %v3306
    %v3343 = vrcp.pop %v3309
    %v3344 = vrcp.pop %v3312
    %v3345 = vrcp.pop %v3315
    %v3346 = vrcp.pop %v3318
    %v3347 = vrcp.pop %v3321
    %v3348 = vrcp.pop %v3324
    %v3349 = vrcp.pop %v3327
    %v3350 = vrcp.pop %v3330
    %v3351 = vrcp.pop %v3333
    %v3352 = vrcp.pop %v3336
    %v3353 = vmul.f32 %v3258, %v3337
    %v3354 = vmul.f32 %v3260, %v3338
    %v3355 = vmul.f32 %v3262, %v3339
    %v3356 = vmul.f32 %v3264, %v3340
    %v3357 = vmul.f32 %v3266, %v3341
    %v3358 = vmul.f32 %v3268, %v3342
    %v3359 = vmul.f32 %v3270, %v3343
    %v3360 = vmul.f32 %v3272, %v3344
    %v3361 = vmul.f32 %v3274, %v3345
    %v3362 = vmul.f32 %v3276, %v3346
    %v3363 = vmul.f32 %v3278, %v3347
    %v3364 = vmul.f32 %v3280, %v3348
    %v3365 = vmul.f32 %v3282, %v3349
    %v3366 = vmul.f32 %v3284, %v3350
    %v3367 = vmul.f32 %v3286, %v3351
    %v3368 = vmul.f32 %v3288, %v3352
    %v3370 = vsel %vm3192, %v3353, 0
    %3372 = vmatprep.subr.mxu0 0.0
    %3373 = vmatpush1.msra.mxu0 0.0
    %3374 = vmatprep.subr.mxu0 0.0
    %3375 = vmatpush1.msra.mxu0 0.0
    %3376 = vmatprep.subr.mxu0 0.0
    %3377 = vmatpush1.msra.mxu0 0.0
    %3378 = vmatprep.subr.mxu0 0.0
    %3379 = vmatpush1.msra.mxu0 0.0
    %3380 = vmatprep.subr.mxu0 0.0
    %3381 = vmatpush1.msra.mxu0 0.0
    %3382 = vmatprep.subr.mxu0 0.0
    %3383 = vmatpush1.msra.mxu0 0.0
    %3384 = vmatprep.subr.mxu0 0.0
    %3385 = vmatpush1.msra.mxu0 0.0
    %3386 = vmatprep.subr.mxu0 0.0
    %3387 = vmatpush1.msra.mxu0 0.0
    %3388 = vmatprep.subr.mxu0 0.0
    %3389 = vmatpush1.msra.mxu0 0.0
    %3390 = vmatprep.subr.mxu0 0.0
    %3391 = vmatpush1.msra.mxu0 0.0
    %3392 = vmatprep.subr.mxu0 0.0
    %3393 = vmatpush1.msra.mxu0 0.0
    %3394 = vmatprep.subr.mxu0 0.0
    %3395 = vmatpush1.msra.mxu0 0.0
    %3396 = vmatprep.subr.mxu0 0.0
    %3397 = vmatpush1.msra.mxu0 0.0
    %3398 = vmatprep.subr.mxu0 0.0
    %3399 = vmatpush1.msra.mxu0 0.0
    %3400 = vmatprep.subr.mxu0 0.0
    %3401 = vmatpush1.msra.mxu0 0.0
    %3402 = vmatprep.subr.mxu0 0.0
    %3403 = vmatpush1.msra.mxu0 %v1831
    %3404 = vmatprep.subr.mxu0 0.0
    %3405 = vmatpush2.msra.mxu0 0.0
    %3406 = vmatprep.subr.mxu0 0.0
    %3407 = vmatpush2.msra.mxu0 0.0
    %3408 = vmatprep.subr.mxu0 0.0
    %3409 = vmatpush2.msra.mxu0 0.0
    %3410 = vmatprep.subr.mxu0 0.0
    %3411 = vmatpush2.msra.mxu0 0.0
    %3412 = vmatprep.subr.mxu0 0.0
    %3413 = vmatpush2.msra.mxu0 0.0
    %3414 = vmatprep.subr.mxu0 0.0
    %3415 = vmatpush2.msra.mxu0 0.0
    %3416 = vmatprep.subr.mxu0 0.0
    %3417 = vmatpush2.msra.mxu0 0.0
    %3418 = vmatprep.subr.mxu0 0.0
    %3419 = vmatpush2.msra.mxu0 0.0
    %3420 = vmatprep.subr.mxu0 0.0
    %3421 = vmatpush2.msra.mxu0 0.0
    %3422 = vmatprep.subr.mxu0 0.0
    %3423 = vmatpush2.msra.mxu0 0.0
    %3424 = vmatprep.subr.mxu0 0.0
    %3425 = vmatpush2.msra.mxu0 0.0
    %3426 = vmatprep.subr.mxu0 0.0
    %3427 = vmatpush2.msra.mxu0 0.0
    %3428 = vmatprep.subr.mxu0 0.0
    %3429 = vmatpush2.msra.mxu0 0.0
    %3430 = vmatprep.subr.mxu0 0.0
    %3431 = vmatpush2.msra.mxu0 0.0
    %3432 = vmatprep.subr.mxu0 0.0
    %3433 = vmatpush2.msra.mxu0 0.0
    %3434 = vmatprep.subr.mxu0 0.0
    %3435 = vmatpush2.msra.mxu0 0.0
    %3436 = vmatprep.mubr.f32.mxu0 0.0
    %3437 = vmatmul.mubr.f32.gmra.mxu0 %v3370
    %v3438 = vpop.f32.mrf.mxu0
    %v3439 = vadd.f32 0.0, %v3438
    %v3440 = vpop.f32.mrf.mxu0
    %3441 = vdwg.mxu0
    %v3443 = vsel %vm3192, %v3354, 0
    %3445 = vmatprep.subr.mxu0 0.0
    %3446 = vmatpush1.msra.mxu0 0.0
    %3447 = vmatprep.subr.mxu0 0.0
    %3448 = vmatpush1.msra.mxu0 0.0
    %3449 = vmatprep.subr.mxu0 0.0
    %3450 = vmatpush1.msra.mxu0 0.0
    %3451 = vmatprep.subr.mxu0 0.0
    %3452 = vmatpush1.msra.mxu0 0.0
    %3453 = vmatprep.subr.mxu0 0.0
    %3454 = vmatpush1.msra.mxu0 0.0
    %3455 = vmatprep.subr.mxu0 0.0
    %3456 = vmatpush1.msra.mxu0 0.0
    %3457 = vmatprep.subr.mxu0 0.0
    %3458 = vmatpush1.msra.mxu0 0.0
    %3459 = vmatprep.subr.mxu0 0.0
    %3460 = vmatpush1.msra.mxu0 0.0
    %3461 = vmatprep.subr.mxu0 0.0
    %3462 = vmatpush1.msra.mxu0 0.0
    %3463 = vmatprep.subr.mxu0 0.0
    %3464 = vmatpush1.msra.mxu0 0.0
    %3465 = vmatprep.subr.mxu0 0.0
    %3466 = vmatpush1.msra.mxu0 0.0
    %3467 = vmatprep.subr.mxu0 0.0
    %3468 = vmatpush1.msra.mxu0 0.0
    %3469 = vmatprep.subr.mxu0 0.0
    %3470 = vmatpush1.msra.mxu0 0.0
    %3471 = vmatprep.subr.mxu0 0.0
    %3472 = vmatpush1.msra.mxu0 0.0
    %3473 = vmatprep.subr.mxu0 0.0
    %3474 = vmatpush1.msra.mxu0 0.0
    %3475 = vmatprep.subr.mxu0 0.0
    %3476 = vmatpush1.msra.mxu0 %v1832
    %3477 = vmatprep.subr.mxu0 0.0
    %3478 = vmatpush2.msra.mxu0 0.0
    %3479 = vmatprep.subr.mxu0 0.0
    %3480 = vmatpush2.msra.mxu0 0.0
    %3481 = vmatprep.subr.mxu0 0.0
    %3482 = vmatpush2.msra.mxu0 0.0
    %3483 = vmatprep.subr.mxu0 0.0
    %3484 = vmatpush2.msra.mxu0 0.0
    %3485 = vmatprep.subr.mxu0 0.0
    %3486 = vmatpush2.msra.mxu0 0.0
    %3487 = vmatprep.subr.mxu0 0.0
    %3488 = vmatpush2.msra.mxu0 0.0
    %3489 = vmatprep.subr.mxu0 0.0
    %3490 = vmatpush2.msra.mxu0 0.0
    %3491 = vmatprep.subr.mxu0 0.0
    %3492 = vmatpush2.msra.mxu0 0.0
    %3493 = vmatprep.subr.mxu0 0.0
    %3494 = vmatpush2.msra.mxu0 0.0
    %3495 = vmatprep.subr.mxu0 0.0
    %3496 = vmatpush2.msra.mxu0 0.0
    %3497 = vmatprep.subr.mxu0 0.0
    %3498 = vmatpush2.msra.mxu0 0.0
    %3499 = vmatprep.subr.mxu0 0.0
    %3500 = vmatpush2.msra.mxu0 0.0
    %3501 = vmatprep.subr.mxu0 0.0
    %3502 = vmatpush2.msra.mxu0 0.0
    %3503 = vmatprep.subr.mxu0 0.0
    %3504 = vmatpush2.msra.mxu0 0.0
    %3505 = vmatprep.subr.mxu0 0.0
    %3506 = vmatpush2.msra.mxu0 0.0
    %3507 = vmatprep.subr.mxu0 0.0
    %3508 = vmatpush2.msra.mxu0 0.0
    %3509 = vmatprep.mubr.f32.mxu0 0.0
    %3510 = vmatmul.mubr.f32.gmra.mxu0 %v3443
    %v3511 = vpop.f32.mrf.mxu0
    %v3512 = vadd.f32 0.0, %v3511
    %v3513 = vpop.f32.mrf.mxu0
    %3514 = vdwg.mxu0
    %v3516 = vsel %vm3192, %v3355, 0
    %3518 = vmatprep.subr.mxu0 0.0
    %3519 = vmatpush1.msra.mxu0 0.0
    %3520 = vmatprep.subr.mxu0 0.0
    %3521 = vmatpush1.msra.mxu0 0.0
    %3522 = vmatprep.subr.mxu0 0.0
    %3523 = vmatpush1.msra.mxu0 0.0
    %3524 = vmatprep.subr.mxu0 0.0
    %3525 = vmatpush1.msra.mxu0 0.0
    %3526 = vmatprep.subr.mxu0 0.0
    %3527 = vmatpush1.msra.mxu0 0.0
    %3528 = vmatprep.subr.mxu0 0.0
    %3529 = vmatpush1.msra.mxu0 0.0
    %3530 = vmatprep.subr.mxu0 0.0
    %3531 = vmatpush1.msra.mxu0 0.0
    %3532 = vmatprep.subr.mxu0 0.0
    %3533 = vmatpush1.msra.mxu0 0.0
    %3534 = vmatprep.subr.mxu0 0.0
    %3535 = vmatpush1.msra.mxu0 0.0
    %3536 = vmatprep.subr.mxu0 0.0
    %3537 = vmatpush1.msra.mxu0 0.0
    %3538 = vmatprep.subr.mxu0 0.0
    %3539 = vmatpush1.msra.mxu0 0.0
    %3540 = vmatprep.subr.mxu0 0.0
    %3541 = vmatpush1.msra.mxu0 0.0
    %3542 = vmatprep.subr.mxu0 0.0
    %3543 = vmatpush1.msra.mxu0 0.0
    %3544 = vmatprep.subr.mxu0 0.0
    %3545 = vmatpush1.msra.mxu0 0.0
    %3546 = vmatprep.subr.mxu0 0.0
    %3547 = vmatpush1.msra.mxu0 0.0
    %3548 = vmatprep.subr.mxu0 0.0
    %3549 = vmatpush1.msra.mxu0 %v1833
    %3550 = vmatprep.subr.mxu0 0.0
    %3551 = vmatpush2.msra.mxu0 0.0
    %3552 = vmatprep.subr.mxu0 0.0
    %3553 = vmatpush2.msra.mxu0 0.0
    %3554 = vmatprep.subr.mxu0 0.0
    %3555 = vmatpush2.msra.mxu0 0.0
    %3556 = vmatprep.subr.mxu0 0.0
    %3557 = vmatpush2.msra.mxu0 0.0
    %3558 = vmatprep.subr.mxu0 0.0
    %3559 = vmatpush2.msra.mxu0 0.0
    %3560 = vmatprep.subr.mxu0 0.0
    %3561 = vmatpush2.msra.mxu0 0.0
    %3562 = vmatprep.subr.mxu0 0.0
    %3563 = vmatpush2.msra.mxu0 0.0
    %3564 = vmatprep.subr.mxu0 0.0
    %3565 = vmatpush2.msra.mxu0 0.0
    %3566 = vmatprep.subr.mxu0 0.0
    %3567 = vmatpush2.msra.mxu0 0.0
    %3568 = vmatprep.subr.mxu0 0.0
    %3569 = vmatpush2.msra.mxu0 0.0
    %3570 = vmatprep.subr.mxu0 0.0
    %3571 = vmatpush2.msra.mxu0 0.0
    %3572 = vmatprep.subr.mxu0 0.0
    %3573 = vmatpush2.msra.mxu0 0.0
    %3574 = vmatprep.subr.mxu0 0.0
    %3575 = vmatpush2.msra.mxu0 0.0
    %3576 = vmatprep.subr.mxu0 0.0
    %3577 = vmatpush2.msra.mxu0 0.0
    %3578 = vmatprep.subr.mxu0 0.0
    %3579 = vmatpush2.msra.mxu0 0.0
    %3580 = vmatprep.subr.mxu0 0.0
    %3581 = vmatpush2.msra.mxu0 0.0
    %3582 = vmatprep.mubr.f32.mxu0 0.0
    %3583 = vmatmul.mubr.f32.gmra.mxu0 %v3516
    %v3584 = vpop.f32.mrf.mxu0
    %v3585 = vadd.f32 0.0, %v3584
    %v3586 = vpop.f32.mrf.mxu0
    %3587 = vdwg.mxu0
    %v3589 = vsel %vm3192, %v3356, 0
    %3591 = vmatprep.subr.mxu0 0.0
    %3592 = vmatpush1.msra.mxu0 0.0
    %3593 = vmatprep.subr.mxu0 0.0
    %3594 = vmatpush1.msra.mxu0 0.0
    %3595 = vmatprep.subr.mxu0 0.0
    %3596 = vmatpush1.msra.mxu0 0.0
    %3597 = vmatprep.subr.mxu0 0.0
    %3598 = vmatpush1.msra.mxu0 0.0
    %3599 = vmatprep.subr.mxu0 0.0
    %3600 = vmatpush1.msra.mxu0 0.0
    %3601 = vmatprep.subr.mxu0 0.0
    %3602 = vmatpush1.msra.mxu0 0.0
    %3603 = vmatprep.subr.mxu0 0.0
    %3604 = vmatpush1.msra.mxu0 0.0
    %3605 = vmatprep.subr.mxu0 0.0
    %3606 = vmatpush1.msra.mxu0 0.0
    %3607 = vmatprep.subr.mxu0 0.0
    %3608 = vmatpush1.msra.mxu0 0.0
    %3609 = vmatprep.subr.mxu0 0.0
    %3610 = vmatpush1.msra.mxu0 0.0
    %3611 = vmatprep.subr.mxu0 0.0
    %3612 = vmatpush1.msra.mxu0 0.0
    %3613 = vmatprep.subr.mxu0 0.0
    %3614 = vmatpush1.msra.mxu0 0.0
    %3615 = vmatprep.subr.mxu0 0.0
    %3616 = vmatpush1.msra.mxu0 0.0
    %3617 = vmatprep.subr.mxu0 0.0
    %3618 = vmatpush1.msra.mxu0 0.0
    %3619 = vmatprep.subr.mxu0 0.0
    %3620 = vmatpush1.msra.mxu0 0.0
    %3621 = vmatprep.subr.mxu0 0.0
    %3622 = vmatpush1.msra.mxu0 %v1834
    %3623 = vmatprep.subr.mxu0 0.0
    %3624 = vmatpush2.msra.mxu0 0.0
    %3625 = vmatprep.subr.mxu0 0.0
    %3626 = vmatpush2.msra.mxu0 0.0
    %3627 = vmatprep.subr.mxu0 0.0
    %3628 = vmatpush2.msra.mxu0 0.0
    %3629 = vmatprep.subr.mxu0 0.0
    %3630 = vmatpush2.msra.mxu0 0.0
    %3631 = vmatprep.subr.mxu0 0.0
    %3632 = vmatpush2.msra.mxu0 0.0
    %3633 = vmatprep.subr.mxu0 0.0
    %3634 = vmatpush2.msra.mxu0 0.0
    %3635 = vmatprep.subr.mxu0 0.0
    %3636 = vmatpush2.msra.mxu0 0.0
    %3637 = vmatprep.subr.mxu0 0.0
    %3638 = vmatpush2.msra.mxu0 0.0
    %3639 = vmatprep.subr.mxu0 0.0
    %3640 = vmatpush2.msra.mxu0 0.0
    %3641 = vmatprep.subr.mxu0 0.0
    %3642 = vmatpush2.msra.mxu0 0.0
    %3643 = vmatprep.subr.mxu0 0.0
    %3644 = vmatpush2.msra.mxu0 0.0
    %3645 = vmatprep.subr.mxu0 0.0
    %3646 = vmatpush2.msra.mxu0 0.0
    %3647 = vmatprep.subr.mxu0 0.0
    %3648 = vmatpush2.msra.mxu0 0.0
    %3649 = vmatprep.subr.mxu0 0.0
    %3650 = vmatpush2.msra.mxu0 0.0
    %3651 = vmatprep.subr.mxu0 0.0
    %3652 = vmatpush2.msra.mxu0 0.0
    %3653 = vmatprep.subr.mxu0 0.0
    %3654 = vmatpush2.msra.mxu0 0.0
    %3655 = vmatprep.mubr.f32.mxu0 0.0
    %3656 = vmatmul.mubr.f32.gmra.mxu0 %v3589
    %v3657 = vpop.f32.mrf.mxu0
    %v3658 = vadd.f32 0.0, %v3657
    %v3659 = vpop.f32.mrf.mxu0
    %3660 = vdwg.mxu0
    %v3662 = vsel %vm3192, %v3357, 0
    %3664 = vmatprep.subr.mxu0 0.0
    %3665 = vmatpush1.msra.mxu0 0.0
    %3666 = vmatprep.subr.mxu0 0.0
    %3667 = vmatpush1.msra.mxu0 0.0
    %3668 = vmatprep.subr.mxu0 0.0
    %3669 = vmatpush1.msra.mxu0 0.0
    %3670 = vmatprep.subr.mxu0 0.0
    %3671 = vmatpush1.msra.mxu0 0.0
    %3672 = vmatprep.subr.mxu0 0.0
    %3673 = vmatpush1.msra.mxu0 0.0
    %3674 = vmatprep.subr.mxu0 0.0
    %3675 = vmatpush1.msra.mxu0 0.0
    %3676 = vmatprep.subr.mxu0 0.0
    %3677 = vmatpush1.msra.mxu0 0.0
    %3678 = vmatprep.subr.mxu0 0.0
    %3679 = vmatpush1.msra.mxu0 0.0
    %3680 = vmatprep.subr.mxu0 0.0
    %3681 = vmatpush1.msra.mxu0 0.0
    %3682 = vmatprep.subr.mxu0 0.0
    %3683 = vmatpush1.msra.mxu0 0.0
    %3684 = vmatprep.subr.mxu0 0.0
    %3685 = vmatpush1.msra.mxu0 0.0
    %3686 = vmatprep.subr.mxu0 0.0
    %3687 = vmatpush1.msra.mxu0 0.0
    %3688 = vmatprep.subr.mxu0 0.0
    %3689 = vmatpush1.msra.mxu0 0.0
    %3690 = vmatprep.subr.mxu0 0.0
    %3691 = vmatpush1.msra.mxu0 0.0
    %3692 = vmatprep.subr.mxu0 0.0
    %3693 = vmatpush1.msra.mxu0 0.0
    %3694 = vmatprep.subr.mxu0 0.0
    %3695 = vmatpush1.msra.mxu0 %v1835
    %3696 = vmatprep.subr.mxu0 0.0
    %3697 = vmatpush2.msra.mxu0 0.0
    %3698 = vmatprep.subr.mxu0 0.0
    %3699 = vmatpush2.msra.mxu0 0.0
    %3700 = vmatprep.subr.mxu0 0.0
    %3701 = vmatpush2.msra.mxu0 0.0
    %3702 = vmatprep.subr.mxu0 0.0
    %3703 = vmatpush2.msra.mxu0 0.0
    %3704 = vmatprep.subr.mxu0 0.0
    %3705 = vmatpush2.msra.mxu0 0.0
    %3706 = vmatprep.subr.mxu0 0.0
    %3707 = vmatpush2.msra.mxu0 0.0
    %3708 = vmatprep.subr.mxu0 0.0
    %3709 = vmatpush2.msra.mxu0 0.0
    %3710 = vmatprep.subr.mxu0 0.0
    %3711 = vmatpush2.msra.mxu0 0.0
    %3712 = vmatprep.subr.mxu0 0.0
    %3713 = vmatpush2.msra.mxu0 0.0
    %3714 = vmatprep.subr.mxu0 0.0
    %3715 = vmatpush2.msra.mxu0 0.0
    %3716 = vmatprep.subr.mxu0 0.0
    %3717 = vmatpush2.msra.mxu0 0.0
    %3718 = vmatprep.subr.mxu0 0.0
    %3719 = vmatpush2.msra.mxu0 0.0
    %3720 = vmatprep.subr.mxu0 0.0
    %3721 = vmatpush2.msra.mxu0 0.0
    %3722 = vmatprep.subr.mxu0 0.0
    %3723 = vmatpush2.msra.mxu0 0.0
    %3724 = vmatprep.subr.mxu0 0.0
    %3725 = vmatpush2.msra.mxu0 0.0
    %3726 = vmatprep.subr.mxu0 0.0
    %3727 = vmatpush2.msra.mxu0 0.0
    %3728 = vmatprep.mubr.f32.mxu0 0.0
    %3729 = vmatmul.mubr.f32.gmra.mxu0 %v3662
    %v3730 = vpop.f32.mrf.mxu0
    %v3731 = vadd.f32 0.0, %v3730
    %v3732 = vpop.f32.mrf.mxu0
    %3733 = vdwg.mxu0
    %v3735 = vsel %vm3192, %v3358, 0
    %3737 = vmatprep.subr.mxu0 0.0
    %3738 = vmatpush1.msra.mxu0 0.0
    %3739 = vmatprep.subr.mxu0 0.0
    %3740 = vmatpush1.msra.mxu0 0.0
    %3741 = vmatprep.subr.mxu0 0.0
    %3742 = vmatpush1.msra.mxu0 0.0
    %3743 = vmatprep.subr.mxu0 0.0
    %3744 = vmatpush1.msra.mxu0 0.0
    %3745 = vmatprep.subr.mxu0 0.0
    %3746 = vmatpush1.msra.mxu0 0.0
    %3747 = vmatprep.subr.mxu0 0.0
    %3748 = vmatpush1.msra.mxu0 0.0
    %3749 = vmatprep.subr.mxu0 0.0
    %3750 = vmatpush1.msra.mxu0 0.0
    %3751 = vmatprep.subr.mxu0 0.0
    %3752 = vmatpush1.msra.mxu0 0.0
    %3753 = vmatprep.subr.mxu0 0.0
    %3754 = vmatpush1.msra.mxu0 0.0
    %3755 = vmatprep.subr.mxu0 0.0
    %3756 = vmatpush1.msra.mxu0 0.0
    %3757 = vmatprep.subr.mxu0 0.0
    %3758 = vmatpush1.msra.mxu0 0.0
    %3759 = vmatprep.subr.mxu0 0.0
    %3760 = vmatpush1.msra.mxu0 0.0
    %3761 = vmatprep.subr.mxu0 0.0
    %3762 = vmatpush1.msra.mxu0 0.0
    %3763 = vmatprep.subr.mxu0 0.0
    %3764 = vmatpush1.msra.mxu0 0.0
    %3765 = vmatprep.subr.mxu0 0.0
    %3766 = vmatpush1.msra.mxu0 0.0
    %3767 = vmatprep.subr.mxu0 0.0
    %3768 = vmatpush1.msra.mxu0 %v1836
    %3769 = vmatprep.subr.mxu0 0.0
    %3770 = vmatpush2.msra.mxu0 0.0
    %3771 = vmatprep.subr.mxu0 0.0
    %3772 = vmatpush2.msra.mxu0 0.0
    %3773 = vmatprep.subr.mxu0 0.0
    %3774 = vmatpush2.msra.mxu0 0.0
    %3775 = vmatprep.subr.mxu0 0.0
    %3776 = vmatpush2.msra.mxu0 0.0
    %3777 = vmatprep.subr.mxu0 0.0
    %3778 = vmatpush2.msra.mxu0 0.0
    %3779 = vmatprep.subr.mxu0 0.0
    %3780 = vmatpush2.msra.mxu0 0.0
    %3781 = vmatprep.subr.mxu0 0.0
    %3782 = vmatpush2.msra.mxu0 0.0
    %3783 = vmatprep.subr.mxu0 0.0
    %3784 = vmatpush2.msra.mxu0 0.0
    %3785 = vmatprep.subr.mxu0 0.0
    %3786 = vmatpush2.msra.mxu0 0.0
    %3787 = vmatprep.subr.mxu0 0.0
    %3788 = vmatpush2.msra.mxu0 0.0
    %3789 = vmatprep.subr.mxu0 0.0
    %3790 = vmatpush2.msra.mxu0 0.0
    %3791 = vmatprep.subr.mxu0 0.0
    %3792 = vmatpush2.msra.mxu0 0.0
    %3793 = vmatprep.subr.mxu0 0.0
    %3794 = vmatpush2.msra.mxu0 0.0
    %3795 = vmatprep.subr.mxu0 0.0
    %3796 = vmatpush2.msra.mxu0 0.0
    %3797 = vmatprep.subr.mxu0 0.0
    %3798 = vmatpush2.msra.mxu0 0.0
    %3799 = vmatprep.subr.mxu0 0.0
    %3800 = vmatpush2.msra.mxu0 0.0
    %3801 = vmatprep.mubr.f32.mxu0 0.0
    %3802 = vmatmul.mubr.f32.gmra.mxu0 %v3735
    %v3803 = vpop.f32.mrf.mxu0
    %v3804 = vadd.f32 0.0, %v3803
    %v3805 = vpop.f32.mrf.mxu0
    %3806 = vdwg.mxu0
    %v3808 = vsel %vm3192, %v3359, 0
    %3810 = vmatprep.subr.mxu0 0.0
    %3811 = vmatpush1.msra.mxu0 0.0
    %3812 = vmatprep.subr.mxu0 0.0
    %3813 = vmatpush1.msra.mxu0 0.0
    %3814 = vmatprep.subr.mxu0 0.0
    %3815 = vmatpush1.msra.mxu0 0.0
    %3816 = vmatprep.subr.mxu0 0.0
    %3817 = vmatpush1.msra.mxu0 0.0
    %3818 = vmatprep.subr.mxu0 0.0
    %3819 = vmatpush1.msra.mxu0 0.0
    %3820 = vmatprep.subr.mxu0 0.0
    %3821 = vmatpush1.msra.mxu0 0.0
    %3822 = vmatprep.subr.mxu0 0.0
    %3823 = vmatpush1.msra.mxu0 0.0
    %3824 = vmatprep.subr.mxu0 0.0
    %3825 = vmatpush1.msra.mxu0 0.0
    %3826 = vmatprep.subr.mxu0 0.0
    %3827 = vmatpush1.msra.mxu0 0.0
    %3828 = vmatprep.subr.mxu0 0.0
    %3829 = vmatpush1.msra.mxu0 0.0
    %3830 = vmatprep.subr.mxu0 0.0
    %3831 = vmatpush1.msra.mxu0 0.0
    %3832 = vmatprep.subr.mxu0 0.0
    %3833 = vmatpush1.msra.mxu0 0.0
    %3834 = vmatprep.subr.mxu0 0.0
    %3835 = vmatpush1.msra.mxu0 0.0
    %3836 = vmatprep.subr.mxu0 0.0
    %3837 = vmatpush1.msra.mxu0 0.0
    %3838 = vmatprep.subr.mxu0 0.0
    %3839 = vmatpush1.msra.mxu0 0.0
    %3840 = vmatprep.subr.mxu0 0.0
    %3841 = vmatpush1.msra.mxu0 %v1837
    %3842 = vmatprep.subr.mxu0 0.0
    %3843 = vmatpush2.msra.mxu0 0.0
    %3844 = vmatprep.subr.mxu0 0.0
    %3845 = vmatpush2.msra.mxu0 0.0
    %3846 = vmatprep.subr.mxu0 0.0
    %3847 = vmatpush2.msra.mxu0 0.0
    %3848 = vmatprep.subr.mxu0 0.0
    %3849 = vmatpush2.msra.mxu0 0.0
    %3850 = vmatprep.subr.mxu0 0.0
    %3851 = vmatpush2.msra.mxu0 0.0
    %3852 = vmatprep.subr.mxu0 0.0
    %3853 = vmatpush2.msra.mxu0 0.0
    %3854 = vmatprep.subr.mxu0 0.0
    %3855 = vmatpush2.msra.mxu0 0.0
    %3856 = vmatprep.subr.mxu0 0.0
    %3857 = vmatpush2.msra.mxu0 0.0
    %3858 = vmatprep.subr.mxu0 0.0
    %3859 = vmatpush2.msra.mxu0 0.0
    %3860 = vmatprep.subr.mxu0 0.0
    %3861 = vmatpush2.msra.mxu0 0.0
    %3862 = vmatprep.subr.mxu0 0.0
    %3863 = vmatpush2.msra.mxu0 0.0
    %3864 = vmatprep.subr.mxu0 0.0
    %3865 = vmatpush2.msra.mxu0 0.0
    %3866 = vmatprep.subr.mxu0 0.0
    %3867 = vmatpush2.msra.mxu0 0.0
    %3868 = vmatprep.subr.mxu0 0.0
    %3869 = vmatpush2.msra.mxu0 0.0
    %3870 = vmatprep.subr.mxu0 0.0
    %3871 = vmatpush2.msra.mxu0 0.0
    %3872 = vmatprep.subr.mxu0 0.0
    %3873 = vmatpush2.msra.mxu0 0.0
    %3874 = vmatprep.mubr.f32.mxu0 0.0
    %3875 = vmatmul.mubr.f32.gmra.mxu0 %v3808
    %v3876 = vpop.f32.mrf.mxu0
    %v3877 = vadd.f32 0.0, %v3876
    %v3878 = vpop.f32.mrf.mxu0
    %3879 = vdwg.mxu0
    %v3881 = vsel %vm3192, %v3360, 0
    %3883 = vmatprep.subr.mxu0 0.0
    %3884 = vmatpush1.msra.mxu0 0.0
    %3885 = vmatprep.subr.mxu0 0.0
    %3886 = vmatpush1.msra.mxu0 0.0
    %3887 = vmatprep.subr.mxu0 0.0
    %3888 = vmatpush1.msra.mxu0 0.0
    %3889 = vmatprep.subr.mxu0 0.0
    %3890 = vmatpush1.msra.mxu0 0.0
    %3891 = vmatprep.subr.mxu0 0.0
    %3892 = vmatpush1.msra.mxu0 0.0
    %3893 = vmatprep.subr.mxu0 0.0
    %3894 = vmatpush1.msra.mxu0 0.0
    %3895 = vmatprep.subr.mxu0 0.0
    %3896 = vmatpush1.msra.mxu0 0.0
    %3897 = vmatprep.subr.mxu0 0.0
    %3898 = vmatpush1.msra.mxu0 0.0
    %3899 = vmatprep.subr.mxu0 0.0
    %3900 = vmatpush1.msra.mxu0 0.0
    %3901 = vmatprep.subr.mxu0 0.0
    %3902 = vmatpush1.msra.mxu0 0.0
    %3903 = vmatprep.subr.mxu0 0.0
    %3904 = vmatpush1.msra.mxu0 0.0
    %3905 = vmatprep.subr.mxu0 0.0
    %3906 = vmatpush1.msra.mxu0 0.0
    %3907 = vmatprep.subr.mxu0 0.0
    %3908 = vmatpush1.msra.mxu0 0.0
    %3909 = vmatprep.subr.mxu0 0.0
    %3910 = vmatpush1.msra.mxu0 0.0
    %3911 = vmatprep.subr.mxu0 0.0
    %3912 = vmatpush1.msra.mxu0 0.0
    %3913 = vmatprep.subr.mxu0 0.0
    %3914 = vmatpush1.msra.mxu0 %v1838
    %3915 = vmatprep.subr.mxu0 0.0
    %3916 = vmatpush2.msra.mxu0 0.0
    %3917 = vmatprep.subr.mxu0 0.0
    %3918 = vmatpush2.msra.mxu0 0.0
    %3919 = vmatprep.subr.mxu0 0.0
    %3920 = vmatpush2.msra.mxu0 0.0
    %3921 = vmatprep.subr.mxu0 0.0
    %3922 = vmatpush2.msra.mxu0 0.0
    %3923 = vmatprep.subr.mxu0 0.0
    %3924 = vmatpush2.msra.mxu0 0.0
    %3925 = vmatprep.subr.mxu0 0.0
    %3926 = vmatpush2.msra.mxu0 0.0
    %3927 = vmatprep.subr.mxu0 0.0
    %3928 = vmatpush2.msra.mxu0 0.0
    %3929 = vmatprep.subr.mxu0 0.0
    %3930 = vmatpush2.msra.mxu0 0.0
    %3931 = vmatprep.subr.mxu0 0.0
    %3932 = vmatpush2.msra.mxu0 0.0
    %3933 = vmatprep.subr.mxu0 0.0
    %3934 = vmatpush2.msra.mxu0 0.0
    %3935 = vmatprep.subr.mxu0 0.0
    %3936 = vmatpush2.msra.mxu0 0.0
    %3937 = vmatprep.subr.mxu0 0.0
    %3938 = vmatpush2.msra.mxu0 0.0
    %3939 = vmatprep.subr.mxu0 0.0
    %3940 = vmatpush2.msra.mxu0 0.0
    %3941 = vmatprep.subr.mxu0 0.0
    %3942 = vmatpush2.msra.mxu0 0.0
    %3943 = vmatprep.subr.mxu0 0.0
    %3944 = vmatpush2.msra.mxu0 0.0
    %3945 = vmatprep.subr.mxu0 0.0
    %3946 = vmatpush2.msra.mxu0 0.0
    %3947 = vmatprep.mubr.f32.mxu0 0.0
    %3948 = vmatmul.mubr.f32.gmra.mxu0 %v3881
    %v3949 = vpop.f32.mrf.mxu0
    %v3950 = vadd.f32 0.0, %v3949
    %v3951 = vpop.f32.mrf.mxu0
    %3952 = vdwg.mxu0
    %v3954 = vsel %vm3192, %v3361, 0
    %3956 = vmatprep.subr.mxu0 0.0
    %3957 = vmatpush1.msra.mxu0 0.0
    %3958 = vmatprep.subr.mxu0 0.0
    %3959 = vmatpush1.msra.mxu0 0.0
    %3960 = vmatprep.subr.mxu0 0.0
    %3961 = vmatpush1.msra.mxu0 0.0
    %3962 = vmatprep.subr.mxu0 0.0
    %3963 = vmatpush1.msra.mxu0 0.0
    %3964 = vmatprep.subr.mxu0 0.0
    %3965 = vmatpush1.msra.mxu0 0.0
    %3966 = vmatprep.subr.mxu0 0.0
    %3967 = vmatpush1.msra.mxu0 0.0
    %3968 = vmatprep.subr.mxu0 0.0
    %3969 = vmatpush1.msra.mxu0 0.0
    %3970 = vmatprep.subr.mxu0 0.0
    %3971 = vmatpush1.msra.mxu0 0.0
    %3972 = vmatprep.subr.mxu0 0.0
    %3973 = vmatpush1.msra.mxu0 0.0
    %3974 = vmatprep.subr.mxu0 0.0
    %3975 = vmatpush1.msra.mxu0 0.0
    %3976 = vmatprep.subr.mxu0 0.0
    %3977 = vmatpush1.msra.mxu0 0.0
    %3978 = vmatprep.subr.mxu0 0.0
    %3979 = vmatpush1.msra.mxu0 0.0
    %3980 = vmatprep.subr.mxu0 0.0
    %3981 = vmatpush1.msra.mxu0 0.0
    %3982 = vmatprep.subr.mxu0 0.0
    %3983 = vmatpush1.msra.mxu0 0.0
    %3984 = vmatprep.subr.mxu0 0.0
    %3985 = vmatpush1.msra.mxu0 0.0
    %3986 = vmatprep.subr.mxu0 0.0
    %3987 = vmatpush1.msra.mxu0 %v1967
    %3988 = vmatprep.subr.mxu0 0.0
    %3989 = vmatpush2.msra.mxu0 0.0
    %3990 = vmatprep.subr.mxu0 0.0
    %3991 = vmatpush2.msra.mxu0 0.0
    %3992 = vmatprep.subr.mxu0 0.0
    %3993 = vmatpush2.msra.mxu0 0.0
    %3994 = vmatprep.subr.mxu0 0.0
    %3995 = vmatpush2.msra.mxu0 0.0
    %3996 = vmatprep.subr.mxu0 0.0
    %3997 = vmatpush2.msra.mxu0 0.0
    %3998 = vmatprep.subr.mxu0 0.0
    %3999 = vmatpush2.msra.mxu0 0.0
    %4000 = vmatprep.subr.mxu0 0.0
    %4001 = vmatpush2.msra.mxu0 0.0
    %4002 = vmatprep.subr.mxu0 0.0
    %4003 = vmatpush2.msra.mxu0 0.0
    %4004 = vmatprep.subr.mxu0 0.0
    %4005 = vmatpush2.msra.mxu0 0.0
    %4006 = vmatprep.subr.mxu0 0.0
    %4007 = vmatpush2.msra.mxu0 0.0
    %4008 = vmatprep.subr.mxu0 0.0
    %4009 = vmatpush2.msra.mxu0 0.0
    %4010 = vmatprep.subr.mxu0 0.0
    %4011 = vmatpush2.msra.mxu0 0.0
    %4012 = vmatprep.subr.mxu0 0.0
    %4013 = vmatpush2.msra.mxu0 0.0
    %4014 = vmatprep.subr.mxu0 0.0
    %4015 = vmatpush2.msra.mxu0 0.0
    %4016 = vmatprep.subr.mxu0 0.0
    %4017 = vmatpush2.msra.mxu0 0.0
    %4018 = vmatprep.subr.mxu0 0.0
    %4019 = vmatpush2.msra.mxu0 0.0
    %4020 = vmatprep.mubr.f32.mxu0 0.0
    %4021 = vmatmul.mubr.f32.gmra.mxu0 %v3954
    %v4022 = vpop.f32.mrf.mxu0
    %v4023 = vadd.f32 0.0, %v4022
    %v4024 = vpop.f32.mrf.mxu0
    %4025 = vdwg.mxu0
    %v4027 = vsel %vm3192, %v3362, 0
    %4029 = vmatprep.subr.mxu0 0.0
    %4030 = vmatpush1.msra.mxu0 0.0
    %4031 = vmatprep.subr.mxu0 0.0
    %4032 = vmatpush1.msra.mxu0 0.0
    %4033 = vmatprep.subr.mxu0 0.0
    %4034 = vmatpush1.msra.mxu0 0.0
    %4035 = vmatprep.subr.mxu0 0.0
    %4036 = vmatpush1.msra.mxu0 0.0
    %4037 = vmatprep.subr.mxu0 0.0
    %4038 = vmatpush1.msra.mxu0 0.0
    %4039 = vmatprep.subr.mxu0 0.0
    %4040 = vmatpush1.msra.mxu0 0.0
    %4041 = vmatprep.subr.mxu0 0.0
    %4042 = vmatpush1.msra.mxu0 0.0
    %4043 = vmatprep.subr.mxu0 0.0
    %4044 = vmatpush1.msra.mxu0 0.0
    %4045 = vmatprep.subr.mxu0 0.0
    %4046 = vmatpush1.msra.mxu0 0.0
    %4047 = vmatprep.subr.mxu0 0.0
    %4048 = vmatpush1.msra.mxu0 0.0
    %4049 = vmatprep.subr.mxu0 0.0
    %4050 = vmatpush1.msra.mxu0 0.0
    %4051 = vmatprep.subr.mxu0 0.0
    %4052 = vmatpush1.msra.mxu0 0.0
    %4053 = vmatprep.subr.mxu0 0.0
    %4054 = vmatpush1.msra.mxu0 0.0
    %4055 = vmatprep.subr.mxu0 0.0
    %4056 = vmatpush1.msra.mxu0 0.0
    %4057 = vmatprep.subr.mxu0 0.0
    %4058 = vmatpush1.msra.mxu0 0.0
    %4059 = vmatprep.subr.mxu0 0.0
    %4060 = vmatpush1.msra.mxu0 %v1968
    %4061 = vmatprep.subr.mxu0 0.0
    %4062 = vmatpush2.msra.mxu0 0.0
    %4063 = vmatprep.subr.mxu0 0.0
    %4064 = vmatpush2.msra.mxu0 0.0
    %4065 = vmatprep.subr.mxu0 0.0
    %4066 = vmatpush2.msra.mxu0 0.0
    %4067 = vmatprep.subr.mxu0 0.0
    %4068 = vmatpush2.msra.mxu0 0.0
    %4069 = vmatprep.subr.mxu0 0.0
    %4070 = vmatpush2.msra.mxu0 0.0
    %4071 = vmatprep.subr.mxu0 0.0
    %4072 = vmatpush2.msra.mxu0 0.0
    %4073 = vmatprep.subr.mxu0 0.0
    %4074 = vmatpush2.msra.mxu0 0.0
    %4075 = vmatprep.subr.mxu0 0.0
    %4076 = vmatpush2.msra.mxu0 0.0
    %4077 = vmatprep.subr.mxu0 0.0
    %4078 = vmatpush2.msra.mxu0 0.0
    %4079 = vmatprep.subr.mxu0 0.0
    %4080 = vmatpush2.msra.mxu0 0.0
    %4081 = vmatprep.subr.mxu0 0.0
    %4082 = vmatpush2.msra.mxu0 0.0
    %4083 = vmatprep.subr.mxu0 0.0
    %4084 = vmatpush2.msra.mxu0 0.0
    %4085 = vmatprep.subr.mxu0 0.0
    %4086 = vmatpush2.msra.mxu0 0.0
    %4087 = vmatprep.subr.mxu0 0.0
    %4088 = vmatpush2.msra.mxu0 0.0
    %4089 = vmatprep.subr.mxu0 0.0
    %4090 = vmatpush2.msra.mxu0 0.0
    %4091 = vmatprep.subr.mxu0 0.0
    %4092 = vmatpush2.msra.mxu0 0.0
    %4093 = vmatprep.mubr.f32.mxu0 0.0
    %4094 = vmatmul.mubr.f32.gmra.mxu0 %v4027
    %v4095 = vpop.f32.mrf.mxu0
    %v4096 = vadd.f32 0.0, %v4095
    %v4097 = vpop.f32.mrf.mxu0
    %4098 = vdwg.mxu0
    %v4100 = vsel %vm3192, %v3363, 0
    %4102 = vmatprep.subr.mxu0 0.0
    %4103 = vmatpush1.msra.mxu0 0.0
    %4104 = vmatprep.subr.mxu0 0.0
    %4105 = vmatpush1.msra.mxu0 0.0
    %4106 = vmatprep.subr.mxu0 0.0
    %4107 = vmatpush1.msra.mxu0 0.0
    %4108 = vmatprep.subr.mxu0 0.0
    %4109 = vmatpush1.msra.mxu0 0.0
    %4110 = vmatprep.subr.mxu0 0.0
    %4111 = vmatpush1.msra.mxu0 0.0
    %4112 = vmatprep.subr.mxu0 0.0
    %4113 = vmatpush1.msra.mxu0 0.0
    %4114 = vmatprep.subr.mxu0 0.0
    %4115 = vmatpush1.msra.mxu0 0.0
    %4116 = vmatprep.subr.mxu0 0.0
    %4117 = vmatpush1.msra.mxu0 0.0
    %4118 = vmatprep.subr.mxu0 0.0
    %4119 = vmatpush1.msra.mxu0 0.0
    %4120 = vmatprep.subr.mxu0 0.0
    %4121 = vmatpush1.msra.mxu0 0.0
    %4122 = vmatprep.subr.mxu0 0.0
    %4123 = vmatpush1.msra.mxu0 0.0
    %4124 = vmatprep.subr.mxu0 0.0
    %4125 = vmatpush1.msra.mxu0 0.0
    %4126 = vmatprep.subr.mxu0 0.0
    %4127 = vmatpush1.msra.mxu0 0.0
    %4128 = vmatprep.subr.mxu0 0.0
    %4129 = vmatpush1.msra.mxu0 0.0
    %4130 = vmatprep.subr.mxu0 0.0
    %4131 = vmatpush1.msra.mxu0 0.0
    %4132 = vmatprep.subr.mxu0 0.0
    %4133 = vmatpush1.msra.mxu0 %v1969
    %4134 = vmatprep.subr.mxu0 0.0
    %4135 = vmatpush2.msra.mxu0 0.0
    %4136 = vmatprep.subr.mxu0 0.0
    %4137 = vmatpush2.msra.mxu0 0.0
    %4138 = vmatprep.subr.mxu0 0.0
    %4139 = vmatpush2.msra.mxu0 0.0
    %4140 = vmatprep.subr.mxu0 0.0
    %4141 = vmatpush2.msra.mxu0 0.0
    %4142 = vmatprep.subr.mxu0 0.0
    %4143 = vmatpush2.msra.mxu0 0.0
    %4144 = vmatprep.subr.mxu0 0.0
    %4145 = vmatpush2.msra.mxu0 0.0
    %4146 = vmatprep.subr.mxu0 0.0
    %4147 = vmatpush2.msra.mxu0 0.0
    %4148 = vmatprep.subr.mxu0 0.0
    %4149 = vmatpush2.msra.mxu0 0.0
    %4150 = vmatprep.subr.mxu0 0.0
    %4151 = vmatpush2.msra.mxu0 0.0
    %4152 = vmatprep.subr.mxu0 0.0
    %4153 = vmatpush2.msra.mxu0 0.0
    %4154 = vmatprep.subr.mxu0 0.0
    %4155 = vmatpush2.msra.mxu0 0.0
    %4156 = vmatprep.subr.mxu0 0.0
    %4157 = vmatpush2.msra.mxu0 0.0
    %4158 = vmatprep.subr.mxu0 0.0
    %4159 = vmatpush2.msra.mxu0 0.0
    %4160 = vmatprep.subr.mxu0 0.0
    %4161 = vmatpush2.msra.mxu0 0.0
    %4162 = vmatprep.subr.mxu0 0.0
    %4163 = vmatpush2.msra.mxu0 0.0
    %4164 = vmatprep.subr.mxu0 0.0
    %4165 = vmatpush2.msra.mxu0 0.0
    %4166 = vmatprep.mubr.f32.mxu0 0.0
    %4167 = vmatmul.mubr.f32.gmra.mxu0 %v4100
    %v4168 = vpop.f32.mrf.mxu0
    %v4169 = vadd.f32 0.0, %v4168
    %v4170 = vpop.f32.mrf.mxu0
    %4171 = vdwg.mxu0
    %v4173 = vsel %vm3192, %v3364, 0
    %4175 = vmatprep.subr.mxu0 0.0
    %4176 = vmatpush1.msra.mxu0 0.0
    %4177 = vmatprep.subr.mxu0 0.0
    %4178 = vmatpush1.msra.mxu0 0.0
    %4179 = vmatprep.subr.mxu0 0.0
    %4180 = vmatpush1.msra.mxu0 0.0
    %4181 = vmatprep.subr.mxu0 0.0
    %4182 = vmatpush1.msra.mxu0 0.0
    %4183 = vmatprep.subr.mxu0 0.0
    %4184 = vmatpush1.msra.mxu0 0.0
    %4185 = vmatprep.subr.mxu0 0.0
    %4186 = vmatpush1.msra.mxu0 0.0
    %4187 = vmatprep.subr.mxu0 0.0
    %4188 = vmatpush1.msra.mxu0 0.0
    %4189 = vmatprep.subr.mxu0 0.0
    %4190 = vmatpush1.msra.mxu0 0.0
    %4191 = vmatprep.subr.mxu0 0.0
    %4192 = vmatpush1.msra.mxu0 0.0
    %4193 = vmatprep.subr.mxu0 0.0
    %4194 = vmatpush1.msra.mxu0 0.0
    %4195 = vmatprep.subr.mxu0 0.0
    %4196 = vmatpush1.msra.mxu0 0.0
    %4197 = vmatprep.subr.mxu0 0.0
    %4198 = vmatpush1.msra.mxu0 0.0
    %4199 = vmatprep.subr.mxu0 0.0
    %4200 = vmatpush1.msra.mxu0 0.0
    %4201 = vmatprep.subr.mxu0 0.0
    %4202 = vmatpush1.msra.mxu0 0.0
    %4203 = vmatprep.subr.mxu0 0.0
    %4204 = vmatpush1.msra.mxu0 0.0
    %4205 = vmatprep.subr.mxu0 0.0
    %4206 = vmatpush1.msra.mxu0 %v1970
    %4207 = vmatprep.subr.mxu0 0.0
    %4208 = vmatpush2.msra.mxu0 0.0
    %4209 = vmatprep.subr.mxu0 0.0
    %4210 = vmatpush2.msra.mxu0 0.0
    %4211 = vmatprep.subr.mxu0 0.0
    %4212 = vmatpush2.msra.mxu0 0.0
    %4213 = vmatprep.subr.mxu0 0.0
    %4214 = vmatpush2.msra.mxu0 0.0
    %4215 = vmatprep.subr.mxu0 0.0
    %4216 = vmatpush2.msra.mxu0 0.0
    %4217 = vmatprep.subr.mxu0 0.0
    %4218 = vmatpush2.msra.mxu0 0.0
    %4219 = vmatprep.subr.mxu0 0.0
    %4220 = vmatpush2.msra.mxu0 0.0
    %4221 = vmatprep.subr.mxu0 0.0
    %4222 = vmatpush2.msra.mxu0 0.0
    %4223 = vmatprep.subr.mxu0 0.0
    %4224 = vmatpush2.msra.mxu0 0.0
    %4225 = vmatprep.subr.mxu0 0.0
    %4226 = vmatpush2.msra.mxu0 0.0
    %4227 = vmatprep.subr.mxu0 0.0
    %4228 = vmatpush2.msra.mxu0 0.0
    %4229 = vmatprep.subr.mxu0 0.0
    %4230 = vmatpush2.msra.mxu0 0.0
    %4231 = vmatprep.subr.mxu0 0.0
    %4232 = vmatpush2.msra.mxu0 0.0
    %4233 = vmatprep.subr.mxu0 0.0
    %4234 = vmatpush2.msra.mxu0 0.0
    %4235 = vmatprep.subr.mxu0 0.0
    %4236 = vmatpush2.msra.mxu0 0.0
    %4237 = vmatprep.subr.mxu0 0.0
    %4238 = vmatpush2.msra.mxu0 0.0
    %4239 = vmatprep.mubr.f32.mxu0 0.0
    %4240 = vmatmul.mubr.f32.gmra.mxu0 %v4173
    %v4241 = vpop.f32.mrf.mxu0
    %v4242 = vadd.f32 0.0, %v4241
    %v4243 = vpop.f32.mrf.mxu0
    %4244 = vdwg.mxu0
    %v4246 = vsel %vm3192, %v3365, 0
    %4248 = vmatprep.subr.mxu0 0.0
    %4249 = vmatpush1.msra.mxu0 0.0
    %4250 = vmatprep.subr.mxu0 0.0
    %4251 = vmatpush1.msra.mxu0 0.0
    %4252 = vmatprep.subr.mxu0 0.0
    %4253 = vmatpush1.msra.mxu0 0.0
    %4254 = vmatprep.subr.mxu0 0.0
    %4255 = vmatpush1.msra.mxu0 0.0
    %4256 = vmatprep.subr.mxu0 0.0
    %4257 = vmatpush1.msra.mxu0 0.0
    %4258 = vmatprep.subr.mxu0 0.0
    %4259 = vmatpush1.msra.mxu0 0.0
    %4260 = vmatprep.subr.mxu0 0.0
    %4261 = vmatpush1.msra.mxu0 0.0
    %4262 = vmatprep.subr.mxu0 0.0
    %4263 = vmatpush1.msra.mxu0 0.0
    %4264 = vmatprep.subr.mxu0 0.0
    %4265 = vmatpush1.msra.mxu0 0.0
    %4266 = vmatprep.subr.mxu0 0.0
    %4267 = vmatpush1.msra.mxu0 0.0
    %4268 = vmatprep.subr.mxu0 0.0
    %4269 = vmatpush1.msra.mxu0 0.0
    %4270 = vmatprep.subr.mxu0 0.0
    %4271 = vmatpush1.msra.mxu0 0.0
    %4272 = vmatprep.subr.mxu0 0.0
    %4273 = vmatpush1.msra.mxu0 0.0
    %4274 = vmatprep.subr.mxu0 0.0
    %4275 = vmatpush1.msra.mxu0 0.0
    %4276 = vmatprep.subr.mxu0 0.0
    %4277 = vmatpush1.msra.mxu0 0.0
    %4278 = vmatprep.subr.mxu0 0.0
    %4279 = vmatpush1.msra.mxu0 %v1971
    %4280 = vmatprep.subr.mxu0 0.0
    %4281 = vmatpush2.msra.mxu0 0.0
    %4282 = vmatprep.subr.mxu0 0.0
    %4283 = vmatpush2.msra.mxu0 0.0
    %4284 = vmatprep.subr.mxu0 0.0
    %4285 = vmatpush2.msra.mxu0 0.0
    %4286 = vmatprep.subr.mxu0 0.0
    %4287 = vmatpush2.msra.mxu0 0.0
    %4288 = vmatprep.subr.mxu0 0.0
    %4289 = vmatpush2.msra.mxu0 0.0
    %4290 = vmatprep.subr.mxu0 0.0
    %4291 = vmatpush2.msra.mxu0 0.0
    %4292 = vmatprep.subr.mxu0 0.0
    %4293 = vmatpush2.msra.mxu0 0.0
    %4294 = vmatprep.subr.mxu0 0.0
    %4295 = vmatpush2.msra.mxu0 0.0
    %4296 = vmatprep.subr.mxu0 0.0
    %4297 = vmatpush2.msra.mxu0 0.0
    %4298 = vmatprep.subr.mxu0 0.0
    %4299 = vmatpush2.msra.mxu0 0.0
    %4300 = vmatprep.subr.mxu0 0.0
    %4301 = vmatpush2.msra.mxu0 0.0
    %4302 = vmatprep.subr.mxu0 0.0
    %4303 = vmatpush2.msra.mxu0 0.0
    %4304 = vmatprep.subr.mxu0 0.0
    %4305 = vmatpush2.msra.mxu0 0.0
    %4306 = vmatprep.subr.mxu0 0.0
    %4307 = vmatpush2.msra.mxu0 0.0
    %4308 = vmatprep.subr.mxu0 0.0
    %4309 = vmatpush2.msra.mxu0 0.0
    %4310 = vmatprep.subr.mxu0 0.0
    %4311 = vmatpush2.msra.mxu0 0.0
    %4312 = vmatprep.mubr.f32.mxu0 0.0
    %4313 = vmatmul.mubr.f32.gmra.mxu0 %v4246
    %v4314 = vpop.f32.mrf.mxu0
    %v4315 = vadd.f32 0.0, %v4314
    %v4316 = vpop.f32.mrf.mxu0
    %4317 = vdwg.mxu0
    %v4319 = vsel %vm3192, %v3366, 0
    %4321 = vmatprep.subr.mxu0 0.0
    %4322 = vmatpush1.msra.mxu0 0.0
    %4323 = vmatprep.subr.mxu0 0.0
    %4324 = vmatpush1.msra.mxu0 0.0
    %4325 = vmatprep.subr.mxu0 0.0
    %4326 = vmatpush1.msra.mxu0 0.0
    %4327 = vmatprep.subr.mxu0 0.0
    %4328 = vmatpush1.msra.mxu0 0.0
    %4329 = vmatprep.subr.mxu0 0.0
    %4330 = vmatpush1.msra.mxu0 0.0
    %4331 = vmatprep.subr.mxu0 0.0
    %4332 = vmatpush1.msra.mxu0 0.0
    %4333 = vmatprep.subr.mxu0 0.0
    %4334 = vmatpush1.msra.mxu0 0.0
    %4335 = vmatprep.subr.mxu0 0.0
    %4336 = vmatpush1.msra.mxu0 0.0
    %4337 = vmatprep.subr.mxu0 0.0
    %4338 = vmatpush1.msra.mxu0 0.0
    %4339 = vmatprep.subr.mxu0 0.0
    %4340 = vmatpush1.msra.mxu0 0.0
    %4341 = vmatprep.subr.mxu0 0.0
    %4342 = vmatpush1.msra.mxu0 0.0
    %4343 = vmatprep.subr.mxu0 0.0
    %4344 = vmatpush1.msra.mxu0 0.0
    %4345 = vmatprep.subr.mxu0 0.0
    %4346 = vmatpush1.msra.mxu0 0.0
    %4347 = vmatprep.subr.mxu0 0.0
    %4348 = vmatpush1.msra.mxu0 0.0
    %4349 = vmatprep.subr.mxu0 0.0
    %4350 = vmatpush1.msra.mxu0 0.0
    %4351 = vmatprep.subr.mxu0 0.0
    %4352 = vmatpush1.msra.mxu0 %v1972
    %4353 = vmatprep.subr.mxu0 0.0
    %4354 = vmatpush2.msra.mxu0 0.0
    %4355 = vmatprep.subr.mxu0 0.0
    %4356 = vmatpush2.msra.mxu0 0.0
    %4357 = vmatprep.subr.mxu0 0.0
    %4358 = vmatpush2.msra.mxu0 0.0
    %4359 = vmatprep.subr.mxu0 0.0
    %4360 = vmatpush2.msra.mxu0 0.0
    %4361 = vmatprep.subr.mxu0 0.0
    %4362 = vmatpush2.msra.mxu0 0.0
    %4363 = vmatprep.subr.mxu0 0.0
    %4364 = vmatpush2.msra.mxu0 0.0
    %4365 = vmatprep.subr.mxu0 0.0
    %4366 = vmatpush2.msra.mxu0 0.0
    %4367 = vmatprep.subr.mxu0 0.0
    %4368 = vmatpush2.msra.mxu0 0.0
    %4369 = vmatprep.subr.mxu0 0.0
    %4370 = vmatpush2.msra.mxu0 0.0
    %4371 = vmatprep.subr.mxu0 0.0
    %4372 = vmatpush2.msra.mxu0 0.0
    %4373 = vmatprep.subr.mxu0 0.0
    %4374 = vmatpush2.msra.mxu0 0.0
    %4375 = vmatprep.subr.mxu0 0.0
    %4376 = vmatpush2.msra.mxu0 0.0
    %4377 = vmatprep.subr.mxu0 0.0
    %4378 = vmatpush2.msra.mxu0 0.0
    %4379 = vmatprep.subr.mxu0 0.0
    %4380 = vmatpush2.msra.mxu0 0.0
    %4381 = vmatprep.subr.mxu0 0.0
    %4382 = vmatpush2.msra.mxu0 0.0
    %4383 = vmatprep.subr.mxu0 0.0
    %4384 = vmatpush2.msra.mxu0 0.0
    %4385 = vmatprep.mubr.f32.mxu0 0.0
    %4386 = vmatmul.mubr.f32.gmra.mxu0 %v4319
    %v4387 = vpop.f32.mrf.mxu0
    %v4388 = vadd.f32 0.0, %v4387
    %v4389 = vpop.f32.mrf.mxu0
    %4390 = vdwg.mxu0
    %v4392 = vsel %vm3192, %v3367, 0
    %4394 = vmatprep.subr.mxu0 0.0
    %4395 = vmatpush1.msra.mxu0 0.0
    %4396 = vmatprep.subr.mxu0 0.0
    %4397 = vmatpush1.msra.mxu0 0.0
    %4398 = vmatprep.subr.mxu0 0.0
    %4399 = vmatpush1.msra.mxu0 0.0
    %4400 = vmatprep.subr.mxu0 0.0
    %4401 = vmatpush1.msra.mxu0 0.0
    %4402 = vmatprep.subr.mxu0 0.0
    %4403 = vmatpush1.msra.mxu0 0.0
    %4404 = vmatprep.subr.mxu0 0.0
    %4405 = vmatpush1.msra.mxu0 0.0
    %4406 = vmatprep.subr.mxu0 0.0
    %4407 = vmatpush1.msra.mxu0 0.0
    %4408 = vmatprep.subr.mxu0 0.0
    %4409 = vmatpush1.msra.mxu0 0.0
    %4410 = vmatprep.subr.mxu0 0.0
    %4411 = vmatpush1.msra.mxu0 0.0
    %4412 = vmatprep.subr.mxu0 0.0
    %4413 = vmatpush1.msra.mxu0 0.0
    %4414 = vmatprep.subr.mxu0 0.0
    %4415 = vmatpush1.msra.mxu0 0.0
    %4416 = vmatprep.subr.mxu0 0.0
    %4417 = vmatpush1.msra.mxu0 0.0
    %4418 = vmatprep.subr.mxu0 0.0
    %4419 = vmatpush1.msra.mxu0 0.0
    %4420 = vmatprep.subr.mxu0 0.0
    %4421 = vmatpush1.msra.mxu0 0.0
    %4422 = vmatprep.subr.mxu0 0.0
    %4423 = vmatpush1.msra.mxu0 0.0
    %4424 = vmatprep.subr.mxu0 0.0
    %4425 = vmatpush1.msra.mxu0 %v1973
    %4426 = vmatprep.subr.mxu0 0.0
    %4427 = vmatpush2.msra.mxu0 0.0
    %4428 = vmatprep.subr.mxu0 0.0
    %4429 = vmatpush2.msra.mxu0 0.0
    %4430 = vmatprep.subr.mxu0 0.0
    %4431 = vmatpush2.msra.mxu0 0.0
    %4432 = vmatprep.subr.mxu0 0.0
    %4433 = vmatpush2.msra.mxu0 0.0
    %4434 = vmatprep.subr.mxu0 0.0
    %4435 = vmatpush2.msra.mxu0 0.0
    %4436 = vmatprep.subr.mxu0 0.0
    %4437 = vmatpush2.msra.mxu0 0.0
    %4438 = vmatprep.subr.mxu0 0.0
    %4439 = vmatpush2.msra.mxu0 0.0
    %4440 = vmatprep.subr.mxu0 0.0
    %4441 = vmatpush2.msra.mxu0 0.0
    %4442 = vmatprep.subr.mxu0 0.0
    %4443 = vmatpush2.msra.mxu0 0.0
    %4444 = vmatprep.subr.mxu0 0.0
    %4445 = vmatpush2.msra.mxu0 0.0
    %4446 = vmatprep.subr.mxu0 0.0
    %4447 = vmatpush2.msra.mxu0 0.0
    %4448 = vmatprep.subr.mxu0 0.0
    %4449 = vmatpush2.msra.mxu0 0.0
    %4450 = vmatprep.subr.mxu0 0.0
    %4451 = vmatpush2.msra.mxu0 0.0
    %4452 = vmatprep.subr.mxu0 0.0
    %4453 = vmatpush2.msra.mxu0 0.0
    %4454 = vmatprep.subr.mxu0 0.0
    %4455 = vmatpush2.msra.mxu0 0.0
    %4456 = vmatprep.subr.mxu0 0.0
    %4457 = vmatpush2.msra.mxu0 0.0
    %4458 = vmatprep.mubr.f32.mxu0 0.0
    %4459 = vmatmul.mubr.f32.gmra.mxu0 %v4392
    %v4460 = vpop.f32.mrf.mxu0
    %v4461 = vadd.f32 0.0, %v4460
    %v4462 = vpop.f32.mrf.mxu0
    %4463 = vdwg.mxu0
    %v4465 = vsel %vm3192, %v3368, 0
    %4467 = vmatprep.subr.mxu0 0.0
    %4468 = vmatpush1.msra.mxu0 0.0
    %4469 = vmatprep.subr.mxu0 0.0
    %4470 = vmatpush1.msra.mxu0 0.0
    %4471 = vmatprep.subr.mxu0 0.0
    %4472 = vmatpush1.msra.mxu0 0.0
    %4473 = vmatprep.subr.mxu0 0.0
    %4474 = vmatpush1.msra.mxu0 0.0
    %4475 = vmatprep.subr.mxu0 0.0
    %4476 = vmatpush1.msra.mxu0 0.0
    %4477 = vmatprep.subr.mxu0 0.0
    %4478 = vmatpush1.msra.mxu0 0.0
    %4479 = vmatprep.subr.mxu0 0.0
    %4480 = vmatpush1.msra.mxu0 0.0
    %4481 = vmatprep.subr.mxu0 0.0
    %4482 = vmatpush1.msra.mxu0 0.0
    %4483 = vmatprep.subr.mxu0 0.0
    %4484 = vmatpush1.msra.mxu0 0.0
    %4485 = vmatprep.subr.mxu0 0.0
    %4486 = vmatpush1.msra.mxu0 0.0
    %4487 = vmatprep.subr.mxu0 0.0
    %4488 = vmatpush1.msra.mxu0 0.0
    %4489 = vmatprep.subr.mxu0 0.0
    %4490 = vmatpush1.msra.mxu0 0.0
    %4491 = vmatprep.subr.mxu0 0.0
    %4492 = vmatpush1.msra.mxu0 0.0
    %4493 = vmatprep.subr.mxu0 0.0
    %4494 = vmatpush1.msra.mxu0 0.0
    %4495 = vmatprep.subr.mxu0 0.0
    %4496 = vmatpush1.msra.mxu0 0.0
    %4497 = vmatprep.subr.mxu0 0.0
    %4498 = vmatpush1.msra.mxu0 %v1974
    %4499 = vmatprep.subr.mxu0 0.0
    %4500 = vmatpush2.msra.mxu0 0.0
    %4501 = vmatprep.subr.mxu0 0.0
    %4502 = vmatpush2.msra.mxu0 0.0
    %4503 = vmatprep.subr.mxu0 0.0
    %4504 = vmatpush2.msra.mxu0 0.0
    %4505 = vmatprep.subr.mxu0 0.0
    %4506 = vmatpush2.msra.mxu0 0.0
    %4507 = vmatprep.subr.mxu0 0.0
    %4508 = vmatpush2.msra.mxu0 0.0
    %4509 = vmatprep.subr.mxu0 0.0
    %4510 = vmatpush2.msra.mxu0 0.0
    %4511 = vmatprep.subr.mxu0 0.0
    %4512 = vmatpush2.msra.mxu0 0.0
    %4513 = vmatprep.subr.mxu0 0.0
    %4514 = vmatpush2.msra.mxu0 0.0
    %4515 = vmatprep.subr.mxu0 0.0
    %4516 = vmatpush2.msra.mxu0 0.0
    %4517 = vmatprep.subr.mxu0 0.0
    %4518 = vmatpush2.msra.mxu0 0.0
    %4519 = vmatprep.subr.mxu0 0.0
    %4520 = vmatpush2.msra.mxu0 0.0
    %4521 = vmatprep.subr.mxu0 0.0
    %4522 = vmatpush2.msra.mxu0 0.0
    %4523 = vmatprep.subr.mxu0 0.0
    %4524 = vmatpush2.msra.mxu0 0.0
    %4525 = vmatprep.subr.mxu0 0.0
    %4526 = vmatpush2.msra.mxu0 0.0
    %4527 = vmatprep.subr.mxu0 0.0
    %4528 = vmatpush2.msra.mxu0 0.0
    %4529 = vmatprep.subr.mxu0 0.0
    %4530 = vmatpush2.msra.mxu0 0.0
    %4531 = vmatprep.mubr.f32.mxu0 0.0
    %4532 = vmatmul.mubr.f32.gmra.mxu0 %v4465
    %v4533 = vpop.f32.mrf.mxu0
    %v4534 = vadd.f32 0.0, %v4533
    %v4535 = vpop.f32.mrf.mxu0
    %4536 = vdwg.mxu0
    %v4537 = vcombine.low %v3439, %v3585
    %v4538 = vcombine.high %v3439, %v3585
    %v4540 = vunpack.c.l.s4 1983009808
    %v4541 = vunpack.c.0.s8 %v4540
    %v4542 = vlaneseq
    %v4543 = vshrl.u32 %v4542, 7
    %v4544 = vsub.s32 %v4541, %v4543
    %v4545 = vrot.slane %v4537, %v4544
    %v4547 = vunpack.c.l.s4 1983009808
    %v4548 = vunpack.c.0.s8 %v4547
    %v4549 = vlaneseq
    %v4550 = vshrl.u32 %v4549, 7
    %v4551 = vsub.s32 %v4548, %v4550
    %v4552 = vrot.slane %v4538, %v4551
    %v4553 = vcombine.low %v3512, %v3658
    %v4554 = vcombine.high %v3512, %v3658
    %v4556 = vunpack.c.l.s4 1983009808
    %v4557 = vunpack.c.0.s8 %v4556
    %v4558 = vlaneseq
    %v4559 = vshrl.u32 %v4558, 7
    %v4560 = vsub.s32 %v4557, %v4559
    %v4561 = vrot.slane %v4553, %v4560
    %v4563 = vunpack.c.l.s4 1983009808
    %v4564 = vunpack.c.0.s8 %v4563
    %v4565 = vlaneseq
    %v4566 = vshrl.u32 %v4565, 7
    %v4567 = vsub.s32 %v4564, %v4566
    %v4568 = vrot.slane %v4554, %v4567
    %v4569 = vcombine.low %v3731, %v3877
    %v4570 = vcombine.high %v3731, %v3877
    %v4572 = vunpack.c.l.s4 1983009808
    %v4573 = vunpack.c.0.s8 %v4572
    %v4574 = vlaneseq
    %v4575 = vshrl.u32 %v4574, 7
    %v4576 = vsub.s32 %v4573, %v4575
    %v4577 = vrot.slane %v4569, %v4576
    %v4579 = vunpack.c.l.s4 1983009808
    %v4580 = vunpack.c.0.s8 %v4579
    %v4581 = vlaneseq
    %v4582 = vshrl.u32 %v4581, 7
    %v4583 = vsub.s32 %v4580, %v4582
    %v4584 = vrot.slane %v4570, %v4583
    %v4585 = vcombine.low %v3804, %v3950
    %v4586 = vcombine.high %v3804, %v3950
    %v4588 = vunpack.c.l.s4 1983009808
    %v4589 = vunpack.c.0.s8 %v4588
    %v4590 = vlaneseq
    %v4591 = vshrl.u32 %v4590, 7
    %v4592 = vsub.s32 %v4589, %v4591
    %v4593 = vrot.slane %v4585, %v4592
    %v4595 = vunpack.c.l.s4 1983009808
    %v4596 = vunpack.c.0.s8 %v4595
    %v4597 = vlaneseq
    %v4598 = vshrl.u32 %v4597, 7
    %v4599 = vsub.s32 %v4596, %v4598
    %v4600 = vrot.slane %v4586, %v4599
    %v4601 = vcombine.low %v4545, %v4561
    %v4602 = vcombine.high %v4545, %v4561
    %v4604 = vunpack.c.l.s4 1934713408
    %v4605 = vunpack.c.0.s8 %v4604
    %v4606 = vlaneseq
    %v4607 = vshrl.u32 %v4606, 7
    %v4608 = vsub.s32 %v4605, %v4607
    %v4609 = vrot.slane %v4601, %v4608
    %v4611 = vunpack.c.l.s4 1934713408
    %v4612 = vunpack.c.0.s8 %v4611
    %v4613 = vlaneseq
    %v4614 = vshrl.u32 %v4613, 7
    %v4615 = vsub.s32 %v4612, %v4614
    %v4616 = vrot.slane %v4602, %v4615
    %v4617 = vcombine.low %v4552, %v4568
    %v4618 = vcombine.high %v4552, %v4568
    %v4620 = vunpack.c.l.s4 1934713408
    %v4621 = vunpack.c.0.s8 %v4620
    %v4622 = vlaneseq
    %v4623 = vshrl.u32 %v4622, 7
    %v4624 = vsub.s32 %v4621, %v4623
    %v4625 = vrot.slane %v4617, %v4624
    %v4627 = vunpack.c.l.s4 1934713408
    %v4628 = vunpack.c.0.s8 %v4627
    %v4629 = vlaneseq
    %v4630 = vshrl.u32 %v4629, 7
    %v4631 = vsub.s32 %v4628, %v4630
    %v4632 = vrot.slane %v4618, %v4631
    %v4633 = vcombine.low %v4577, %v4593
    %v4634 = vcombine.high %v4577, %v4593
    %v4636 = vunpack.c.l.s4 1934713408
    %v4637 = vunpack.c.0.s8 %v4636
    %v4638 = vlaneseq
    %v4639 = vshrl.u32 %v4638, 7
    %v4640 = vsub.s32 %v4637, %v4639
    %v4641 = vrot.slane %v4633, %v4640
    %v4643 = vunpack.c.l.s4 1934713408
    %v4644 = vunpack.c.0.s8 %v4643
    %v4645 = vlaneseq
    %v4646 = vshrl.u32 %v4645, 7
    %v4647 = vsub.s32 %v4644, %v4646
    %v4648 = vrot.slane %v4634, %v4647
    %v4649 = vcombine.low %v4584, %v4600
    %v4650 = vcombine.high %v4584, %v4600
    %v4652 = vunpack.c.l.s4 1934713408
    %v4653 = vunpack.c.0.s8 %v4652
    %v4654 = vlaneseq
    %v4655 = vshrl.u32 %v4654, 7
    %v4656 = vsub.s32 %v4653, %v4655
    %v4657 = vrot.slane %v4649, %v4656
    %v4659 = vunpack.c.l.s4 1934713408
    %v4660 = vunpack.c.0.s8 %v4659
    %v4661 = vlaneseq
    %v4662 = vshrl.u32 %v4661, 7
    %v4663 = vsub.s32 %v4660, %v4662
    %v4664 = vrot.slane %v4650, %v4663
    %v4665 = vcombine.low %v4609, %v4641
    %v4666 = vcombine.high %v4609, %v4641
    %v4667 = vcombine.low %v4616, %v4648
    %v4668 = vcombine.high %v4616, %v4648
    %v4669 = vcombine.low %v4625, %v4657
    %v4670 = vcombine.high %v4625, %v4657
    %v4671 = vcombine.low %v4632, %v4664
    %v4672 = vcombine.high %v4632, %v4664
    %v4673 = vcombine.low %v4023, %v4169
    %v4674 = vcombine.high %v4023, %v4169
    %v4676 = vunpack.c.l.s4 1983009808
    %v4677 = vunpack.c.0.s8 %v4676
    %v4678 = vlaneseq
    %v4679 = vshrl.u32 %v4678, 7
    %v4680 = vsub.s32 %v4677, %v4679
    %v4681 = vrot.slane %v4673, %v4680
    %v4683 = vunpack.c.l.s4 1983009808
    %v4684 = vunpack.c.0.s8 %v4683
    %v4685 = vlaneseq
    %v4686 = vshrl.u32 %v4685, 7
    %v4687 = vsub.s32 %v4684, %v4686
    %v4688 = vrot.slane %v4674, %v4687
    %v4689 = vcombine.low %v4096, %v4242
    %v4690 = vcombine.high %v4096, %v4242
    %v4692 = vunpack.c.l.s4 1983009808
    %v4693 = vunpack.c.0.s8 %v4692
    %v4694 = vlaneseq
    %v4695 = vshrl.u32 %v4694, 7
    %v4696 = vsub.s32 %v4693, %v4695
    %v4697 = vrot.slane %v4689, %v4696
    %v4699 = vunpack.c.l.s4 1983009808
    %v4700 = vunpack.c.0.s8 %v4699
    %v4701 = vlaneseq
    %v4702 = vshrl.u32 %v4701, 7
    %v4703 = vsub.s32 %v4700, %v4702
    %v4704 = vrot.slane %v4690, %v4703
    %v4705 = vcombine.low %v4315, %v4461
    %v4706 = vcombine.high %v4315, %v4461
    %v4708 = vunpack.c.l.s4 1983009808
    %v4709 = vunpack.c.0.s8 %v4708
    %v4710 = vlaneseq
    %v4711 = vshrl.u32 %v4710, 7
    %v4712 = vsub.s32 %v4709, %v4711
    %v4713 = vrot.slane %v4705, %v4712
    %v4715 = vunpack.c.l.s4 1983009808
    %v4716 = vunpack.c.0.s8 %v4715
    %v4717 = vlaneseq
    %v4718 = vshrl.u32 %v4717, 7
    %v4719 = vsub.s32 %v4716, %v4718
    %v4720 = vrot.slane %v4706, %v4719
    %v4721 = vcombine.low %v4388, %v4534
    %v4722 = vcombine.high %v4388, %v4534
    %v4724 = vunpack.c.l.s4 1983009808
    %v4725 = vunpack.c.0.s8 %v4724
    %v4726 = vlaneseq
    %v4727 = vshrl.u32 %v4726, 7
    %v4728 = vsub.s32 %v4725, %v4727
    %v4729 = vrot.slane %v4721, %v4728
    %v4731 = vunpack.c.l.s4 1983009808
    %v4732 = vunpack.c.0.s8 %v4731
    %v4733 = vlaneseq
    %v4734 = vshrl.u32 %v4733, 7
    %v4735 = vsub.s32 %v4732, %v4734
    %v4736 = vrot.slane %v4722, %v4735
    %v4737 = vcombine.low %v4681, %v4697
    %v4738 = vcombine.high %v4681, %v4697
    %v4740 = vunpack.c.l.s4 1934713408
    %v4741 = vunpack.c.0.s8 %v4740
    %v4742 = vlaneseq
    %v4743 = vshrl.u32 %v4742, 7
    %v4744 = vsub.s32 %v4741, %v4743
    %v4745 = vrot.slane %v4737, %v4744
    %v4747 = vunpack.c.l.s4 1934713408
    %v4748 = vunpack.c.0.s8 %v4747
    %v4749 = vlaneseq
    %v4750 = vshrl.u32 %v4749, 7
    %v4751 = vsub.s32 %v4748, %v4750
    %v4752 = vrot.slane %v4738, %v4751
    %v4753 = vcombine.low %v4688, %v4704
    %v4754 = vcombine.high %v4688, %v4704
    %v4756 = vunpack.c.l.s4 1934713408
    %v4757 = vunpack.c.0.s8 %v4756
    %v4758 = vlaneseq
    %v4759 = vshrl.u32 %v4758, 7
    %v4760 = vsub.s32 %v4757, %v4759
    %v4761 = vrot.slane %v4753, %v4760
    %v4763 = vunpack.c.l.s4 1934713408
    %v4764 = vunpack.c.0.s8 %v4763
    %v4765 = vlaneseq
    %v4766 = vshrl.u32 %v4765, 7
    %v4767 = vsub.s32 %v4764, %v4766
    %v4768 = vrot.slane %v4754, %v4767
    %v4769 = vcombine.low %v4713, %v4729
    %v4770 = vcombine.high %v4713, %v4729
    %v4772 = vunpack.c.l.s4 1934713408
    %v4773 = vunpack.c.0.s8 %v4772
    %v4774 = vlaneseq
    %v4775 = vshrl.u32 %v4774, 7
    %v4776 = vsub.s32 %v4773, %v4775
    %v4777 = vrot.slane %v4769, %v4776
    %v4779 = vunpack.c.l.s4 1934713408
    %v4780 = vunpack.c.0.s8 %v4779
    %v4781 = vlaneseq
    %v4782 = vshrl.u32 %v4781, 7
    %v4783 = vsub.s32 %v4780, %v4782
    %v4784 = vrot.slane %v4770, %v4783
    %v4785 = vcombine.low %v4720, %v4736
    %v4786 = vcombine.high %v4720, %v4736
    %v4788 = vunpack.c.l.s4 1934713408
    %v4789 = vunpack.c.0.s8 %v4788
    %v4790 = vlaneseq
    %v4791 = vshrl.u32 %v4790, 7
    %v4792 = vsub.s32 %v4789, %v4791
    %v4793 = vrot.slane %v4785, %v4792
    %v4795 = vunpack.c.l.s4 1934713408
    %v4796 = vunpack.c.0.s8 %v4795
    %v4797 = vlaneseq
    %v4798 = vshrl.u32 %v4797, 7
    %v4799 = vsub.s32 %v4796, %v4798
    %v4800 = vrot.slane %v4786, %v4799
    %v4801 = vcombine.low %v4745, %v4777
    %v4802 = vcombine.high %v4745, %v4777
    %v4803 = vcombine.low %v4752, %v4784
    %v4804 = vcombine.high %v4752, %v4784
    %v4805 = vcombine.low %v4761, %v4793
    %v4806 = vcombine.high %v4761, %v4793
    %v4807 = vcombine.low %v4768, %v4800
    %v4808 = vcombine.high %v4768, %v4800
    %v4809 = vcombine.low %v4665, %v4666
    %v4810 = vcombine.high %v4665, %v4666
    %v4812 = vunpack.c.l.s4 1983009808
    %v4813 = vunpack.c.0.s8 %v4812
    %v4814 = vlaneseq
    %v4815 = vshrl.u32 %v4814, 7
    %v4816 = vsub.s32 %v4813, %v4815
    %v4817 = vrot.slane %v4809, %v4816
    %v4819 = vunpack.c.l.s4 1983009808
    %v4820 = vunpack.c.0.s8 %v4819
    %v4821 = vlaneseq
    %v4822 = vshrl.u32 %v4821, 7
    %v4823 = vsub.s32 %v4820, %v4822
    %v4824 = vrot.slane %v4810, %v4823
    %v4825 = vcombine.low %v4801, %v4802
    %v4826 = vcombine.high %v4801, %v4802
    %v4828 = vunpack.c.l.s4 1983009808
    %v4829 = vunpack.c.0.s8 %v4828
    %v4830 = vlaneseq
    %v4831 = vshrl.u32 %v4830, 7
    %v4832 = vsub.s32 %v4829, %v4831
    %v4833 = vrot.slane %v4825, %v4832
    %v4835 = vunpack.c.l.s4 1983009808
    %v4836 = vunpack.c.0.s8 %v4835
    %v4837 = vlaneseq
    %v4838 = vshrl.u32 %v4837, 7
    %v4839 = vsub.s32 %v4836, %v4838
    %v4840 = vrot.slane %v4826, %v4839
    %v4841 = vcombine.low %v4667, %v4668
    %v4842 = vcombine.high %v4667, %v4668
    %v4844 = vunpack.c.l.s4 1983009808
    %v4845 = vunpack.c.0.s8 %v4844
    %v4846 = vlaneseq
    %v4847 = vshrl.u32 %v4846, 7
    %v4848 = vsub.s32 %v4845, %v4847
    %v4849 = vrot.slane %v4841, %v4848
    %v4851 = vunpack.c.l.s4 1983009808
    %v4852 = vunpack.c.0.s8 %v4851
    %v4853 = vlaneseq
    %v4854 = vshrl.u32 %v4853, 7
    %v4855 = vsub.s32 %v4852, %v4854
    %v4856 = vrot.slane %v4842, %v4855
    %v4857 = vcombine.low %v4803, %v4804
    %v4858 = vcombine.high %v4803, %v4804
    %v4860 = vunpack.c.l.s4 1983009808
    %v4861 = vunpack.c.0.s8 %v4860
    %v4862 = vlaneseq
    %v4863 = vshrl.u32 %v4862, 7
    %v4864 = vsub.s32 %v4861, %v4863
    %v4865 = vrot.slane %v4857, %v4864
    %v4867 = vunpack.c.l.s4 1983009808
    %v4868 = vunpack.c.0.s8 %v4867
    %v4869 = vlaneseq
    %v4870 = vshrl.u32 %v4869, 7
    %v4871 = vsub.s32 %v4868, %v4870
    %v4872 = vrot.slane %v4858, %v4871
    %v4873 = vcombine.low %v4817, %v4833
    %v4874 = vcombine.high %v4817, %v4833
    %v4876 = vunpack.c.l.s4 1934713408
    %v4877 = vunpack.c.0.s8 %v4876
    %v4878 = vlaneseq
    %v4879 = vshrl.u32 %v4878, 7
    %v4880 = vsub.s32 %v4877, %v4879
    %v4881 = vrot.slane %v4873, %v4880
    %v4883 = vunpack.c.l.s4 1934713408
    %v4884 = vunpack.c.0.s8 %v4883
    %v4885 = vlaneseq
    %v4886 = vshrl.u32 %v4885, 7
    %v4887 = vsub.s32 %v4884, %v4886
    %v4888 = vrot.slane %v4874, %v4887
    %v4889 = vcombine.low %v4824, %v4840
    %v4890 = vcombine.high %v4824, %v4840
    %v4892 = vunpack.c.l.s4 1934713408
    %v4893 = vunpack.c.0.s8 %v4892
    %v4894 = vlaneseq
    %v4895 = vshrl.u32 %v4894, 7
    %v4896 = vsub.s32 %v4893, %v4895
    %v4897 = vrot.slane %v4889, %v4896
    %v4899 = vunpack.c.l.s4 1934713408
    %v4900 = vunpack.c.0.s8 %v4899
    %v4901 = vlaneseq
    %v4902 = vshrl.u32 %v4901, 7
    %v4903 = vsub.s32 %v4900, %v4902
    %v4904 = vrot.slane %v4890, %v4903
    %v4905 = vcombine.low %v4849, %v4865
    %v4906 = vcombine.high %v4849, %v4865
    %v4908 = vunpack.c.l.s4 1934713408
    %v4909 = vunpack.c.0.s8 %v4908
    %v4910 = vlaneseq
    %v4911 = vshrl.u32 %v4910, 7
    %v4912 = vsub.s32 %v4909, %v4911
    %v4913 = vrot.slane %v4905, %v4912
    %v4915 = vunpack.c.l.s4 1934713408
    %v4916 = vunpack.c.0.s8 %v4915
    %v4917 = vlaneseq
    %v4918 = vshrl.u32 %v4917, 7
    %v4919 = vsub.s32 %v4916, %v4918
    %v4920 = vrot.slane %v4906, %v4919
    %v4921 = vcombine.low %v4856, %v4872
    %v4922 = vcombine.high %v4856, %v4872
    %v4924 = vunpack.c.l.s4 1934713408
    %v4925 = vunpack.c.0.s8 %v4924
    %v4926 = vlaneseq
    %v4927 = vshrl.u32 %v4926, 7
    %v4928 = vsub.s32 %v4925, %v4927
    %v4929 = vrot.slane %v4921, %v4928
    %v4931 = vunpack.c.l.s4 1934713408
    %v4932 = vunpack.c.0.s8 %v4931
    %v4933 = vlaneseq
    %v4934 = vshrl.u32 %v4933, 7
    %v4935 = vsub.s32 %v4932, %v4934
    %v4936 = vrot.slane %v4922, %v4935
    %v4937 = vcombine.low %v4881, %v4913
    %v4938 = vcombine.high %v4881, %v4913
    %v4939 = vcombine.low %v4888, %v4920
    %v4940 = vcombine.high %v4888, %v4920
    %v4941 = vcombine.low %v4897, %v4929
    %v4942 = vcombine.high %v4897, %v4929
    %v4943 = vcombine.low %v4904, %v4936
    %v4944 = vcombine.high %v4904, %v4936
    %v4945 = vcombine.low %v4669, %v4670
    %v4946 = vcombine.high %v4669, %v4670
    %v4948 = vunpack.c.l.s4 1983009808
    %v4949 = vunpack.c.0.s8 %v4948
    %v4950 = vlaneseq
    %v4951 = vshrl.u32 %v4950, 7
    %v4952 = vsub.s32 %v4949, %v4951
    %v4953 = vrot.slane %v4945, %v4952
    %v4955 = vunpack.c.l.s4 1983009808
    %v4956 = vunpack.c.0.s8 %v4955
    %v4957 = vlaneseq
    %v4958 = vshrl.u32 %v4957, 7
    %v4959 = vsub.s32 %v4956, %v4958
    %v4960 = vrot.slane %v4946, %v4959
    %v4961 = vcombine.low %v4805, %v4806
    %v4962 = vcombine.high %v4805, %v4806
    %v4964 = vunpack.c.l.s4 1983009808
    %v4965 = vunpack.c.0.s8 %v4964
    %v4966 = vlaneseq
    %v4967 = vshrl.u32 %v4966, 7
    %v4968 = vsub.s32 %v4965, %v4967
    %v4969 = vrot.slane %v4961, %v4968
    %v4971 = vunpack.c.l.s4 1983009808
    %v4972 = vunpack.c.0.s8 %v4971
    %v4973 = vlaneseq
    %v4974 = vshrl.u32 %v4973, 7
    %v4975 = vsub.s32 %v4972, %v4974
    %v4976 = vrot.slane %v4962, %v4975
    %v4977 = vcombine.low %v4671, %v4672
    %v4978 = vcombine.high %v4671, %v4672
    %v4980 = vunpack.c.l.s4 1983009808
    %v4981 = vunpack.c.0.s8 %v4980
    %v4982 = vlaneseq
    %v4983 = vshrl.u32 %v4982, 7
    %v4984 = vsub.s32 %v4981, %v4983
    %v4985 = vrot.slane %v4977, %v4984
    %v4987 = vunpack.c.l.s4 1983009808
    %v4988 = vunpack.c.0.s8 %v4987
    %v4989 = vlaneseq
    %v4990 = vshrl.u32 %v4989, 7
    %v4991 = vsub.s32 %v4988, %v4990
    %v4992 = vrot.slane %v4978, %v4991
    %v4993 = vcombine.low %v4807, %v4808
    %v4994 = vcombine.high %v4807, %v4808
    %v4996 = vunpack.c.l.s4 1983009808
    %v4997 = vunpack.c.0.s8 %v4996
    %v4998 = vlaneseq
    %v4999 = vshrl.u32 %v4998, 7
    %v5000 = vsub.s32 %v4997, %v4999
    %v5001 = vrot.slane %v4993, %v5000
    %v5003 = vunpack.c.l.s4 1983009808
    %v5004 = vunpack.c.0.s8 %v5003
    %v5005 = vlaneseq
    %v5006 = vshrl.u32 %v5005, 7
    %v5007 = vsub.s32 %v5004, %v5006
    %v5008 = vrot.slane %v4994, %v5007
    %v5009 = vcombine.low %v4953, %v4969
    %v5010 = vcombine.high %v4953, %v4969
    %v5012 = vunpack.c.l.s4 1934713408
    %v5013 = vunpack.c.0.s8 %v5012
    %v5014 = vlaneseq
    %v5015 = vshrl.u32 %v5014, 7
    %v5016 = vsub.s32 %v5013, %v5015
    %v5017 = vrot.slane %v5009, %v5016
    %v5019 = vunpack.c.l.s4 1934713408
    %v5020 = vunpack.c.0.s8 %v5019
    %v5021 = vlaneseq
    %v5022 = vshrl.u32 %v5021, 7
    %v5023 = vsub.s32 %v5020, %v5022
    %v5024 = vrot.slane %v5010, %v5023
    %v5025 = vcombine.low %v4960, %v4976
    %v5026 = vcombine.high %v4960, %v4976
    %v5028 = vunpack.c.l.s4 1934713408
    %v5029 = vunpack.c.0.s8 %v5028
    %v5030 = vlaneseq
    %v5031 = vshrl.u32 %v5030, 7
    %v5032 = vsub.s32 %v5029, %v5031
    %v5033 = vrot.slane %v5025, %v5032
    %v5035 = vunpack.c.l.s4 1934713408
    %v5036 = vunpack.c.0.s8 %v5035
    %v5037 = vlaneseq
    %v5038 = vshrl.u32 %v5037, 7
    %v5039 = vsub.s32 %v5036, %v5038
    %v5040 = vrot.slane %v5026, %v5039
    %v5041 = vcombine.low %v4985, %v5001
    %v5042 = vcombine.high %v4985, %v5001
    %v5044 = vunpack.c.l.s4 1934713408
    %v5045 = vunpack.c.0.s8 %v5044
    %v5046 = vlaneseq
    %v5047 = vshrl.u32 %v5046, 7
    %v5048 = vsub.s32 %v5045, %v5047
    %v5049 = vrot.slane %v5041, %v5048
    %v5051 = vunpack.c.l.s4 1934713408
    %v5052 = vunpack.c.0.s8 %v5051
    %v5053 = vlaneseq
    %v5054 = vshrl.u32 %v5053, 7
    %v5055 = vsub.s32 %v5052, %v5054
    %v5056 = vrot.slane %v5042, %v5055
    %v5057 = vcombine.low %v4992, %v5008
    %v5058 = vcombine.high %v4992, %v5008
    %v5060 = vunpack.c.l.s4 1934713408
    %v5061 = vunpack.c.0.s8 %v5060
    %v5062 = vlaneseq
    %v5063 = vshrl.u32 %v5062, 7
    %v5064 = vsub.s32 %v5061, %v5063
    %v5065 = vrot.slane %v5057, %v5064
    %v5067 = vunpack.c.l.s4 1934713408
    %v5068 = vunpack.c.0.s8 %v5067
    %v5069 = vlaneseq
    %v5070 = vshrl.u32 %v5069, 7
    %v5071 = vsub.s32 %v5068, %v5070
    %v5072 = vrot.slane %v5058, %v5071
    %v5073 = vcombine.low %v5017, %v5049
    %v5074 = vcombine.high %v5017, %v5049
    %v5075 = vcombine.low %v5024, %v5056
    %v5076 = vcombine.high %v5024, %v5056
    %v5077 = vcombine.low %v5033, %v5065
    %v5078 = vcombine.high %v5033, %v5065
    %v5079 = vcombine.low %v5040, %v5072
    %v5080 = vcombine.high %v5040, %v5072
    %5083 = vrot.lane.b32.xlu0 %v4938, 4
    %v5084 = vpop.permute.xlu0 %5083
    %5085 = vrot.lane.b32.xlu0 %v5074, 4
    %v5086 = vpop.permute.xlu0 %5085
    %5091 = vrot.lane.b32.xlu0 %v4939, 8
    %v5092 = vpop.permute.xlu0 %5091
    %5093 = vrot.lane.b32.xlu0 %v5075, 8
    %v5094 = vpop.permute.xlu0 %5093
    %5099 = vrot.lane.b32.xlu0 %v4940, 12
    %v5100 = vpop.permute.xlu0 %5099
    %5101 = vrot.lane.b32.xlu0 %v5076, 12
    %v5102 = vpop.permute.xlu0 %5101
    %5107 = vrot.lane.b32.xlu0 %v4941, 16
    %v5108 = vpop.permute.xlu0 %5107
    %5109 = vrot.lane.b32.xlu0 %v5077, 16
    %v5110 = vpop.permute.xlu0 %5109
    %5115 = vrot.lane.b32.xlu0 %v4942, 20
    %v5116 = vpop.permute.xlu0 %5115
    %5117 = vrot.lane.b32.xlu0 %v5078, 20
    %v5118 = vpop.permute.xlu0 %5117
    %5123 = vrot.lane.b32.xlu0 %v4943, 24
    %v5124 = vpop.permute.xlu0 %5123
    %5125 = vrot.lane.b32.xlu0 %v5079, 24
    %v5126 = vpop.permute.xlu0 %5125
    %5131 = vrot.lane.b32.xlu0 %v4944, 28
    %v5132 = vpop.permute.xlu0 %5131
    %5133 = vrot.lane.b32.xlu0 %v5080, 28
    %v5134 = vpop.permute.xlu0 %5133
    %v5137 = vsel %vm1975, %v4937, %v5084
    %v5138 = vsel %vm1975, %v5073, %v5086
    %v5139 = vsel %vm3192, %v5137, %v5092
    %v5140 = vsel %vm3192, %v5138, %v5094
    %vm5141 = vcmask 97280
    %v5142 = vsel %vm5141, %v5139, %v5100
    %v5143 = vsel %vm5141, %v5140, %v5102
    %vm5144 = vcmask 130048
    %v5145 = vsel %vm5144, %v5142, %v5108
    %v5146 = vsel %vm5144, %v5143, %v5110
    %vm5147 = vcmask 162816
    %v5148 = vsel %vm5147, %v5145, %v5116
    %v5149 = vsel %vm5147, %v5146, %v5118
    %vm5150 = vcmask 195584
    %v5151 = vsel %vm5150, %v5148, %v5124
    %v5152 = vsel %vm5150, %v5149, %v5126
    %vm5153 = vcmask 228352
    %v5154 = vsel %vm5153, %v5151, %v5132
    %v5155 = vsel %vm5153, %v5152, %v5134
    %v5156 = vld [vmem:[%s4] sm:$0x1]
    %v5157 = vld [vmem:[%s4 + $0x1] sm:$0x1]
    %v5158 = vld [vmem:[%s4 + $0x2] sm:$0x1]
    %v5159 = vld [vmem:[#allocation7] sm:$0xff]
    %v5160 = vld [vmem:[#allocation7 + $0x8] sm:$0xff]
    %v5161 = vld [vmem:[#allocation7 + $0x10] sm:$0xff]
    %v5162 = vld [vmem:[#allocation7 + $0x18] sm:$0xff]
    %v5163 = vlaneseq
    %v5164 = vshrl.u32 %v5163, 7
    %v5165 = vsub.s32 0, %v5164
    %v5166 = vrot.slane %v5156, %v5165
    %v5168 = vsel %vm123, %v5154, 0
    %v5171 = vsel %vm123, %v5155, 0
    %5173 = vmatprep.subr.mxu0 0.0
    %5174 = vmatpush1.msra.mxu0 0.0
    %5175 = vmatprep.subr.mxu0 0.0
    %5176 = vmatpush1.msra.mxu0 0.0
    %5177 = vmatprep.subr.mxu0 0.0
    %5178 = vmatpush1.msra.mxu0 0.0
    %5179 = vmatprep.subr.mxu0 0.0
    %5180 = vmatpush1.msra.mxu0 0.0
    %5181 = vmatprep.subr.mxu0 0.0
    %5182 = vmatpush1.msra.mxu0 0.0
    %5183 = vmatprep.subr.mxu0 0.0
    %5184 = vmatpush1.msra.mxu0 0.0
    %5185 = vmatprep.subr.mxu0 0.0
    %5186 = vmatpush1.msra.mxu0 0.0
    %5187 = vmatprep.subr.mxu0 0.0
    %5188 = vmatpush1.msra.mxu0 0.0
    %5189 = vmatprep.subr.mxu0 0.0
    %5190 = vmatpush1.msra.mxu0 0.0
    %5191 = vmatprep.subr.mxu0 0.0
    %5192 = vmatpush1.msra.mxu0 0.0
    %5193 = vmatprep.subr.mxu0 0.0
    %5194 = vmatpush1.msra.mxu0 0.0
    %5195 = vmatprep.subr.mxu0 0.0
    %5196 = vmatpush1.msra.mxu0 0.0
    %5197 = vmatprep.subr.mxu0 0.0
    %5198 = vmatpush1.msra.mxu0 %v5162
    %5199 = vmatprep.subr.mxu0 0.0
    %5200 = vmatpush1.msra.mxu0 %v5161
    %5201 = vmatprep.subr.mxu0 0.0
    %5202 = vmatpush1.msra.mxu0 %v5160
    %5203 = vmatprep.subr.mxu0 0.0
    %5204 = vmatpush1.msra.mxu0 %v5159
    %5205 = vmatprep.subr.mxu0 0.0
    %5206 = vmatpush2.msra.mxu0 0.0
    %5207 = vmatprep.subr.mxu0 0.0
    %5208 = vmatpush2.msra.mxu0 0.0
    %5209 = vmatprep.subr.mxu0 0.0
    %5210 = vmatpush2.msra.mxu0 0.0
    %5211 = vmatprep.subr.mxu0 0.0
    %5212 = vmatpush2.msra.mxu0 0.0
    %5213 = vmatprep.subr.mxu0 0.0
    %5214 = vmatpush2.msra.mxu0 0.0
    %5215 = vmatprep.subr.mxu0 0.0
    %5216 = vmatpush2.msra.mxu0 0.0
    %5217 = vmatprep.subr.mxu0 0.0
    %5218 = vmatpush2.msra.mxu0 0.0
    %5219 = vmatprep.subr.mxu0 0.0
    %5220 = vmatpush2.msra.mxu0 0.0
    %5221 = vmatprep.subr.mxu0 0.0
    %5222 = vmatpush2.msra.mxu0 0.0
    %5223 = vmatprep.subr.mxu0 0.0
    %5224 = vmatpush2.msra.mxu0 0.0
    %5225 = vmatprep.subr.mxu0 0.0
    %5226 = vmatpush2.msra.mxu0 0.0
    %5227 = vmatprep.subr.mxu0 0.0
    %5228 = vmatpush2.msra.mxu0 0.0
    %5229 = vmatprep.subr.mxu0 0.0
    %5230 = vmatpush2.msra.mxu0 0.0
    %5231 = vmatprep.subr.mxu0 0.0
    %5232 = vmatpush2.msra.mxu0 0.0
    %5233 = vmatprep.subr.mxu0 0.0
    %5234 = vmatpush2.msra.mxu0 0.0
    %5235 = vmatprep.subr.mxu0 0.0
    %5236 = vmatpush2.msra.mxu0 0.0
    %5237 = vmatprep.mubr.f32.mxu0 0.0
    %5238 = vmatmul.mubr.f32.gmra.mxu0 %v5168
    %v5239 = vpop.f32.mrf.mxu0
    %v5240 = vadd.f32 %v5166, %v5239
    %v5241 = vpop.f32.mrf.mxu0
    %5242 = vmatprep.mubr.f32.mxu0 0.0
    %5243 = vmatmul.mubr.f32.gmra.mxu0 %v5171
    %v5244 = vpop.f32.mrf.mxu0
    %v5245 = vadd.f32 %v5166, %v5244
    %v5246 = vpop.f32.mrf.mxu0
    %5247 = vdwg.mxu0
    %v5250 = vcombine.high %v5240, %v5240
    %v5252 = vunpack.c.l.s4 1983009808
    %v5253 = vunpack.c.0.s8 %v5252
    %v5254 = vlaneseq
    %v5255 = vshrl.u32 %v5254, 7
    %v5256 = vsub.s32 %v5253, %v5255
    %v5257 = vrot.slane %v5240, %v5256
    %v5259 = vunpack.c.l.s4 1983009808
    %v5260 = vunpack.c.0.s8 %v5259
    %v5261 = vlaneseq
    %v5262 = vshrl.u32 %v5261, 7
    %v5263 = vsub.s32 %v5260, %v5262
    %v5264 = vrot.slane %v5250, %v5263
    %v5265 = vcombine.high %v5257, %v5257
    %v5266 = vcombine.high %v5264, %v5264
    %v5267 = vcombine.high %v5245, %v5245
    %v5269 = vunpack.c.l.s4 1983009808
    %v5270 = vunpack.c.0.s8 %v5269
    %v5271 = vlaneseq
    %v5272 = vshrl.u32 %v5271, 7
    %v5273 = vsub.s32 %v5270, %v5272
    %v5274 = vrot.slane %v5245, %v5273
    %v5276 = vunpack.c.l.s4 1983009808
    %v5277 = vunpack.c.0.s8 %v5276
    %v5278 = vlaneseq
    %v5279 = vshrl.u32 %v5278, 7
    %v5280 = vsub.s32 %v5277, %v5279
    %v5281 = vrot.slane %v5267, %v5280
    %v5282 = vcombine.high %v5274, %v5274
    %v5283 = vcombine.high %v5281, %v5281
    %v5292 = vadd.f32 %v62, %v5257
    %v5293 = vadd.f32 %v63, %v5265
    %v5294 = vadd.f32 %v64, %v5264
    %v5295 = vadd.f32 %v65, %v5266
    %v5296 = vadd.f32 %v66, %v5274
    %v5297 = vadd.f32 %v67, %v5282
    %v5298 = vadd.f32 %v68, %v5281
    %v5299 = vadd.f32 %v69, %v5283
    %v5308 = vcombine.low %v5292, %v5293
    %v5309 = vcombine.low %v5294, %v5295
    %v5311 = vunpack.c.l.s4 1983009808
    %v5312 = vunpack.c.0.s8 %v5311
    %v5313 = vlaneseq
    %v5314 = vshrl.u32 %v5313, 7
    %v5315 = vsub.s32 %v5312, %v5314
    %v5316 = vrot.slane %v5308, %v5315
    %v5318 = vunpack.c.l.s4 1983009808
    %v5319 = vunpack.c.0.s8 %v5318
    %v5320 = vlaneseq
    %v5321 = vshrl.u32 %v5320, 7
    %v5322 = vsub.s32 %v5319, %v5321
    %v5323 = vrot.slane %v5309, %v5322
    %v5324 = vcombine.low %v5316, %v5323
    %v5325 = vcombine.low %v5296, %v5297
    %v5326 = vcombine.low %v5298, %v5299
    %v5328 = vunpack.c.l.s4 1983009808
    %v5329 = vunpack.c.0.s8 %v5328
    %v5330 = vlaneseq
    %v5331 = vshrl.u32 %v5330, 7
    %v5332 = vsub.s32 %v5329, %v5331
    %v5333 = vrot.slane %v5325, %v5332
    %v5335 = vunpack.c.l.s4 1983009808
    %v5336 = vunpack.c.0.s8 %v5335
    %v5337 = vlaneseq
    %v5338 = vshrl.u32 %v5337, 7
    %v5339 = vsub.s32 %v5336, %v5338
    %v5340 = vrot.slane %v5326, %v5339
    %v5341 = vcombine.low %v5333, %v5340
    %v5344 = vsel %vm123, %v5324, 0.0
    %5345 = vadd.xlane.f32.xlu0 %v5344
    %v5346 = vpop.xlane.xlu0 %5345
    %v5347 = vsel %vm123, %v5341, 0.0
    %5348 = vadd.xlane.f32.xlu0 %v5347
    %v5349 = vpop.xlane.xlu0 %5348
    %v5350 = vrcp.pop 32.0
    %v5351 = vmul.f32 %v5346, %v5350
    %v5352 = vmul.f32 %v5349, %v5350
    %v5356 = vunpack.c.l.s4 269488144
    %v5357 = vunpack.c.0.s8 %v5356
    %v5358 = vlaneseq
    %v5359 = vshrl.u32 %v5358, 7
    %v5360 = vsub.s32 %v5357, %v5359
    %v5361 = vrot.slane %v5351, %v5360
    %v5363 = vunpack.c.l.s4 842150450
    %v5364 = vunpack.c.0.s8 %v5363
    %v5365 = vlaneseq
    %v5366 = vshrl.u32 %v5365, 7
    %v5367 = vsub.s32 %v5364, %v5366
    %v5368 = vrot.slane %v5351, %v5367
    %v5370 = vunpack.c.l.s4 1414812756
    %v5371 = vunpack.c.0.s8 %v5370
    %v5372 = vlaneseq
    %v5373 = vshrl.u32 %v5372, 7
    %v5374 = vsub.s32 %v5371, %v5373
    %v5375 = vrot.slane %v5351, %v5374
    %v5377 = vunpack.c.l.s4 1987475062
    %v5378 = vunpack.c.0.s8 %v5377
    %v5379 = vlaneseq
    %v5380 = vshrl.u32 %v5379, 7
    %v5381 = vsub.s32 %v5378, %v5380
    %v5382 = vrot.slane %v5351, %v5381
    %v5384 = vunpack.c.l.s4 269488144
    %v5385 = vunpack.c.0.s8 %v5384
    %v5386 = vlaneseq
    %v5387 = vshrl.u32 %v5386, 7
    %v5388 = vsub.s32 %v5385, %v5387
    %v5389 = vrot.slane %v5352, %v5388
    %v5391 = vunpack.c.l.s4 842150450
    %v5392 = vunpack.c.0.s8 %v5391
    %v5393 = vlaneseq
    %v5394 = vshrl.u32 %v5393, 7
    %v5395 = vsub.s32 %v5392, %v5394
    %v5396 = vrot.slane %v5352, %v5395
    %v5398 = vunpack.c.l.s4 1414812756
    %v5399 = vunpack.c.0.s8 %v5398
    %v5400 = vlaneseq
    %v5401 = vshrl.u32 %v5400, 7
    %v5402 = vsub.s32 %v5399, %v5401
    %v5403 = vrot.slane %v5352, %v5402
    %v5405 = vunpack.c.l.s4 1987475062
    %v5406 = vunpack.c.0.s8 %v5405
    %v5407 = vlaneseq
    %v5408 = vshrl.u32 %v5407, 7
    %v5409 = vsub.s32 %v5406, %v5408
    %v5410 = vrot.slane %v5352, %v5409
    %v5419 = vsub.f32 %v5292, %v5361
    %v5420 = vsub.f32 %v5293, %v5368
    %v5421 = vsub.f32 %v5294, %v5375
    %v5422 = vsub.f32 %v5295, %v5382
    %v5423 = vsub.f32 %v5296, %v5389
    %v5424 = vsub.f32 %v5297, %v5396
    %v5425 = vsub.f32 %v5298, %v5403
    %v5426 = vsub.f32 %v5299, %v5410
    %v5427 = vmul.f32 %v5419, %v5419
    %v5428 = vmul.f32 %v5420, %v5420
    %v5429 = vmul.f32 %v5421, %v5421
    %v5430 = vmul.f32 %v5422, %v5422
    %v5431 = vmul.f32 %v5423, %v5423
    %v5432 = vmul.f32 %v5424, %v5424
    %v5433 = vmul.f32 %v5425, %v5425
    %v5434 = vmul.f32 %v5426, %v5426
    %v5443 = vcombine.low %v5427, %v5428
    %v5444 = vcombine.low %v5429, %v5430
    %v5446 = vunpack.c.l.s4 1983009808
    %v5447 = vunpack.c.0.s8 %v5446
    %v5448 = vlaneseq
    %v5449 = vshrl.u32 %v5448, 7
    %v5450 = vsub.s32 %v5447, %v5449
    %v5451 = vrot.slane %v5443, %v5450
    %v5453 = vunpack.c.l.s4 1983009808
    %v5454 = vunpack.c.0.s8 %v5453
    %v5455 = vlaneseq
    %v5456 = vshrl.u32 %v5455, 7
    %v5457 = vsub.s32 %v5454, %v5456
    %v5458 = vrot.slane %v5444, %v5457
    %v5459 = vcombine.low %v5451, %v5458
    %v5460 = vcombine.low %v5431, %v5432
    %v5461 = vcombine.low %v5433, %v5434
    %v5463 = vunpack.c.l.s4 1983009808
    %v5464 = vunpack.c.0.s8 %v5463
    %v5465 = vlaneseq
    %v5466 = vshrl.u32 %v5465, 7
    %v5467 = vsub.s32 %v5464, %v5466
    %v5468 = vrot.slane %v5460, %v5467
    %v5470 = vunpack.c.l.s4 1983009808
    %v5471 = vunpack.c.0.s8 %v5470
    %v5472 = vlaneseq
    %v5473 = vshrl.u32 %v5472, 7
    %v5474 = vsub.s32 %v5471, %v5473
    %v5475 = vrot.slane %v5461, %v5474
    %v5476 = vcombine.low %v5468, %v5475
    %v5479 = vsel %vm123, %v5459, 0.0
    %5480 = vadd.xlane.f32.xlu0 %v5479
    %v5481 = vpop.xlane.xlu0 %5480
    %v5482 = vsel %vm123, %v5476, 0.0
    %5483 = vadd.xlane.f32.xlu0 %v5482
    %v5484 = vpop.xlane.xlu0 %5483
    %v5485 = vmul.f32 %v5481, %v5350
    %v5486 = vmul.f32 %v5484, %v5350
    %v5487 = vadd.f32 %v5485, 1e-05
    %v5488 = vadd.f32 %v5486, 1e-05
    %v5489 = vrsqrt.pop %v5487
    %v5490 = vrsqrt.pop %v5488
    %v5494 = vunpack.c.l.s4 269488144
    %v5495 = vunpack.c.0.s8 %v5494
    %v5496 = vlaneseq
    %v5497 = vshrl.u32 %v5496, 7
    %v5498 = vsub.s32 %v5495, %v5497
    %v5499 = vrot.slane %v5489, %v5498
    %v5501 = vunpack.c.l.s4 842150450
    %v5502 = vunpack.c.0.s8 %v5501
    %v5503 = vlaneseq
    %v5504 = vshrl.u32 %v5503, 7
    %v5505 = vsub.s32 %v5502, %v5504
    %v5506 = vrot.slane %v5489, %v5505
    %v5508 = vunpack.c.l.s4 1414812756
    %v5509 = vunpack.c.0.s8 %v5508
    %v5510 = vlaneseq
    %v5511 = vshrl.u32 %v5510, 7
    %v5512 = vsub.s32 %v5509, %v5511
    %v5513 = vrot.slane %v5489, %v5512
    %v5515 = vunpack.c.l.s4 1987475062
    %v5516 = vunpack.c.0.s8 %v5515
    %v5517 = vlaneseq
    %v5518 = vshrl.u32 %v5517, 7
    %v5519 = vsub.s32 %v5516, %v5518
    %v5520 = vrot.slane %v5489, %v5519
    %v5522 = vunpack.c.l.s4 269488144
    %v5523 = vunpack.c.0.s8 %v5522
    %v5524 = vlaneseq
    %v5525 = vshrl.u32 %v5524, 7
    %v5526 = vsub.s32 %v5523, %v5525
    %v5527 = vrot.slane %v5490, %v5526
    %v5529 = vunpack.c.l.s4 842150450
    %v5530 = vunpack.c.0.s8 %v5529
    %v5531 = vlaneseq
    %v5532 = vshrl.u32 %v5531, 7
    %v5533 = vsub.s32 %v5530, %v5532
    %v5534 = vrot.slane %v5490, %v5533
    %v5536 = vunpack.c.l.s4 1414812756
    %v5537 = vunpack.c.0.s8 %v5536
    %v5538 = vlaneseq
    %v5539 = vshrl.u32 %v5538, 7
    %v5540 = vsub.s32 %v5537, %v5539
    %v5541 = vrot.slane %v5490, %v5540
    %v5543 = vunpack.c.l.s4 1987475062
    %v5544 = vunpack.c.0.s8 %v5543
    %v5545 = vlaneseq
    %v5546 = vshrl.u32 %v5545, 7
    %v5547 = vsub.s32 %v5544, %v5546
    %v5548 = vrot.slane %v5490, %v5547
    %v5557 = vmul.f32 %v5419, %v5499
    %v5558 = vmul.f32 %v5420, %v5506
    %v5559 = vmul.f32 %v5421, %v5513
    %v5560 = vmul.f32 %v5422, %v5520
    %v5561 = vmul.f32 %v5423, %v5527
    %v5562 = vmul.f32 %v5424, %v5534
    %v5563 = vmul.f32 %v5425, %v5541
    %v5564 = vmul.f32 %v5426, %v5548
    %v5565 = vlaneseq
    %v5566 = vshrl.u32 %v5565, 7
    %v5567 = vsub.s32 0, %v5566
    %v5568 = vrot.slane %v5157, %v5567
    %v5570 = vcombine.high %v5568, %v5568
    %v5572 = vunpack.c.l.s4 1983009808
    %v5573 = vunpack.c.0.s8 %v5572
    %v5574 = vlaneseq
    %v5575 = vshrl.u32 %v5574, 7
    %v5576 = vsub.s32 %v5573, %v5575
    %v5577 = vrot.slane %v5568, %v5576
    %v5579 = vunpack.c.l.s4 1983009808
    %v5580 = vunpack.c.0.s8 %v5579
    %v5581 = vlaneseq
    %v5582 = vshrl.u32 %v5581, 7
    %v5583 = vsub.s32 %v5580, %v5582
    %v5584 = vrot.slane %v5570, %v5583
    %v5585 = vcombine.high %v5577, %v5577
    %v5586 = vcombine.high %v5584, %v5584
    %v5591 = vmul.f32 %v5557, %v5577
    %v5592 = vmul.f32 %v5558, %v5585
    %v5593 = vmul.f32 %v5559, %v5584
    %v5594 = vmul.f32 %v5560, %v5586
    %v5595 = vmul.f32 %v5561, %v5577
    %v5596 = vmul.f32 %v5562, %v5585
    %v5597 = vmul.f32 %v5563, %v5584
    %v5598 = vmul.f32 %v5564, %v5586
    %v5599 = vlaneseq
    %v5600 = vshrl.u32 %v5599, 7
    %v5601 = vsub.s32 0, %v5600
    %v5602 = vrot.slane %v5158, %v5601
    %v5604 = vcombine.high %v5602, %v5602
    %v5606 = vunpack.c.l.s4 1983009808
    %v5607 = vunpack.c.0.s8 %v5606
    %v5608 = vlaneseq
    %v5609 = vshrl.u32 %v5608, 7
    %v5610 = vsub.s32 %v5607, %v5609
    %v5611 = vrot.slane %v5602, %v5610
    %v5613 = vunpack.c.l.s4 1983009808
    %v5614 = vunpack.c.0.s8 %v5613
    %v5615 = vlaneseq
    %v5616 = vshrl.u32 %v5615, 7
    %v5617 = vsub.s32 %v5614, %v5616
    %v5618 = vrot.slane %v5604, %v5617
    %v5619 = vcombine.high %v5611, %v5611
    %v5620 = vcombine.high %v5618, %v5618
    %v5625 = vadd.f32 %v5591, %v5611
    %v5626 = vadd.f32 %v5592, %v5619
    %v5627 = vadd.f32 %v5593, %v5618
    %v5628 = vadd.f32 %v5594, %v5620
    %v5629 = vadd.f32 %v5595, %v5611
    %v5630 = vadd.f32 %v5596, %v5619
    %v5631 = vadd.f32 %v5597, %v5618
    %v5632 = vadd.f32 %v5598, %v5620
    %vm5633 = vcmask 254976
    %5634 = vst.msk [vmem:[#allocation8] sm:$0x3] %vm5633, %v5625
    %5635 = vst.msk [vmem:[#allocation8 + $0x2] sm:$0x3] %vm5633, %v5626
    %5636 = vst.msk [vmem:[#allocation8 + $0x4] sm:$0x3] %vm5633, %v5627
    %5637 = vst.msk [vmem:[#allocation8 + $0x6] sm:$0x3] %vm5633, %v5628
    %5638 = vst.msk [vmem:[#allocation8 + $0x8] sm:$0x3] %vm5633, %v5629
    %5639 = vst.msk [vmem:[#allocation8 + $0xa] sm:$0x3] %vm5633, %v5630
    %5640 = vst.msk [vmem:[#allocation8 + $0xc] sm:$0x3] %vm5633, %v5631
    %5641 = vst.msk [vmem:[#allocation8 + $0xe] sm:$0x3] %vm5633, %v5632
    // Predicated region
    $region34: #{tpu_custom_call.1} parent=1 // pred_check
      _
    $region35: #{tpu_custom_call.1} parent=1 // pred_check_branch
      %5643 = sbr.rel (0) target = $region37
    $region36: #{tpu_custom_call.1} parent=1 // pred_region
      %s5645 = ssub.s32 256, 256
      %5646 = vsyncadd [#allocation4], %s5645
      %s5647 = sshll.u32 [#allocation8], 4
      %s5648 = int_to_ptr.vmem [resolvable:$true] %s5647
      %5653 = dma.vmem_to_hbm [thread:$0]  %s5648, 256, %s5, [#allocation4], 32, 32, 2
    $region37: #{tpu_custom_call.1} parent=1 // pred_fallthru
      _
    // Predicated region
    $region38: #{tpu_custom_call.1} parent=1 // pred_check
      _
    $region39: #{tpu_custom_call.1} parent=1 // pred_check_branch
      %5655 = sbr.rel (0) target = $region41
    $region40: #{tpu_custom_call.1} parent=1 // pred_region
      %5656 = dma.done [#allocation4], 256
    $region41: #{tpu_custom_call.1} parent=1 // pred_fallthru
      _
    %5657 = vsyncpa [#allocation3], 1
    %5658 = vsyncpa [#allocation6], 1
    %5659 = vsyncpa [#allocation4], 1

</llo_original>
